<compile_context>
chip_gen: v6e
topology: v6e:2x2x1
jax: 0.10.0
libtpu: 0.0.40
codegen_flags: <defaults>
</compile_context>

<pallas_src>
import math
import functools

import jax
import jax.numpy as jnp
from jax.experimental import pallas as pl
from jax.experimental.pallas import tpu as pltpu


_VMEM_LIMIT = 48 * 1024 * 1024   # <= v7x physical (64 MiB), > all scoped defaults


# ----------------------------------------------------------------------------
# Tiling / padding helpers
# ----------------------------------------------------------------------------

def _round_up(x, m):
    return ((x + m - 1) // m) * m


def _tile_and_pad(dim, align, target):
    """Return (tile, padded_dim). tile divides padded_dim; tile is either the
    full dim (small case, always legal) or an `align`-multiple <= target."""
    if dim <= target:
        return dim, dim
    if dim % align == 0:
        t = (target // align) * align
        while t >= align:
            if dim % t == 0:
                return t, dim
            t -= align
    t = (target // align) * align
    return t, _round_up(dim, t)


def _row_tile(dim, target=256):
    """Divisor-based row tile (no padding); falls back to the full dim."""
    if dim <= target or dim % 8 != 0:
        return dim
    t = (target // 8) * 8
    while t >= 8:
        if dim % t == 0:
            return t
        t -= 8
    return dim


# ----------------------------------------------------------------------------
# Startup probe: does lax.erf lower inside a Mosaic kernel?
# ----------------------------------------------------------------------------

def _erf_lowers_in_kernel():
    def k(x_ref, o_ref):
        o_ref[...] = jax.lax.erf(x_ref[...])
    try:
        y = pl.pallas_call(
            k, out_shape=jax.ShapeDtypeStruct((8, 128), jnp.float32),
        )(jnp.zeros((8, 128), jnp.float32))
        jax.block_until_ready(y)
        return True
    except Exception:
        return False


_ERF_OK = _erf_lowers_in_kernel()


# ----------------------------------------------------------------------------
# Tiled matmul + bias kernels (all nn.Linear layers), with fused epilogues
# ----------------------------------------------------------------------------

def _gelu_exact(y):
    # PyTorch F.gelu default: 0.5 * x * (1 + erf(x / sqrt(2)))
    return 0.5 * y * (1.0 + jax.lax.erf(y * 0.7071067811865476))


def _mm_kernel(x_ref, w_ref, b_ref, o_ref, acc_ref, *, act):
    @pl.when(pl.program_id(2) == 0)
    def _():
        acc_ref[...] = jnp.zeros_like(acc_ref)

    acc_ref[...] += jnp.dot(x_ref[...], w_ref[...],
                            preferred_element_type=jnp.float32)

    @pl.when(pl.program_id(2) == pl.num_programs(2) - 1)
    def _():
        y = acc_ref[...] + b_ref[...]
        if act == "gelu":
            y = _gelu_exact(y)
        o_ref[...] = y


def _mm_add_ln_kernel(x_ref, w_ref, b_ref, r_ref, g_ref, be_ref, o_ref,
                      acc_ref, *, eps):
    @pl.when(pl.program_id(2) == 0)
    def _():
        acc_ref[...] = jnp.zeros_like(acc_ref)

    acc_ref[...] += jnp.dot(x_ref[...], w_ref[...],
                            preferred_element_type=jnp.float32)

    @pl.when(pl.program_id(2) == pl.num_programs(2) - 1)
    def _():
        y = acc_ref[...] + b_ref[...] + r_ref[...]
        mu = jnp.mean(y, axis=-1, keepdims=True)
        yc = y - mu
        var = jnp.mean(yc * yc, axis=-1, keepdims=True)      # biased, like LN
        o_ref[...] = yc * jax.lax.rsqrt(var + eps) * g_ref[...] + be_ref[...]


def linear(x2d, w_t, b2, *, act=None, residual=None, ln_g=None, ln_b=None,
           eps=1e-5):
    """y = x @ w_t + b  [, then exact-GELU]  [, then LayerNorm(y + residual)].

    x2d: (M, K) f32; w_t: (K, N) pre-transposed; b2: (1, N).
    When `residual` is given the add+LN epilogue is fused (requires full-row
    tn == N blocks)."""
    M, K = x2d.shape
    Kw, N = w_t.shape
    assert Kw == K
    fuse_ln = residual is not None

    if fuse_ln and N > 2048:
        # Row too wide for a single-block LN epilogue: fall back to two kernels.
        y = linear(x2d, w_t, b2, act=act)
        return layer_norm(y, ln_g, ln_b, residual=residual, eps=eps)

    tm, Mp = _tile_and_pad(M, 8, 512)
    tk, Kp = _tile_and_pad(K, 128, 1024)
    if fuse_ln:
        tn, Np = N, N                       # full row for the LN epilogue
    else:
        tn, Np = _tile_and_pad(N, 128, 512)

    xp = x2d if (Mp, Kp) == (M, K) else jnp.pad(x2d, ((0, Mp - M), (0, Kp - K)))
    wp = w_t if (Kp, Np) == (K, N) else jnp.pad(w_t, ((0, Kp - K), (0, Np - N)))
    bp = b2 if Np == N else jnp.pad(b2, ((0, 0), (0, Np - N)))

    grid = (Mp // tm, Np // tn, Kp // tk)
    cost = pl.CostEstimate(
        flops=2 * Mp * Np * Kp,
        transcendentals=Mp * Np if act == "gelu" else 0,
        bytes_accessed=4 * (Mp * Kp + Kp * Np + Mp * Np + Np))
    cparams = pltpu.CompilerParams(
        dimension_semantics=("parallel", "parallel", "arbitrary"),
        vmem_limit_bytes=_VMEM_LIMIT)

    x_spec = pl.BlockSpec((tm, tk), lambda i, j, k: (i, k))
    w_spec = pl.BlockSpec((tk, tn), lambda i, j, k: (k, j))
    b_spec = pl.BlockSpec((1, tn), lambda i, j, k: (0, j))
    o_spec = pl.BlockSpec((tm, tn), lambda i, j, k: (i, j))

    if fuse_ln:
        resp = residual if Mp == M else jnp.pad(residual, ((0, Mp - M), (0, 0)))
        ins = (xp, wp, bp, resp, ln_g, ln_b)
        specs = [x_spec, w_spec, b_spec,
                 pl.BlockSpec((tm, tn), lambda i, j, k: (i, j)),
                 pl.BlockSpec((1, tn), lambda i, j, k: (0, j)),
                 pl.BlockSpec((1, tn), lambda i, j, k: (0, j))]
        assert len(ins) == len(specs)
        out = pl.pallas_call(
            functools.partial(_mm_add_ln_kernel, eps=eps),
            out_shape=jax.ShapeDtypeStruct((Mp, Np), jnp.float32),
            grid=grid, in_specs=specs, out_specs=o_spec,
            scratch_shapes=[pltpu.VMEM((tm, tn), jnp.float32)],
            compiler_params=cparams, cost_estimate=cost,
        )(*ins)
    else:
        in_kernel_act = act if (act != "gelu" or _ERF_OK) else None
        ins = (xp, wp, bp)
        specs = [x_spec, w_spec, b_spec]
        assert len(ins) == len(specs)
        out = pl.pallas_call(
            functools.partial(_mm_kernel, act=in_kernel_act),
            out_shape=jax.ShapeDtypeStruct((Mp, Np), jnp.float32),
            grid=grid, in_specs=specs, out_specs=o_spec,
            scratch_shapes=[pltpu.VMEM((tm, tn), jnp.float32)],
            compiler_params=cparams, cost_estimate=cost,
        )(*ins)
        if act == "gelu" and in_kernel_act is None:
            # TODO(synk): erf did not lower in Mosaic on this jax version;
            # exact GELU applied as an XLA op between the two FFN kernels.
            out = jax.nn.gelu(out, approximate=False)

    if (Mp, Np) != (M, N):
        out = out[:M, :N]
    return out


# ----------------------------------------------------------------------------
# Standalone LayerNorm kernels (final encoder/decoder norms, LN fallback)
# ----------------------------------------------------------------------------

def _ln_kernel(x_ref, g_ref, b_ref, o_ref, *, eps):
    x = x_ref[...]
    mu = jnp.mean(x, axis=-1, keepdims=True)
    xc = x - mu
    var = jnp.mean(xc * xc, axis=-1, keepdims=True)
    o_ref[...] = xc * jax.lax.rsqrt(var + eps) * g_ref[...] + b_ref[...]


def _add_ln_kernel(x_ref, r_ref, g_ref, b_ref, o_ref, *, eps):
    x = x_ref[...] + r_ref[...]
    mu = jnp.mean(x, axis=-1, keepdims=True)
    xc = x - mu
    var = jnp.mean(xc * xc, axis=-1, keepdims=True)
    o_ref[...] = xc * jax.lax.rsqrt(var + eps) * g_ref[...] + b_ref[...]


def layer_norm(x2d, gamma2, beta2, residual=None, eps=1e-5):
    M, D = x2d.shape
    tm, Mp = _tile_and_pad(M, 8, 256)
    xp = x2d if Mp == M else jnp.pad(x2d, ((0, Mp - M), (0, 0)))
    row = pl.BlockSpec((tm, D), lambda i: (i, 0))
    vec = pl.BlockSpec((1, D), lambda i: (0, 0))
    if residual is None:
        ins = (xp, gamma2, beta2)
        specs = [row, vec, vec]
        kern = functools.partial(_ln_kernel, eps=eps)
    else:
        rp = residual if Mp == M else jnp.pad(residual, ((0, Mp - M), (0, 0)))
        ins = (xp, rp, gamma2, beta2)
        specs = [row, row, vec, vec]
        kern = functools.partial(_add_ln_kernel, eps=eps)
    assert len(ins) == len(specs)
    out = pl.pallas_call(
        kern, out_shape=jax.ShapeDtypeStruct((Mp, D), jnp.float32),
        grid=(Mp // tm,), in_specs=specs, out_specs=row,
        compiler_params=pltpu.CompilerParams(
            dimension_semantics=("parallel",),
            vmem_limit_bytes=_VMEM_LIMIT),
    )(*ins)
    return out[:M] if Mp != M else out


# ----------------------------------------------------------------------------
# Fused attention sub-layer kernel:
#   LayerNorm(x + OutProj(concat_heads(softmax(QK^T/sqrt(dh)+mask) V)) + bo)
# grid = (B, Sq/tq); head-major q/k/v; (tq, D) VMEM ctx scratch; one full-width
# Wo matmul; lane-dense (tq, D) output store.
# ----------------------------------------------------------------------------

def _attn_kernel(*refs, nhead, scale, eps, has_mask):
    if has_mask:
        (q_ref, k_ref, v_ref, m_ref, x_ref,
         wo_ref, bo_ref, g_ref, be_ref, o_ref, ctx_ref) = refs
        mask = m_ref[0, :, :]                              # (tq, Sk)
    else:
        (q_ref, k_ref, v_ref, x_ref,
         wo_ref, bo_ref, g_ref, be_ref, o_ref, ctx_ref) = refs
        mask = None

    dh = q_ref.shape[3]
    for h in range(nhead):                                 # static unroll
        q = q_ref[0, h, :, :]                              # (tq, dh)
        k = k_ref[0, h, :, :]                              # (Sk, dh)
        v = v_ref[0, h, :, :]                              # (Sk, dh)
        s = jax.lax.dot_general(q, k, (((1,), (1,)), ((), ())),
                                preferred_element_type=jnp.float32) * scale
        if mask is not None:
            s = s + mask
        s = s - jnp.max(s, axis=-1, keepdims=True)
        p = jnp.exp(s)
        p = p / jnp.sum(p, axis=-1, keepdims=True)         # exact softmax
        ctx_ref[:, h * dh:(h + 1) * dh] = jnp.dot(
            p, v, preferred_element_type=jnp.float32)

    # One full-contraction output projection from the VMEM scratch.
    y = jnp.dot(ctx_ref[...], wo_ref[...], preferred_element_type=jnp.float32)
    y = y + bo_ref[...] + x_ref[0, :, :]                   # bias + residual
    mu = jnp.mean(y, axis=-1, keepdims=True)
    yc = y - mu
    var = jnp.mean(yc * yc, axis=-1, keepdims=True)
    o_ref[0, :, :] = yc * jax.lax.rsqrt(var + eps) * g_ref[...] + be_ref[...]


def attn_sublayer(q, k, v, x, attn_mask, wo_t, bo, ln_g, ln_b, *, eps=1e-5):
    """q/k/v: head-major (B, nhead, S, dh); x: residual (B, Sq, D)."""
    B, nhead, Sq, dh = q.shape
    Sk = k.shape[2]
    D = nhead * dh
    scale = 1.0 / math.sqrt(dh)
    tq = _row_tile(Sq, 256)
    grid = (B, Sq // tq)
    has_mask = attn_mask is not None

    ins = [q, k, v]
    specs = [
        pl.BlockSpec((1, nhead, tq, dh), lambda b, i: (b, 0, i, 0)),
        pl.BlockSpec((1, nhead, Sk, dh), lambda b, i: (b, 0, 0, 0)),
        pl.BlockSpec((1, nhead, Sk, dh), lambda b, i: (b, 0, 0, 0)),
    ]
    if has_mask:
        ins.append(attn_mask.reshape(1, Sq, Sk).astype(jnp.float32))
        specs.append(pl.BlockSpec((1, tq, Sk), lambda b, i: (0, i, 0)))
    ins += [x, wo_t, bo, ln_g, ln_b]
    specs += [
        pl.BlockSpec((1, tq, D), lambda b, i: (b, i, 0)),   # residual
        pl.BlockSpec((D, D), lambda b, i: (0, 0)),          # Wo (pre-transposed)
        pl.BlockSpec((1, D), lambda b, i: (0, 0)),          # bo
        pl.BlockSpec((1, D), lambda b, i: (0, 0)),          # LN gamma
        pl.BlockSpec((1, D), lambda b, i: (0, 0)),          # LN beta
    ]
    assert len(ins) == len(specs)

    kern = functools.partial(_attn_kernel, nhead=nhead, scale=scale, eps=eps,
                             has_mask=has_mask)
    return pl.pallas_call(
        kern,
        out_shape=jax.ShapeDtypeStruct((B, Sq, D), jnp.float32),
        grid=grid,
        in_specs=specs,
        out_specs=pl.BlockSpec((1, tq, D), lambda b, i: (b, i, 0)),
        scratch_shapes=[pltpu.VMEM((tq, D), jnp.float32)],
        compiler_params=pltpu.CompilerParams(
            dimension_semantics=("parallel", "parallel"),
            vmem_limit_bytes=_VMEM_LIMIT),
    )(*ins)


# ----------------------------------------------------------------------------
# Model glue (plain JAX: reshapes / head-major transposes, PE add)
# ----------------------------------------------------------------------------

def _split_heads(y2d, B, S, nhead, dh, n_groups):
    """(B*S, n_groups*nhead*dh) -> n_groups arrays of (B, nhead, S, dh)."""
    y = y2d.reshape(B, S, n_groups, nhead, dh)
    y = jnp.transpose(y, (2, 0, 3, 1, 4))        # (n_groups, B, nhead, S, dh)
    return [y[g] for g in range(n_groups)]


def feed_forward_block(x, ffn_p, ln_p):
    """LayerNorm(x + Linear2(gelu(Linear1(x)))); GELU and add+LN are fused."""
    B, S, D = x.shape
    x2 = x.reshape(B * S, D)
    h = linear(x2, ffn_p['l1']['w_t'], ffn_p['l1']['b'], act='gelu')
    y = linear(h, ffn_p['l2']['w_t'], ffn_p['l2']['b'],
               residual=x2, ln_g=ln_p['g'], ln_b=ln_p['b'])
    return y.reshape(B, S, D)


def encoder_layer(x, p, nhead, src_mask):
    B, S, D = x.shape
    dh = D // nhead
    sa = p['self_attn']
    qkv = linear(x.reshape(B * S, D), sa['wqkv_t'], sa['bqkv'])
    q, k, v = _split_heads(qkv, B, S, nhead, dh, 3)
    x = attn_sublayer(q, k, v, x, src_mask, sa['wo_t'], sa['bo'],
                      p['norm1']['g'], p['norm1']['b'])
    return feed_forward_block(x, p['ffn'], p['norm2'])


def decoder_layer(x, memory, p, nhead, tgt_mask):
    B, St, D = x.shape
    Sm = memory.shape[1]
    dh = D // nhead
    sa = p['self_attn']
    qkv = linear(x.reshape(B * St, D), sa['wqkv_t'], sa['bqkv'])
    q, k, v = _split_heads(qkv, B, St, nhead, dh, 3)
    x = attn_sublayer(q, k, v, x, tgt_mask, sa['wo_t'], sa['bo'],
                      p['norm1']['g'], p['norm1']['b'])

    ca = p['cross_attn']
    qc = linear(x.reshape(B * St, D), ca['wq_t'], ca['bq'])
    (qc,) = _split_heads(qc, B, St, nhead, dh, 1)
    kv = linear(memory.reshape(B * Sm, D), ca['wkv_t'], ca['bkv'])
    kc, vc = _split_heads(kv, B, Sm, nhead, dh, 2)
    x = attn_sublayer(qc, kc, vc, x, None, ca['wo_t'], ca['bo'],
                      p['norm2']['g'], p['norm2']['b'])
    return feed_forward_block(x, p['ffn'], p['norm3'])


def positional_encoding_table(max_len, d_model):
    position = jnp.arange(max_len, dtype=jnp.float32)[:, None]
    div_term = jnp.exp(jnp.arange(0, d_model, 2, dtype=jnp.float32)
                       * (-math.log(10000.0) / d_model))
    pe = jnp.zeros((max_len, d_model), jnp.float32)
    pe = pe.at[:, 0::2].set(jnp.sin(position * div_term))
    pe = pe.at[:, 1::2].set(jnp.cos(position * div_term))
    return pe


def transformer_forward(params, src, tgt, mask_src, mask_tgt, pe, *, nhead):
    B, Ss, d_in = src.shape
    _, St, d_out = tgt.shape
    d_model = params['emb_src']['w_t'].shape[1]

    # token embedding (nn.Linear) + positional encoding (dropout = identity)
    emb_src = linear(src.reshape(B * Ss, d_in), params['emb_src']['w_t'],
                     params['emb_src']['b']).reshape(B, Ss, d_model)
    memory = emb_src + pe[None, :Ss, :]
    for lp in params['enc_layers']:
        memory = encoder_layer(memory, lp, nhead, mask_src)
    memory = layer_norm(memory.reshape(B * Ss, d_model),
                        params['enc_norm']['g'],
                        params['enc_norm']['b']).reshape(B, Ss, d_model)

    emb_tgt = linear(tgt.reshape(B * St, d_out), params['emb_tgt']['w_t'],
                     params['emb_tgt']['b']).reshape(B, St, d_model)
    x = emb_tgt + pe[None, :St, :]
    for lp in params['dec_layers']:
        x = decoder_layer(x, memory, lp, nhead, mask_tgt)
    x = layer_norm(x.reshape(B * St, d_model),
                   params['dec_norm']['g'],
                   params['dec_norm']['b']).reshape(B, St, d_model)

    out = linear(x.reshape(B * St, d_model), params['out']['w_t'],
                 params['out']['b']).reshape(B, St, d_out)
    return out


# ----------------------------------------------------------------------------
# Parameter init: synthetic weights, pre-transposed ONCE to (K, N) kernel layout
# ----------------------------------------------------------------------------

def init_params(key, n_enc, n_dec, d_model, d_input, d_output, dff):
    keys = iter(jax.random.split(key, 1024))

    def dense(shape):
        return 0.05 * jax.random.normal(next(keys), shape, jnp.float32)

    def lin(in_f, out_f):
        w = dense((out_f, in_f))                      # PyTorch nn.Linear layout
        b = dense((out_f,))
        return {'w_t': jnp.transpose(w), 'b': b.reshape(1, out_f)}

    def mha():
        in_w = dense((3 * d_model, d_model))          # in_proj_weight layout
        in_b = dense((3 * d_model,))
        out_w = dense((d_model, d_model))
        out_b = dense((d_model,))
        w_t = jnp.transpose(in_w)                     # (D, 3D), transposed once
        return {'wqkv_t': w_t, 'bqkv': in_b.reshape(1, 3 * d_model),
                'wq_t': w_t[:, :d_model], 'bq': in_b[:d_model].reshape(1, d_model),
                'wkv_t': w_t[:, d_model:], 'bkv': in_b[d_model:].reshape(1, 2 * d_model),
                'wo_t': jnp.transpose(out_w), 'bo': out_b.reshape(1, d_model)}

    def ln():
        return {'g': jnp.ones((1, d_model), jnp.float32),
                'b': jnp.zeros((1, d_model), jnp.float32)}

    def ffn():
        return {'l1': lin(d_model, dff), 'l2': lin(dff, d_model)}

    return {
        'emb_src': lin(d_input, d_model),
        'emb_tgt': lin(d_output, d_model),
        'enc_layers': [{'self_attn': mha(), 'ffn': ffn(),
                        'norm1': ln(), 'norm2': ln()} for _ in range(n_enc)],
        'enc_norm': ln(),
        'dec_layers': [{'self_attn': mha(), 'cross_attn': mha(), 'ffn': ffn(),
                        'norm1': ln(), 'norm2': ln(), 'norm3': ln()}
                       for _ in range(n_dec)],
        'dec_norm': ln(),
        'out': lin(d_model, d_output),
    }


# ----------------------------------------------------------------------------
# Main
# ----------------------------------------------------------------------------

if __name__ == "__main__":
    B = 2
    S_SRC, S_TGT = 8, 8
    D_INPUT, D_OUTPUT = 4, 4
    D_MODEL, D_FF, NHEAD = 32, 64, 4
    N_ENC, N_DEC = 2, 2

    root = jax.random.PRNGKey(0)
    k_params, k_src, k_tgt = jax.random.split(root, 3)

    params = init_params(k_params, N_ENC, N_DEC, D_MODEL, D_INPUT, D_OUTPUT, D_FF)
    pe = positional_encoding_table(max_len=5000, d_model=D_MODEL)

    src = jax.random.normal(k_src, (B, S_SRC, D_INPUT), jnp.float32)
    tgt = jax.random.normal(k_tgt, (B, S_TGT, D_OUTPUT), jnp.float32)

    # additive float masks (PyTorch convention): 0 = attend, -1e9 = masked
    mask_src = jnp.zeros((S_SRC, S_SRC), jnp.float32)
    mask_tgt = jnp.where(jnp.triu(jnp.ones((S_TGT, S_TGT), dtype=bool), k=1),
                         jnp.float32(-1e9), jnp.float32(0.0))

    fwd = jax.jit(transformer_forward, static_argnames=('nhead',))
    out = fwd(params, src, tgt, mask_src, mask_tgt, pe, nhead=NHEAD)
    jax.block_until_ready(out)
    assert out.shape == (B, S_TGT, D_OUTPUT)
    assert bool(jnp.all(jnp.isfinite(out)))
    print("KERNEL_OK")
</pallas_src>

<mosaic_0001>
module attributes {stable_mosaic.version = 11 : i64} {
  func.func @k(%arg0: memref<8x128xf32, #tpu.memory_space<vmem>>, %arg1: memref<8x128xf32, #tpu.memory_space<vmem>>) attributes {dimension_semantics = [], scalar_prefetch = 0 : i64, scratch_operands = 0 : i64, tpu.core_type = #tpu.core_type<tc>} {
    %c0 = arith.constant 0 : index
    %c0_0 = arith.constant 0 : index
    %0 = vector.load %arg0[%c0, %c0_0] : memref<8x128xf32, #tpu.memory_space<vmem>>, vector<8x128xf32>
    %1 = math.erf %0 : vector<8x128xf32>
    %c0_1 = arith.constant 0 : index
    %c0_2 = arith.constant 0 : index
    %2 = vector.load %arg1[%c0_1, %c0_2] : memref<8x128xf32, #tpu.memory_space<vmem>>, vector<8x128xf32>
    tpu.vector_store %arg1[%c0_1, %c0_2], %1 {strides = array<i32>} : memref<8x128xf32, #tpu.memory_space<vmem>>, vector<8x128xf32>,
    return
  }
}

module attributes {stable_mosaic.version = 11 : i64} {
  func.func @_mm_kernel(%arg0: i32, %arg1: i32, %arg2: i32, %arg3: memref<16x32xf32, #tpu.memory_space<vmem>>, %arg4: memref<32x96xf32, #tpu.memory_space<vmem>>, %arg5: memref<1x96xf32, #tpu.memory_space<vmem>>, %arg6: memref<16x96xf32, #tpu.memory_space<vmem>>, %arg7: memref<16x96xf32, #tpu.memory_space<vmem>>) attributes {dimension_semantics = [#tpu.dimension_semantics<parallel>, #tpu.dimension_semantics<parallel>, #tpu.dimension_semantics<arbitrary>], iteration_bounds = array<i64: 1, 1, 1>, scalar_prefetch = 0 : i64, scratch_operands = 1 : i64, tpu.core_type = #tpu.core_type<tc>, window_params = [{transform_indices = @transform_0, window_bounds = array<i64: 16, 32>}, {transform_indices = @transform_1, window_bounds = array<i64: 32, 96>}, {transform_indices = @transform_2, window_bounds = array<i64: 1, 96>}, {transform_indices = @transform_3, window_bounds = array<i64: 16, 96>}]} {
    %c0_i32 = arith.constant 0 : i32
    %0 = arith.cmpi eq, %arg2, %c0_i32 : i32
    %1 = arith.extui %0 : i1 to i32
    %c0_i32_0 = arith.constant 0 : i32
    %2 = arith.cmpi ne, %1, %c0_i32_0 : i32
    scf.if %2 {
      %cst_10 = arith.constant 0.000000e+00 : f32
      %12 = vector.broadcast %cst_10 : f32 to vector<16x96xf32>
      %c0_11 = arith.constant 0 : index
      %c0_12 = arith.constant 0 : index
      %13 = vector.load %arg7[%c0_11, %c0_12] : memref<16x96xf32, #tpu.memory_space<vmem>>, vector<16x96xf32>
      tpu.vector_store %arg7[%c0_11, %c0_12], %12 {strides = array<i32>} : memref<16x96xf32, #tpu.memory_space<vmem>>, vector<16x96xf32>,
    } else {
    }
    %c0 = arith.constant 0 : index
    %c0_1 = arith.constant 0 : index
    %3 = vector.load %arg7[%c0, %c0_1] : memref<16x96xf32, #tpu.memory_space<vmem>>, vector<16x96xf32>
    %c0_2 = arith.constant 0 : index
    %c0_3 = arith.constant 0 : index
    %4 = vector.load %arg3[%c0_2, %c0_3] : memref<16x32xf32, #tpu.memory_space<vmem>>, vector<16x32xf32>
    %c0_4 = arith.constant 0 : index
    %c0_5 = arith.constant 0 : index
    %5 = vector.load %arg4[%c0_4, %c0_5] : memref<32x96xf32, #tpu.memory_space<vmem>>, vector<32x96xf32>
    %cst = arith.constant dense<0.000000e+00> : vector<16x96xf32>
    %6 = tpu.matmul %4, %5, %cst {dimension_numbers = #tpu.dot_dimension_numbers<[1], [0], [0], [1], [0, 0, 1, 1], [], []>} : vector<16x32xf32>, vector<32x96xf32>, vector<16x96xf32> -> vector<16x96xf32>
    %7 = arith.addf %3, %6 : vector<16x96xf32>
    %c0_6 = arith.constant 0 : index
    %c0_7 = arith.constant 0 : index
    %8 = vector.load %arg7[%c0_6, %c0_7] : memref<16x96xf32, #tpu.memory_space<vmem>>, vector<16x96xf32>
    tpu.vector_store %arg7[%c0_6, %c0_7], %7 {strides = array<i32>} : memref<16x96xf32, #tpu.memory_space<vmem>>, vector<16x96xf32>,
    %c0_i32_8 = arith.constant 0 : i32
    %9 = arith.cmpi eq, %arg2, %c0_i32_8 : i32
    %10 = arith.extui %9 : i1 to i32
    %c0_i32_9 = arith.constant 0 : i32
    %11 = arith.cmpi ne, %10, %c0_i32_9 : i32
    scf.if %11 {
      %c0_10 = arith.constant 0 : index
      %c0_11 = arith.constant 0 : index
      %12 = vector.load %arg7[%c0_10, %c0_11] : memref<16x96xf32, #tpu.memory_space<vmem>>, vector<16x96xf32>
      %c0_12 = arith.constant 0 : index
      %c0_13 = arith.constant 0 : index
      %13 = vector.load %arg5[%c0_12, %c0_13] : memref<1x96xf32, #tpu.memory_space<vmem>>, vector<1x96xf32>
      %14 = vector.broadcast %13 : vector<1x96xf32> to vector<16x96xf32>
      %15 = arith.addf %12, %14 : vector<16x96xf32>
      %c0_14 = arith.constant 0 : index
      %c0_15 = arith.constant 0 : index
      %16 = vector.load %arg6[%c0_14, %c0_15] : memref<16x96xf32, #tpu.memory_space<vmem>>, vector<16x96xf32>
      tpu.vector_store %arg6[%c0_14, %c0_15], %15 {strides = array<i32>} : memref<16x96xf32, #tpu.memory_space<vmem>>, vector<16x96xf32>,
    } else {
    }
    return
  }
  func.func @transform_0(%arg0: i32, %arg1: i32, %arg2: i32) -> (i32, i32) {
    %c0_i32 = arith.constant 0 : i32
    return %arg0, %arg2 : i32, i32
  }
  func.func @transform_1(%arg0: i32, %arg1: i32, %arg2: i32) -> (i32, i32) {
    %c0_i32 = arith.constant 0 : i32
    return %arg2, %arg1 : i32, i32
  }
  func.func @transform_2(%arg0: i32, %arg1: i32, %arg2: i32) -> (i32, i32) {
    %c0_i32 = arith.constant 0 : i32
    %c0_i32_0 = arith.constant 0 : i32
    return %c0_i32, %arg1 : i32, i32
  }
  func.func @transform_3(%arg0: i32, %arg1: i32, %arg2: i32) -> (i32, i32) {
    %c0_i32 = arith.constant 0 : i32
    return %arg0, %arg1 : i32, i32
  }
}

module attributes {stable_mosaic.version = 11 : i64} {
  func.func @_mm_kernel(%arg0: i32, %arg1: i32, %arg2: i32, %arg3: memref<16x4xf32, #tpu.memory_space<vmem>>, %arg4: memref<4x32xf32, #tpu.memory_space<vmem>>, %arg5: memref<1x32xf32, #tpu.memory_space<vmem>>, %arg6: memref<16x32xf32, #tpu.memory_space<vmem>>, %arg7: memref<16x32xf32, #tpu.memory_space<vmem>>) attributes {dimension_semantics = [#tpu.dimension_semantics<parallel>, #tpu.dimension_semantics<parallel>, #tpu.dimension_semantics<arbitrary>], iteration_bounds = array<i64: 1, 1, 1>, scalar_prefetch = 0 : i64, scratch_operands = 1 : i64, tpu.core_type = #tpu.core_type<tc>, window_params = [{transform_indices = @transform_0, window_bounds = array<i64: 16, 4>}, {transform_indices = @transform_1, window_bounds = array<i64: 4, 32>}, {transform_indices = @transform_2, window_bounds = array<i64: 1, 32>}, {transform_indices = @transform_3, window_bounds = array<i64: 16, 32>}]} {
    %c0_i32 = arith.constant 0 : i32
    %0 = arith.cmpi eq, %arg2, %c0_i32 : i32
    %1 = arith.extui %0 : i1 to i32
    %c0_i32_0 = arith.constant 0 : i32
    %2 = arith.cmpi ne, %1, %c0_i32_0 : i32
    scf.if %2 {
      %cst_10 = arith.constant 0.000000e+00 : f32
      %12 = vector.broadcast %cst_10 : f32 to vector<16x32xf32>
      %c0_11 = arith.constant 0 : index
      %c0_12 = arith.constant 0 : index
      %13 = vector.load %arg7[%c0_11, %c0_12] : memref<16x32xf32, #tpu.memory_space<vmem>>, vector<16x32xf32>
      tpu.vector_store %arg7[%c0_11, %c0_12], %12 {strides = array<i32>} : memref<16x32xf32, #tpu.memory_space<vmem>>, vector<16x32xf32>,
    } else {
    }
    %c0 = arith.constant 0 : index
    %c0_1 = arith.constant 0 : index
    %3 = vector.load %arg7[%c0, %c0_1] : memref<16x32xf32, #tpu.memory_space<vmem>>, vector<16x32xf32>
    %c0_2 = arith.constant 0 : index
    %c0_3 = arith.constant 0 : index
    %4 = vector.load %arg3[%c0_2, %c0_3] : memref<16x4xf32, #tpu.memory_space<vmem>>, vector<16x4xf32>
    %c0_4 = arith.constant 0 : index
    %c0_5 = arith.constant 0 : index
    %5 = vector.load %arg4[%c0_4, %c0_5] : memref<4x32xf32, #tpu.memory_space<vmem>>, vector<4x32xf32>
    %cst = arith.constant dense<0.000000e+00> : vector<16x32xf32>
    %6 = tpu.matmul %4, %5, %cst {dimension_numbers = #tpu.dot_dimension_numbers<[1], [0], [0], [1], [0, 0, 1, 1], [], []>} : vector<16x4xf32>, vector<4x32xf32>, vector<16x32xf32> -> vector<16x32xf32>
    %7 = arith.addf %3, %6 : vector<16x32xf32>
    %c0_6 = arith.constant 0 : index
    %c0_7 = arith.constant 0 : index
    %8 = vector.load %arg7[%c0_6, %c0_7] : memref<16x32xf32, #tpu.memory_space<vmem>>, vector<16x32xf32>
    tpu.vector_store %arg7[%c0_6, %c0_7], %7 {strides = array<i32>} : memref<16x32xf32, #tpu.memory_space<vmem>>, vector<16x32xf32>,
    %c0_i32_8 = arith.constant 0 : i32
    %9 = arith.cmpi eq, %arg2, %c0_i32_8 : i32
    %10 = arith.extui %9 : i1 to i32
    %c0_i32_9 = arith.constant 0 : i32
    %11 = arith.cmpi ne, %10, %c0_i32_9 : i32
    scf.if %11 {
      %c0_10 = arith.constant 0 : index
      %c0_11 = arith.constant 0 : index
      %12 = vector.load %arg7[%c0_10, %c0_11] : memref<16x32xf32, #tpu.memory_space<vmem>>, vector<16x32xf32>
      %c0_12 = arith.constant 0 : index
      %c0_13 = arith.constant 0 : index
      %13 = vector.load %arg5[%c0_12, %c0_13] : memref<1x32xf32, #tpu.memory_space<vmem>>, vector<1x32xf32>
      %14 = vector.broadcast %13 : vector<1x32xf32> to vector<16x32xf32>
      %15 = arith.addf %12, %14 : vector<16x32xf32>
      %c0_14 = arith.constant 0 : index
      %c0_15 = arith.constant 0 : index
      %16 = vector.load %arg6[%c0_14, %c0_15] : memref<16x32xf32, #tpu.memory_space<vmem>>, vector<16x32xf32>
      tpu.vector_store %arg6[%c0_14, %c0_15], %15 {strides = array<i32>} : memref<16x32xf32, #tpu.memory_space<vmem>>, vector<16x32xf32>,
    } else {
    }
    return
  }
  func.func @transform_0(%arg0: i32, %arg1: i32, %arg2: i32) -> (i32, i32) {
    %c0_i32 = arith.constant 0 : i32
    return %arg0, %arg2 : i32, i32
  }
  func.func @transform_1(%arg0: i32, %arg1: i32, %arg2: i32) -> (i32, i32) {
    %c0_i32 = arith.constant 0 : i32
    return %arg2, %arg1 : i32, i32
  }
  func.func @transform_2(%arg0: i32, %arg1: i32, %arg2: i32) -> (i32, i32) {
    %c0_i32 = arith.constant 0 : i32
    %c0_i32_0 = arith.constant 0 : i32
    return %c0_i32, %arg1 : i32, i32
  }
  func.func @transform_3(%arg0: i32, %arg1: i32, %arg2: i32) -> (i32, i32) {
    %c0_i32 = arith.constant 0 : i32
    return %arg0, %arg1 : i32, i32
  }
}

module attributes {stable_mosaic.version = 11 : i64} {
  func.func @_attn_kernel(%arg0: i32, %arg1: i32, %arg2: memref<1x4x8x8xf32, #tpu.memory_space<vmem>>, %arg3: memref<1x4x8x8xf32, #tpu.memory_space<vmem>>, %arg4: memref<1x4x8x8xf32, #tpu.memory_space<vmem>>, %arg5: memref<1x8x8xf32, #tpu.memory_space<vmem>>, %arg6: memref<1x8x32xf32, #tpu.memory_space<vmem>>, %arg7: memref<32x32xf32, #tpu.memory_space<vmem>>, %arg8: memref<1x32xf32, #tpu.memory_space<vmem>>, %arg9: memref<1x32xf32, #tpu.memory_space<vmem>>, %arg10: memref<1x32xf32, #tpu.memory_space<vmem>>, %arg11: memref<1x8x32xf32, #tpu.memory_space<vmem>>, %arg12: memref<8x32xf32, #tpu.memory_space<vmem>>) attributes {dimension_semantics = [#tpu.dimension_semantics<parallel>, #tpu.dimension_semantics<parallel>], iteration_bounds = array<i64: 2, 1>, scalar_prefetch = 0 : i64, scratch_operands = 1 : i64, tpu.core_type = #tpu.core_type<tc>, window_params = [{transform_indices = @transform_0, window_bounds = array<i64: 1, 4, 8, 8>}, {transform_indices = @transform_1, window_bounds = array<i64: 1, 4, 8, 8>}, {transform_indices = @transform_2, window_bounds = array<i64: 1, 4, 8, 8>}, {transform_indices = @transform_3, window_bounds = array<i64: 1, 8, 8>}, {transform_indices = @transform_4, window_bounds = array<i64: 1, 8, 32>}, {pipeline_mode = #tpu.pipeline_mode<synchronous>, transform_indices = @transform_5, window_bounds = array<i64: 32, 32>}, {pipeline_mode = #tpu.pipeline_mode<synchronous>, transform_indices = @transform_6, window_bounds = array<i64: 1, 32>}, {pipeline_mode = #tpu.pipeline_mode<synchronous>, transform_indices = @transform_7, window_bounds = array<i64: 1, 32>}, {pipeline_mode = #tpu.pipeline_mode<synchronous>, transform_indices = @transform_8, window_bounds = array<i64: 1, 32>}, {transform_indices = @transform_9, window_bounds = array<i64: 1, 8, 32>}]} {
    %c0 = arith.constant 0 : index
    %c0_0 = arith.constant 0 : index
    %c0_1 = arith.constant 0 : index
    %0 = vector.load %arg5[%c0, %c0_0, %c0_1] : memref<1x8x8xf32, #tpu.memory_space<vmem>>, vector<1x8x8xf32>
    %1 = vector.shape_cast %0 : vector<1x8x8xf32> to vector<8x8xf32>
    %c0_2 = arith.constant 0 : index
    %c0_3 = arith.constant 0 : index
    %c0_4 = arith.constant 0 : index
    %c0_5 = arith.constant 0 : index
    %2 = vector.load %arg2[%c0_2, %c0_3, %c0_4, %c0_5] : memref<1x4x8x8xf32, #tpu.memory_space<vmem>>, vector<1x1x8x8xf32>
    %3 = vector.shape_cast %2 : vector<1x1x8x8xf32> to vector<8x8xf32>
    %c0_6 = arith.constant 0 : index
    %c0_7 = arith.constant 0 : index
    %c0_8 = arith.constant 0 : index
    %c0_9 = arith.constant 0 : index
    %4 = vector.load %arg3[%c0_6, %c0_7, %c0_8, %c0_9] : memref<1x4x8x8xf32, #tpu.memory_space<vmem>>, vector<1x1x8x8xf32>
    %5 = vector.shape_cast %4 : vector<1x1x8x8xf32> to vector<8x8xf32>
    %c0_10 = arith.constant 0 : index
    %c0_11 = arith.constant 0 : index
    %c0_12 = arith.constant 0 : index
    %c0_13 = arith.constant 0 : index
    %6 = vector.load %arg4[%c0_10, %c0_11, %c0_12, %c0_13] : memref<1x4x8x8xf32, #tpu.memory_space<vmem>>, vector<1x1x8x8xf32>
    %7 = vector.shape_cast %6 : vector<1x1x8x8xf32> to vector<8x8xf32>
    %cst = arith.constant dense<0.000000e+00> : vector<8x8xf32>
    %8 = tpu.matmul %3, %5, %cst {dimension_numbers = #tpu.dot_dimension_numbers<[1], [1], [0], [0], [0, 0, 1, 0], [], []>} : vector<8x8xf32>, vector<8x8xf32>, vector<8x8xf32> -> vector<8x8xf32>
    %cst_14 = arith.constant 0.353553385 : f32
    %9 = vector.broadcast %cst_14 : f32 to vector<8x8xf32>
    %10 = arith.mulf %8, %9 : vector<8x8xf32>
    %11 = arith.addf %10, %1 : vector<8x8xf32>
    %cst_15 = arith.constant dense<0xFF800000> : vector<8xf32>
    %12 = vector.multi_reduction <maximumf>, %11, %cst_15 [1] : vector<8x8xf32> to vector<8xf32>
    %13 = vector.shape_cast %12 : vector<8xf32> to vector<8x1xf32>
    %14 = vector.broadcast %13 : vector<8x1xf32> to vector<8x8xf32>
    %15 = arith.subf %11, %14 : vector<8x8xf32>
    %16 = math.exp %15 : vector<8x8xf32>
    %cst_16 = arith.constant dense<0.000000e+00> : vector<8xf32>
    %17 = vector.multi_reduction <add>, %16, %cst_16 [1] : vector<8x8xf32> to vector<8xf32>
    %18 = vector.shape_cast %17 : vector<8xf32> to vector<8x1xf32>
    %19 = vector.broadcast %18 : vector<8x1xf32> to vector<8x8xf32>
    %20 = arith.divf %16, %19 : vector<8x8xf32>
    %cst_17 = arith.constant dense<0.000000e+00> : vector<8x8xf32>
    %21 = tpu.matmul %20, %7, %cst_17 {dimension_numbers = #tpu.dot_dimension_numbers<[1], [0], [0], [1], [0, 0, 1, 1], [], []>} : vector<8x8xf32>, vector<8x8xf32>, vector<8x8xf32> -> vector<8x8xf32>
    %c0_18 = arith.constant 0 : index
    %c0_19 = arith.constant 0 : index
    %22 = vector.load %arg12[%c0_18, %c0_19] : memref<8x32xf32, #tpu.memory_space<vmem>>, vector<8x8xf32>
    tpu.vector_store %arg12[%c0_18, %c0_19], %21 {strides = array<i32>} : memref<8x32xf32, #tpu.memory_space<vmem>>, vector<8x8xf32>,
    %c0_20 = arith.constant 0 : index
    %c1 = arith.constant 1 : index
    %c0_21 = arith.constant 0 : index
    %c0_22 = arith.constant 0 : index
    %23 = vector.load %arg2[%c0_20, %c1, %c0_21, %c0_22] : memref<1x4x8x8xf32, #tpu.memory_space<vmem>>, vector<1x1x8x8xf32>
    %24 = vector.shape_cast %23 : vector<1x1x8x8xf32> to vector<8x8xf32>
    %c0_23 = arith.constant 0 : index
    %c1_24 = arith.constant 1 : index
    %c0_25 = arith.constant 0 : index
    %c0_26 = arith.constant 0 : index
    %25 = vector.load %arg3[%c0_23, %c1_24, %c0_25, %c0_26] : memref<1x4x8x8xf32, #tpu.memory_space<vmem>>, vector<1x1x8x8xf32>
    %26 = vector.shape_cast %25 : vector<1x1x8x8xf32> to vector<8x8xf32>
    %c0_27 = arith.constant 0 : index
    %c1_28 = arith.constant 1 : index
    %c0_29 = arith.constant 0 : index
    %c0_30 = arith.constant 0 : index
    %27 = vector.load %arg4[%c0_27, %c1_28, %c0_29, %c0_30] : memref<1x4x8x8xf32, #tpu.memory_space<vmem>>, vector<1x1x8x8xf32>
    %28 = vector.shape_cast %27 : vector<1x1x8x8xf32> to vector<8x8xf32>
    %cst_31 = arith.constant dense<0.000000e+00> : vector<8x8xf32>
    %29 = tpu.matmul %24, %26, %cst_31 {dimension_numbers = #tpu.dot_dimension_numbers<[1], [1], [0], [0], [0, 0, 1, 0], [], []>} : vector<8x8xf32>, vector<8x8xf32>, vector<8x8xf32> -> vector<8x8xf32>
    %cst_32 = arith.constant 0.353553385 : f32
    %30 = vector.broadcast %cst_32 : f32 to vector<8x8xf32>
    %31 = arith.mulf %29, %30 : vector<8x8xf32>
    %32 = arith.addf %31, %1 : vector<8x8xf32>
    %cst_33 = arith.constant dense<0xFF800000> : vector<8xf32>
    %33 = vector.multi_reduction <maximumf>, %32, %cst_33 [1] : vector<8x8xf32> to vector<8xf32>
    %34 = vector.shape_cast %33 : vector<8xf32> to vector<8x1xf32>
    %35 = vector.broadcast %34 : vector<8x1xf32> to vector<8x8xf32>
    %36 = arith.subf %32, %35 : vector<8x8xf32>
    %37 = math.exp %36 : vector<8x8xf32>
    %cst_34 = arith.constant dense<0.000000e+00> : vector<8xf32>
    %38 = vector.multi_reduction <add>, %37, %cst_34 [1] : vector<8x8xf32> to vector<8xf32>
    %39 = vector.shape_cast %38 : vector<8xf32> to vector<8x1xf32>
    %40 = vector.broadcast %39 : vector<8x1xf32> to vector<8x8xf32>
    %41 = arith.divf %37, %40 : vector<8x8xf32>
    %cst_35 = arith.constant dense<0.000000e+00> : vector<8x8xf32>
    %42 = tpu.matmul %41, %28, %cst_35 {dimension_numbers = #tpu.dot_dimension_numbers<[1], [0], [0], [1], [0, 0, 1, 1], [], []>} : vector<8x8xf32>, vector<8x8xf32>, vector<8x8xf32> -> vector<8x8xf32>
    %c0_36 = arith.constant 0 : index
    %c8 = arith.constant 8 : index
    %43 = vector.load %arg12[%c0_36, %c8] : memref<8x32xf32, #tpu.memory_space<vmem>>, vector<8x8xf32>
    tpu.vector_store %arg12[%c0_36, %c8], %42 {strides = array<i32>} : memref<8x32xf32, #tpu.memory_space<vmem>>, vector<8x8xf32>,
    %c0_37 = arith.constant 0 : index
    %c2 = arith.constant 2 : index
    %c0_38 = arith.constant 0 : index
    %c0_39 = arith.constant 0 : index
    %44 = vector.load %arg2[%c0_37, %c2, %c0_38, %c0_39] : memref<1x4x8x8xf32, #tpu.memory_space<vmem>>, vector<1x1x8x8xf32>
    %45 = vector.shape_cast %44 : vector<1x1x8x8xf32> to vector<8x8xf32>
    %c0_40 = arith.constant 0 : index
    %c2_41 = arith.constant 2 : index
    %c0_42 = arith.constant 0 : index
    %c0_43 = arith.constant 0 : index
    %46 = vector.load %arg3[%c0_40, %c2_41, %c0_42, %c0_43] : memref<1x4x8x8xf32, #tpu.memory_space<vmem>>, vector<1x1x8x8xf32>
    %47 = vector.shape_cast %46 : vector<1x1x8x8xf32> to vector<8x8xf32>
    %c0_44 = arith.constant 0 : index
    %c2_45 = arith.constant 2 : index
    %c0_46 = arith.constant 0 : index
    %c0_47 = arith.constant 0 : index
    %48 = vector.load %arg4[%c0_44, %c2_45, %c0_46, %c0_47] : memref<1x4x8x8xf32, #tpu.memory_space<vmem>>, vector<1x1x8x8xf32>
    %49 = vector.shape_cast %48 : vector<1x1x8x8xf32> to vector<8x8xf32>
    %cst_48 = arith.constant dense<0.000000e+00> : vector<8x8xf32>
    %50 = tpu.matmul %45, %47, %cst_48 {dimension_numbers = #tpu.dot_dimension_numbers<[1], [1], [0], [0], [0, 0, 1, 0], [], []>} : vector<8x8xf32>, vector<8x8xf32>, vector<8x8xf32> -> vector<8x8xf32>
    %cst_49 = arith.constant 0.353553385 : f32
    %51 = vector.broadcast %cst_49 : f32 to vector<8x8xf32>
    %52 = arith.mulf %50, %51 : vector<8x8xf32>
    %53 = arith.addf %52, %1 : vector<8x8xf32>
    %cst_50 = arith.constant dense<0xFF800000> : vector<8xf32>
    %54 = vector.multi_reduction <maximumf>, %53, %cst_50 [1] : vector<8x8xf32> to vector<8xf32>
    %55 = vector.shape_cast %54 : vector<8xf32> to vector<8x1xf32>
    %56 = vector.broadcast %55 : vector<8x1xf32> to vector<8x8xf32>
    %57 = arith.subf %53, %56 : vector<8x8xf32>
    %58 = math.exp %57 : vector<8x8xf32>
    %cst_51 = arith.constant dense<0.000000e+00> : vector<8xf32>
    %59 = vector.multi_reduction <add>, %58, %cst_51 [1] : vector<8x8xf32> to vector<8xf32>
    %60 = vector.shape_cast %59 : vector<8xf32> to vector<8x1xf32>
    %61 = vector.broadcast %60 : vector<8x1xf32> to vector<8x8xf32>
    %62 = arith.divf %58, %61 : vector<8x8xf32>
    %cst_52 = arith.constant dense<0.000000e+00> : vector<8x8xf32>
    %63 = tpu.matmul %62, %49, %cst_52 {dimension_numbers = #tpu.dot_dimension_numbers<[1], [0], [0], [1], [0, 0, 1, 1], [], []>} : vector<8x8xf32>, vector<8x8xf32>, vector<8x8xf32> -> vector<8x8xf32>
    %c0_53 = arith.constant 0 : index
    %c16 = arith.constant 16 : index
    %64 = vector.load %arg12[%c0_53, %c16] : memref<8x32xf32, #tpu.memory_space<vmem>>, vector<8x8xf32>
    tpu.vector_store %arg12[%c0_53, %c16], %63 {strides = array<i32>} : memref<8x32xf32, #tpu.memory_space<vmem>>, vector<8x8xf32>,
    %c0_54 = arith.constant 0 : index
    %c3 = arith.constant 3 : index
    %c0_55 = arith.constant 0 : index
    %c0_56 = arith.constant 0 : index
    %65 = vector.load %arg2[%c0_54, %c3, %c0_55, %c0_56] : memref<1x4x8x8xf32, #tpu.memory_space<vmem>>, vector<1x1x8x8xf32>
    %66 = vector.shape_cast %65 : vector<1x1x8x8xf32> to vector<8x8xf32>
    %c0_57 = arith.constant 0 : index
    %c3_58 = arith.constant 3 : index
    %c0_59 = arith.constant 0 : index
    %c0_60 = arith.constant 0 : index
    %67 = vector.load %arg3[%c0_57, %c3_58, %c0_59, %c0_60] : memref<1x4x8x8xf32, #tpu.memory_space<vmem>>, vector<1x1x8x8xf32>
    %68 = vector.shape_cast %67 : vector<1x1x8x8xf32> to vector<8x8xf32>
    %c0_61 = arith.constant 0 : index
    %c3_62 = arith.constant 3 : index
    %c0_63 = arith.constant 0 : index
    %c0_64 = arith.constant 0 : index
    %69 = vector.load %arg4[%c0_61, %c3_62, %c0_63, %c0_64] : memref<1x4x8x8xf32, #tpu.memory_space<vmem>>, vector<1x1x8x8xf32>
    %70 = vector.shape_cast %69 : vector<1x1x8x8xf32> to vector<8x8xf32>
    %cst_65 = arith.constant dense<0.000000e+00> : vector<8x8xf32>
    %71 = tpu.matmul %66, %68, %cst_65 {dimension_numbers = #tpu.dot_dimension_numbers<[1], [1], [0], [0], [0, 0, 1, 0], [], []>} : vector<8x8xf32>, vector<8x8xf32>, vector<8x8xf32> -> vector<8x8xf32>
    %cst_66 = arith.constant 0.353553385 : f32
    %72 = vector.broadcast %cst_66 : f32 to vector<8x8xf32>
    %73 = arith.mulf %71, %72 : vector<8x8xf32>
    %74 = arith.addf %73, %1 : vector<8x8xf32>
    %cst_67 = arith.constant dense<0xFF800000> : vector<8xf32>
    %75 = vector.multi_reduction <maximumf>, %74, %cst_67 [1] : vector<8x8xf32> to vector<8xf32>
    %76 = vector.shape_cast %75 : vector<8xf32> to vector<8x1xf32>
    %77 = vector.broadcast %76 : vector<8x1xf32> to vector<8x8xf32>
    %78 = arith.subf %74, %77 : vector<8x8xf32>
    %79 = math.exp %78 : vector<8x8xf32>
    %cst_68 = arith.constant dense<0.000000e+00> : vector<8xf32>
    %80 = vector.multi_reduction <add>, %79, %cst_68 [1] : vector<8x8xf32> to vector<8xf32>
    %81 = vector.shape_cast %80 : vector<8xf32> to vector<8x1xf32>
    %82 = vector.broadcast %81 : vector<8x1xf32> to vector<8x8xf32>
    %83 = arith.divf %79, %82 : vector<8x8xf32>
    %cst_69 = arith.constant dense<0.000000e+00> : vector<8x8xf32>
    %84 = tpu.matmul %83, %70, %cst_69 {dimension_numbers = #tpu.dot_dimension_numbers<[1], [0], [0], [1], [0, 0, 1, 1], [], []>} : vector<8x8xf32>, vector<8x8xf32>, vector<8x8xf32> -> vector<8x8xf32>
    %c0_70 = arith.constant 0 : index
    %c24 = arith.constant 24 : index
    %85 = vector.load %arg12[%c0_70, %c24] : memref<8x32xf32, #tpu.memory_space<vmem>>, vector<8x8xf32>
    tpu.vector_store %arg12[%c0_70, %c24], %84 {strides = array<i32>} : memref<8x32xf32, #tpu.memory_space<vmem>>, vector<8x8xf32>,
    %c0_71 = arith.constant 0 : index
    %c0_72 = arith.constant 0 : index
    %86 = vector.load %arg12[%c0_71, %c0_72] : memref<8x32xf32, #tpu.memory_space<vmem>>, vector<8x32xf32>
    %c0_73 = arith.constant 0 : index
    %c0_74 = arith.constant 0 : index
    %87 = vector.load %arg7[%c0_73, %c0_74] : memref<32x32xf32, #tpu.memory_space<vmem>>, vector<32x32xf32>
    %cst_75 = arith.constant dense<0.000000e+00> : vector<8x32xf32>
    %88 = tpu.matmul %86, %87, %cst_75 {dimension_numbers = #tpu.dot_dimension_numbers<[1], [0], [0], [1], [0, 0, 1, 1], [], []>} : vector<8x32xf32>, vector<32x32xf32>, vector<8x32xf32> -> vector<8x32xf32>
    %c0_76 = arith.constant 0 : index
    %c0_77 = arith.constant 0 : index
    %89 = vector.load %arg8[%c0_76, %c0_77] : memref<1x32xf32, #tpu.memory_space<vmem>>, vector<1x32xf32>
    %90 = vector.broadcast %89 : vector<1x32xf32> to vector<8x32xf32>
    %91 = arith.addf %88, %90 : vector<8x32xf32>
    %c0_78 = arith.constant 0 : index
    %c0_79 = arith.constant 0 : index
    %c0_80 = arith.constant 0 : index
    %92 = vector.load %arg6[%c0_78, %c0_79, %c0_80] : memref<1x8x32xf32, #tpu.memory_space<vmem>>, vector<1x8x32xf32>
    %93 = vector.shape_cast %92 : vector<1x8x32xf32> to vector<8x32xf32>
    %94 = arith.addf %91, %93 : vector<8x32xf32>
    %cst_81 = arith.constant dense<0.000000e+00> : vector<8xf32>
    %95 = vector.multi_reduction <add>, %94, %cst_81 [1] : vector<8x32xf32> to vector<8xf32>
    %96 = vector.shape_cast %95 : vector<8xf32> to vector<8x1xf32>
    %cst_82 = arith.constant 3.200000e+01 : f32
    %97 = vector.broadcast %cst_82 : f32 to vector<8x1xf32>
    %98 = arith.divf %96, %97 : vector<8x1xf32>
    %99 = vector.broadcast %98 : vector<8x1xf32> to vector<8x32xf32>
    %100 = arith.subf %94, %99 : vector<8x32xf32>
    %101 = arith.mulf %100, %100 : vector<8x32xf32>
    %cst_83 = arith.constant dense<0.000000e+00> : vector<8xf32>
    %102 = vector.multi_reduction <add>, %101, %cst_83 [1] : vector<8x32xf32> to vector<8xf32>
    %103 = vector.shape_cast %102 : vector<8xf32> to vector<8x1xf32>
    %cst_84 = arith.constant 3.200000e+01 : f32
    %104 = vector.broadcast %cst_84 : f32 to vector<8x1xf32>
    %105 = arith.divf %103, %104 : vector<8x1xf32>
    %cst_85 = arith.constant 9.99999974E-6 : f32
    %106 = vector.broadcast %cst_85 : f32 to vector<8x1xf32>
    %107 = arith.addf %105, %106 : vector<8x1xf32>
    %108 = math.rsqrt %107 : vector<8x1xf32>
    %109 = vector.broadcast %108 : vector<8x1xf32> to vector<8x32xf32>
    %110 = arith.mulf %100, %109 : vector<8x32xf32>
    %c0_86 = arith.constant 0 : index
    %c0_87 = arith.constant 0 : index
    %111 = vector.load %arg9[%c0_86, %c0_87] : memref<1x32xf32, #tpu.memory_space<vmem>>, vector<1x32xf32>
    %112 = vector.broadcast %111 : vector<1x32xf32> to vector<8x32xf32>
    %113 = arith.mulf %110, %112 : vector<8x32xf32>
    %c0_88 = arith.constant 0 : index
    %c0_89 = arith.constant 0 : index
    %114 = vector.load %arg10[%c0_88, %c0_89] : memref<1x32xf32, #tpu.memory_space<vmem>>, vector<1x32xf32>
    %115 = vector.broadcast %114 : vector<1x32xf32> to vector<8x32xf32>
    %116 = arith.addf %113, %115 : vector<8x32xf32>
    %c0_90 = arith.constant 0 : index
    %c0_91 = arith.constant 0 : index
    %c0_92 = arith.constant 0 : index
    %117 = vector.load %arg11[%c0_90, %c0_91, %c0_92] : memref<1x8x32xf32, #tpu.memory_space<vmem>>, vector<1x8x32xf32>
    %118 = vector.shape_cast %117 : vector<1x8x32xf32> to vector<8x32xf32>
    %119 = vector.shape_cast %116 : vector<8x32xf32> to vector<1x8x32xf32>
    tpu.vector_store %arg11[%c0_90, %c0_91, %c0_92], %119 {strides = array<i32>} : memref<1x8x32xf32, #tpu.memory_space<vmem>>, vector<1x8x32xf32>,
    return
  }
  func.func @transform_0(%arg0: i32, %arg1: i32) -> (i32, i32, i32, i32) {
    %c0_i32 = arith.constant 0 : i32
    %c0_i32_0 = arith.constant 0 : i32
    %c0_i32_1 = arith.constant 0 : i32
    return %arg0, %c0_i32, %arg1, %c0_i32_0 : i32, i32, i32, i32
  }
  func.func @transform_1(%arg0: i32, %arg1: i32) -> (i32, i32, i32, i32) {
    %c0_i32 = arith.constant 0 : i32
    %c0_i32_0 = arith.constant 0 : i32
    %c0_i32_1 = arith.constant 0 : i32
    %c0_i32_2 = arith.constant 0 : i32
    return %arg0, %c0_i32, %c0_i32_0, %c0_i32_1 : i32, i32, i32, i32
  }
  func.func @transform_2(%arg0: i32, %arg1: i32) -> (i32, i32, i32, i32) {
    %c0_i32 = arith.constant 0 : i32
    %c0_i32_0 = arith.constant 0 : i32
    %c0_i32_1 = arith.constant 0 : i32
    %c0_i32_2 = arith.constant 0 : i32
    return %arg0, %c0_i32, %c0_i32_0, %c0_i32_1 : i32, i32, i32, i32
  }
  func.func @transform_3(%arg0: i32, %arg1: i32) -> (i32, i32, i32) {
    %c0_i32 = arith.constant 0 : i32
    %c0_i32_0 = arith.constant 0 : i32
    %c0_i32_1 = arith.constant 0 : i32
    return %c0_i32, %arg1, %c0_i32_0 : i32, i32, i32
  }
  func.func @transform_4(%arg0: i32, %arg1: i32) -> (i32, i32, i32) {
    %c0_i32 = arith.constant 0 : i32
    %c0_i32_0 = arith.constant 0 : i32
    return %arg0, %arg1, %c0_i32 : i32, i32, i32
  }
  func.func @transform_5(%arg0: i32, %arg1: i32) -> (i32, i32) {
    %c0_i32 = arith.constant 0 : i32
    %c0_i32_0 = arith.constant 0 : i32
    %c0_i32_1 = arith.constant 0 : i32
    return %c0_i32, %c0_i32_0 : i32, i32
  }
  func.func @transform_6(%arg0: i32, %arg1: i32) -> (i32, i32) {
    %c0_i32 = arith.constant 0 : i32
    %c0_i32_0 = arith.constant 0 : i32
    %c0_i32_1 = arith.constant 0 : i32
    return %c0_i32, %c0_i32_0 : i32, i32
  }
  func.func @transform_7(%arg0: i32, %arg1: i32) -> (i32, i32) {
    %c0_i32 = arith.constant 0 : i32
    %c0_i32_0 = arith.constant 0 : i32
    %c0_i32_1 = arith.constant 0 : i32
    return %c0_i32, %c0_i32_0 : i32, i32
  }
  func.func @transform_8(%arg0: i32, %arg1: i32) -> (i32, i32) {
    %c0_i32 = arith.constant 0 : i32
    %c0_i32_0 = arith.constant 0 : i32
    %c0_i32_1 = arith.constant 0 : i32
    return %c0_i32, %c0_i32_0 : i32, i32
  }
  func.func @transform_9(%arg0: i32, %arg1: i32) -> (i32, i32, i32) {
    %c0_i32 = arith.constant 0 : i32
    %c0_i32_0 = arith.constant 0 : i32
    return %arg0, %arg1, %c0_i32 : i32, i32, i32
  }
}

module attributes {stable_mosaic.version = 11 : i64} {
  func.func @_mm_kernel(%arg0: i32, %arg1: i32, %arg2: i32, %arg3: memref<16x32xf32, #tpu.memory_space<vmem>>, %arg4: memref<32x32xf32, #tpu.memory_space<vmem>>, %arg5: memref<1x32xf32, #tpu.memory_space<vmem>>, %arg6: memref<16x32xf32, #tpu.memory_space<vmem>>, %arg7: memref<16x32xf32, #tpu.memory_space<vmem>>) attributes {dimension_semantics = [#tpu.dimension_semantics<parallel>, #tpu.dimension_semantics<parallel>, #tpu.dimension_semantics<arbitrary>], iteration_bounds = array<i64: 1, 1, 1>, scalar_prefetch = 0 : i64, scratch_operands = 1 : i64, tpu.core_type = #tpu.core_type<tc>, window_params = [{transform_indices = @transform_0, window_bounds = array<i64: 16, 32>}, {transform_indices = @transform_1, window_bounds = array<i64: 32, 32>}, {transform_indices = @transform_2, window_bounds = array<i64: 1, 32>}, {transform_indices = @transform_3, window_bounds = array<i64: 16, 32>}]} {
    %c0_i32 = arith.constant 0 : i32
    %0 = arith.cmpi eq, %arg2, %c0_i32 : i32
    %1 = arith.extui %0 : i1 to i32
    %c0_i32_0 = arith.constant 0 : i32
    %2 = arith.cmpi ne, %1, %c0_i32_0 : i32
    scf.if %2 {
      %cst_10 = arith.constant 0.000000e+00 : f32
      %12 = vector.broadcast %cst_10 : f32 to vector<16x32xf32>
      %c0_11 = arith.constant 0 : index
      %c0_12 = arith.constant 0 : index
      %13 = vector.load %arg7[%c0_11, %c0_12] : memref<16x32xf32, #tpu.memory_space<vmem>>, vector<16x32xf32>
      tpu.vector_store %arg7[%c0_11, %c0_12], %12 {strides = array<i32>} : memref<16x32xf32, #tpu.memory_space<vmem>>, vector<16x32xf32>,
    } else {
    }
    %c0 = arith.constant 0 : index
    %c0_1 = arith.constant 0 : index
    %3 = vector.load %arg7[%c0, %c0_1] : memref<16x32xf32, #tpu.memory_space<vmem>>, vector<16x32xf32>
    %c0_2 = arith.constant 0 : index
    %c0_3 = arith.constant 0 : index
    %4 = vector.load %arg3[%c0_2, %c0_3] : memref<16x32xf32, #tpu.memory_space<vmem>>, vector<16x32xf32>
    %c0_4 = arith.constant 0 : index
    %c0_5 = arith.constant 0 : index
    %5 = vector.load %arg4[%c0_4, %c0_5] : memref<32x32xf32, #tpu.memory_space<vmem>>, vector<32x32xf32>
    %cst = arith.constant dense<0.000000e+00> : vector<16x32xf32>
    %6 = tpu.matmul %4, %5, %cst {dimension_numbers = #tpu.dot_dimension_numbers<[1], [0], [0], [1], [0, 0, 1, 1], [], []>} : vector<16x32xf32>, vector<32x32xf32>, vector<16x32xf32> -> vector<16x32xf32>
    %7 = arith.addf %3, %6 : vector<16x32xf32>
    %c0_6 = arith.constant 0 : index
    %c0_7 = arith.constant 0 : index
    %8 = vector.load %arg7[%c0_6, %c0_7] : memref<16x32xf32, #tpu.memory_space<vmem>>, vector<16x32xf32>
    tpu.vector_store %arg7[%c0_6, %c0_7], %7 {strides = array<i32>} : memref<16x32xf32, #tpu.memory_space<vmem>>, vector<16x32xf32>,
    %c0_i32_8 = arith.constant 0 : i32
    %9 = arith.cmpi eq, %arg2, %c0_i32_8 : i32
    %10 = arith.extui %9 : i1 to i32
    %c0_i32_9 = arith.constant 0 : i32
    %11 = arith.cmpi ne, %10, %c0_i32_9 : i32
    scf.if %11 {
      %c0_10 = arith.constant 0 : index
      %c0_11 = arith.constant 0 : index
      %12 = vector.load %arg7[%c0_10, %c0_11] : memref<16x32xf32, #tpu.memory_space<vmem>>, vector<16x32xf32>
      %c0_12 = arith.constant 0 : index
      %c0_13 = arith.constant 0 : index
      %13 = vector.load %arg5[%c0_12, %c0_13] : memref<1x32xf32, #tpu.memory_space<vmem>>, vector<1x32xf32>
      %14 = vector.broadcast %13 : vector<1x32xf32> to vector<16x32xf32>
      %15 = arith.addf %12, %14 : vector<16x32xf32>
      %c0_14 = arith.constant 0 : index
      %c0_15 = arith.constant 0 : index
      %16 = vector.load %arg6[%c0_14, %c0_15] : memref<16x32xf32, #tpu.memory_space<vmem>>, vector<16x32xf32>
      tpu.vector_store %arg6[%c0_14, %c0_15], %15 {strides = array<i32>} : memref<16x32xf32, #tpu.memory_space<vmem>>, vector<16x32xf32>,
    } else {
    }
    return
  }
  func.func @transform_0(%arg0: i32, %arg1: i32, %arg2: i32) -> (i32, i32) {
    %c0_i32 = arith.constant 0 : i32
    return %arg0, %arg2 : i32, i32
  }
  func.func @transform_1(%arg0: i32, %arg1: i32, %arg2: i32) -> (i32, i32) {
    %c0_i32 = arith.constant 0 : i32
    return %arg2, %arg1 : i32, i32
  }
  func.func @transform_2(%arg0: i32, %arg1: i32, %arg2: i32) -> (i32, i32) {
    %c0_i32 = arith.constant 0 : i32
    %c0_i32_0 = arith.constant 0 : i32
    return %c0_i32, %arg1 : i32, i32
  }
  func.func @transform_3(%arg0: i32, %arg1: i32, %arg2: i32) -> (i32, i32) {
    %c0_i32 = arith.constant 0 : i32
    return %arg0, %arg1 : i32, i32
  }
}

module attributes {stable_mosaic.version = 11 : i64} {
  func.func @_mm_kernel(%arg0: i32, %arg1: i32, %arg2: i32, %arg3: memref<16x32xf32, #tpu.memory_space<vmem>>, %arg4: memref<32x64xf32, #tpu.memory_space<vmem>>, %arg5: memref<1x64xf32, #tpu.memory_space<vmem>>, %arg6: memref<16x64xf32, #tpu.memory_space<vmem>>, %arg7: memref<16x64xf32, #tpu.memory_space<vmem>>) attributes {dimension_semantics = [#tpu.dimension_semantics<parallel>, #tpu.dimension_semantics<parallel>, #tpu.dimension_semantics<arbitrary>], iteration_bounds = array<i64: 1, 1, 1>, scalar_prefetch = 0 : i64, scratch_operands = 1 : i64, tpu.core_type = #tpu.core_type<tc>, window_params = [{transform_indices = @transform_0, window_bounds = array<i64: 16, 32>}, {transform_indices = @transform_1, window_bounds = array<i64: 32, 64>}, {transform_indices = @transform_2, window_bounds = array<i64: 1, 64>}, {transform_indices = @transform_3, window_bounds = array<i64: 16, 64>}]} {
    %c0_i32 = arith.constant 0 : i32
    %0 = arith.cmpi eq, %arg2, %c0_i32 : i32
    %1 = arith.extui %0 : i1 to i32
    %c0_i32_0 = arith.constant 0 : i32
    %2 = arith.cmpi ne, %1, %c0_i32_0 : i32
    scf.if %2 {
      %cst_10 = arith.constant 0.000000e+00 : f32
      %12 = vector.broadcast %cst_10 : f32 to vector<16x64xf32>
      %c0_11 = arith.constant 0 : index
      %c0_12 = arith.constant 0 : index
      %13 = vector.load %arg7[%c0_11, %c0_12] : memref<16x64xf32, #tpu.memory_space<vmem>>, vector<16x64xf32>
      tpu.vector_store %arg7[%c0_11, %c0_12], %12 {strides = array<i32>} : memref<16x64xf32, #tpu.memory_space<vmem>>, vector<16x64xf32>,
    } else {
    }
    %c0 = arith.constant 0 : index
    %c0_1 = arith.constant 0 : index
    %3 = vector.load %arg7[%c0, %c0_1] : memref<16x64xf32, #tpu.memory_space<vmem>>, vector<16x64xf32>
    %c0_2 = arith.constant 0 : index
    %c0_3 = arith.constant 0 : index
    %4 = vector.load %arg3[%c0_2, %c0_3] : memref<16x32xf32, #tpu.memory_space<vmem>>, vector<16x32xf32>
    %c0_4 = arith.constant 0 : index
    %c0_5 = arith.constant 0 : index
    %5 = vector.load %arg4[%c0_4, %c0_5] : memref<32x64xf32, #tpu.memory_space<vmem>>, vector<32x64xf32>
    %cst = arith.constant dense<0.000000e+00> : vector<16x64xf32>
    %6 = tpu.matmul %4, %5, %cst {dimension_numbers = #tpu.dot_dimension_numbers<[1], [0], [0], [1], [0, 0, 1, 1], [], []>} : vector<16x32xf32>, vector<32x64xf32>, vector<16x64xf32> -> vector<16x64xf32>
    %7 = arith.addf %3, %6 : vector<16x64xf32>
    %c0_6 = arith.constant 0 : index
    %c0_7 = arith.constant 0 : index
    %8 = vector.load %arg7[%c0_6, %c0_7] : memref<16x64xf32, #tpu.memory_space<vmem>>, vector<16x64xf32>
    tpu.vector_store %arg7[%c0_6, %c0_7], %7 {strides = array<i32>} : memref<16x64xf32, #tpu.memory_space<vmem>>, vector<16x64xf32>,
    %c0_i32_8 = arith.constant 0 : i32
    %9 = arith.cmpi eq, %arg2, %c0_i32_8 : i32
    %10 = arith.extui %9 : i1 to i32
    %c0_i32_9 = arith.constant 0 : i32
    %11 = arith.cmpi ne, %10, %c0_i32_9 : i32
    scf.if %11 {
      %c0_10 = arith.constant 0 : index
      %c0_11 = arith.constant 0 : index
      %12 = vector.load %arg7[%c0_10, %c0_11] : memref<16x64xf32, #tpu.memory_space<vmem>>, vector<16x64xf32>
      %c0_12 = arith.constant 0 : index
      %c0_13 = arith.constant 0 : index
      %13 = vector.load %arg5[%c0_12, %c0_13] : memref<1x64xf32, #tpu.memory_space<vmem>>, vector<1x64xf32>
      %14 = vector.broadcast %13 : vector<1x64xf32> to vector<16x64xf32>
      %15 = arith.addf %12, %14 : vector<16x64xf32>
      %c0_14 = arith.constant 0 : index
      %c0_15 = arith.constant 0 : index
      %16 = vector.load %arg6[%c0_14, %c0_15] : memref<16x64xf32, #tpu.memory_space<vmem>>, vector<16x64xf32>
      tpu.vector_store %arg6[%c0_14, %c0_15], %15 {strides = array<i32>} : memref<16x64xf32, #tpu.memory_space<vmem>>, vector<16x64xf32>,
    } else {
    }
    return
  }
  func.func @transform_0(%arg0: i32, %arg1: i32, %arg2: i32) -> (i32, i32) {
    %c0_i32 = arith.constant 0 : i32
    return %arg0, %arg2 : i32, i32
  }
  func.func @transform_1(%arg0: i32, %arg1: i32, %arg2: i32) -> (i32, i32) {
    %c0_i32 = arith.constant 0 : i32
    return %arg2, %arg1 : i32, i32
  }
  func.func @transform_2(%arg0: i32, %arg1: i32, %arg2: i32) -> (i32, i32) {
    %c0_i32 = arith.constant 0 : i32
    %c0_i32_0 = arith.constant 0 : i32
    return %c0_i32, %arg1 : i32, i32
  }
  func.func @transform_3(%arg0: i32, %arg1: i32, %arg2: i32) -> (i32, i32) {
    %c0_i32 = arith.constant 0 : i32
    return %arg0, %arg1 : i32, i32
  }
}

module attributes {stable_mosaic.version = 11 : i64} {
  func.func @_mm_add_ln_kernel(%arg0: i32, %arg1: i32, %arg2: i32, %arg3: memref<16x64xf32, #tpu.memory_space<vmem>>, %arg4: memref<64x32xf32, #tpu.memory_space<vmem>>, %arg5: memref<1x32xf32, #tpu.memory_space<vmem>>, %arg6: memref<16x32xf32, #tpu.memory_space<vmem>>, %arg7: memref<1x32xf32, #tpu.memory_space<vmem>>, %arg8: memref<1x32xf32, #tpu.memory_space<vmem>>, %arg9: memref<16x32xf32, #tpu.memory_space<vmem>>, %arg10: memref<16x32xf32, #tpu.memory_space<vmem>>) attributes {dimension_semantics = [#tpu.dimension_semantics<parallel>, #tpu.dimension_semantics<parallel>, #tpu.dimension_semantics<arbitrary>], iteration_bounds = array<i64: 1, 1, 1>, scalar_prefetch = 0 : i64, scratch_operands = 1 : i64, tpu.core_type = #tpu.core_type<tc>, window_params = [{transform_indices = @transform_0, window_bounds = array<i64: 16, 64>}, {transform_indices = @transform_1, window_bounds = array<i64: 64, 32>}, {transform_indices = @transform_2, window_bounds = array<i64: 1, 32>}, {transform_indices = @transform_3, window_bounds = array<i64: 16, 32>}, {transform_indices = @transform_4, window_bounds = array<i64: 1, 32>}, {transform_indices = @transform_5, window_bounds = array<i64: 1, 32>}, {transform_indices = @transform_6, window_bounds = array<i64: 16, 32>}]} {
    %c0_i32 = arith.constant 0 : i32
    %0 = arith.cmpi eq, %arg2, %c0_i32 : i32
    %1 = arith.extui %0 : i1 to i32
    %c0_i32_0 = arith.constant 0 : i32
    %2 = arith.cmpi ne, %1, %c0_i32_0 : i32
    scf.if %2 {
      %cst_10 = arith.constant 0.000000e+00 : f32
      %12 = vector.broadcast %cst_10 : f32 to vector<16x32xf32>
      %c0_11 = arith.constant 0 : index
      %c0_12 = arith.constant 0 : index
      %13 = vector.load %arg10[%c0_11, %c0_12] : memref<16x32xf32, #tpu.memory_space<vmem>>, vector<16x32xf32>
      tpu.vector_store %arg10[%c0_11, %c0_12], %12 {strides = array<i32>} : memref<16x32xf32, #tpu.memory_space<vmem>>, vector<16x32xf32>,
    } else {
    }
    %c0 = arith.constant 0 : index
    %c0_1 = arith.constant 0 : index
    %3 = vector.load %arg10[%c0, %c0_1] : memref<16x32xf32, #tpu.memory_space<vmem>>, vector<16x32xf32>
    %c0_2 = arith.constant 0 : index
    %c0_3 = arith.constant 0 : index
    %4 = vector.load %arg3[%c0_2, %c0_3] : memref<16x64xf32, #tpu.memory_space<vmem>>, vector<16x64xf32>
    %c0_4 = arith.constant 0 : index
    %c0_5 = arith.constant 0 : index
    %5 = vector.load %arg4[%c0_4, %c0_5] : memref<64x32xf32, #tpu.memory_space<vmem>>, vector<64x32xf32>
    %cst = arith.constant dense<0.000000e+00> : vector<16x32xf32>
    %6 = tpu.matmul %4, %5, %cst {dimension_numbers = #tpu.dot_dimension_numbers<[1], [0], [0], [1], [0, 0, 1, 1], [], []>} : vector<16x64xf32>, vector<64x32xf32>, vector<16x32xf32> -> vector<16x32xf32>
    %7 = arith.addf %3, %6 : vector<16x32xf32>
    %c0_6 = arith.constant 0 : index
    %c0_7 = arith.constant 0 : index
    %8 = vector.load %arg10[%c0_6, %c0_7] : memref<16x32xf32, #tpu.memory_space<vmem>>, vector<16x32xf32>
    tpu.vector_store %arg10[%c0_6, %c0_7], %7 {strides = array<i32>} : memref<16x32xf32, #tpu.memory_space<vmem>>, vector<16x32xf32>,
    %c0_i32_8 = arith.constant 0 : i32
    %9 = arith.cmpi eq, %arg2, %c0_i32_8 : i32
    %10 = arith.extui %9 : i1 to i32
    %c0_i32_9 = arith.constant 0 : i32
    %11 = arith.cmpi ne, %10, %c0_i32_9 : i32
    scf.if %11 {
      %c0_10 = arith.constant 0 : index
      %c0_11 = arith.constant 0 : index
      %12 = vector.load %arg10[%c0_10, %c0_11] : memref<16x32xf32, #tpu.memory_space<vmem>>, vector<16x32xf32>
      %c0_12 = arith.constant 0 : index
      %c0_13 = arith.constant 0 : index
      %13 = vector.load %arg5[%c0_12, %c0_13] : memref<1x32xf32, #tpu.memory_space<vmem>>, vector<1x32xf32>
      %14 = vector.broadcast %13 : vector<1x32xf32> to vector<16x32xf32>
      %15 = arith.addf %12, %14 : vector<16x32xf32>
      %c0_14 = arith.constant 0 : index
      %c0_15 = arith.constant 0 : index
      %16 = vector.load %arg6[%c0_14, %c0_15] : memref<16x32xf32, #tpu.memory_space<vmem>>, vector<16x32xf32>
      %17 = arith.addf %15, %16 : vector<16x32xf32>
      %cst_16 = arith.constant dense<0.000000e+00> : vector<16xf32>
      %18 = vector.multi_reduction <add>, %17, %cst_16 [1] : vector<16x32xf32> to vector<16xf32>
      %19 = vector.shape_cast %18 : vector<16xf32> to vector<16x1xf32>
      %cst_17 = arith.constant 3.200000e+01 : f32
      %20 = vector.broadcast %cst_17 : f32 to vector<16x1xf32>
      %21 = arith.divf %19, %20 : vector<16x1xf32>
      %22 = vector.broadcast %21 : vector<16x1xf32> to vector<16x32xf32>
      %23 = arith.subf %17, %22 : vector<16x32xf32>
      %24 = arith.mulf %23, %23 : vector<16x32xf32>
      %cst_18 = arith.constant dense<0.000000e+00> : vector<16xf32>
      %25 = vector.multi_reduction <add>, %24, %cst_18 [1] : vector<16x32xf32> to vector<16xf32>
      %26 = vector.shape_cast %25 : vector<16xf32> to vector<16x1xf32>
      %cst_19 = arith.constant 3.200000e+01 : f32
      %27 = vector.broadcast %cst_19 : f32 to vector<16x1xf32>
      %28 = arith.divf %26, %27 : vector<16x1xf32>
      %cst_20 = arith.constant 9.99999974E-6 : f32
      %29 = vector.broadcast %cst_20 : f32 to vector<16x1xf32>
      %30 = arith.addf %28, %29 : vector<16x1xf32>
      %31 = math.rsqrt %30 : vector<16x1xf32>
      %32 = vector.broadcast %31 : vector<16x1xf32> to vector<16x32xf32>
      %33 = arith.mulf %23, %32 : vector<16x32xf32>
      %c0_21 = arith.constant 0 : index
      %c0_22 = arith.constant 0 : index
      %34 = vector.load %arg7[%c0_21, %c0_22] : memref<1x32xf32, #tpu.memory_space<vmem>>, vector<1x32xf32>
      %35 = vector.broadcast %34 : vector<1x32xf32> to vector<16x32xf32>
      %36 = arith.mulf %33, %35 : vector<16x32xf32>
      %c0_23 = arith.constant 0 : index
      %c0_24 = arith.constant 0 : index
      %37 = vector.load %arg8[%c0_23, %c0_24] : memref<1x32xf32, #tpu.memory_space<vmem>>, vector<1x32xf32>
      %38 = vector.broadcast %37 : vector<1x32xf32> to vector<16x32xf32>
      %39 = arith.addf %36, %38 : vector<16x32xf32>
      %c0_25 = arith.constant 0 : index
      %c0_26 = arith.constant 0 : index
      %40 = vector.load %arg9[%c0_25, %c0_26] : memref<16x32xf32, #tpu.memory_space<vmem>>, vector<16x32xf32>
      tpu.vector_store %arg9[%c0_25, %c0_26], %39 {strides = array<i32>} : memref<16x32xf32, #tpu.memory_space<vmem>>, vector<16x32xf32>,
    } else {
    }
    return
  }
  func.func @transform_0(%arg0: i32, %arg1: i32, %arg2: i32) -> (i32, i32) {
    %c0_i32 = arith.constant 0 : i32
    return %arg0, %arg2 : i32, i32
  }
  func.func @transform_1(%arg0: i32, %arg1: i32, %arg2: i32) -> (i32, i32) {
    %c0_i32 = arith.constant 0 : i32
    return %arg2, %arg1 : i32, i32
  }
  func.func @transform_2(%arg0: i32, %arg1: i32, %arg2: i32) -> (i32, i32) {
    %c0_i32 = arith.constant 0 : i32
    %c0_i32_0 = arith.constant 0 : i32
    return %c0_i32, %arg1 : i32, i32
  }
  func.func @transform_3(%arg0: i32, %arg1: i32, %arg2: i32) -> (i32, i32) {
    %c0_i32 = arith.constant 0 : i32
    return %arg0, %arg1 : i32, i32
  }
  func.func @transform_4(%arg0: i32, %arg1: i32, %arg2: i32) -> (i32, i32) {
    %c0_i32 = arith.constant 0 : i32
    %c0_i32_0 = arith.constant 0 : i32
    return %c0_i32, %arg1 : i32, i32
  }
  func.func @transform_5(%arg0: i32, %arg1: i32, %arg2: i32) -> (i32, i32) {
    %c0_i32 = arith.constant 0 : i32
    %c0_i32_0 = arith.constant 0 : i32
    return %c0_i32, %arg1 : i32, i32
  }
  func.func @transform_6(%arg0: i32, %arg1: i32, %arg2: i32) -> (i32, i32) {
    %c0_i32 = arith.constant 0 : i32
    return %arg0, %arg1 : i32, i32
  }
}

module attributes {stable_mosaic.version = 11 : i64} {
  func.func @_ln_kernel(%arg0: i32, %arg1: memref<16x32xf32, #tpu.memory_space<vmem>>, %arg2: memref<1x32xf32, #tpu.memory_space<vmem>>, %arg3: memref<1x32xf32, #tpu.memory_space<vmem>>, %arg4: memref<16x32xf32, #tpu.memory_space<vmem>>) attributes {dimension_semantics = [#tpu.dimension_semantics<parallel>], iteration_bounds = array<i64: 1>, scalar_prefetch = 0 : i64, scratch_operands = 0 : i64, tpu.core_type = #tpu.core_type<tc>, window_params = [{transform_indices = @transform_0, window_bounds = array<i64: 16, 32>}, {pipeline_mode = #tpu.pipeline_mode<synchronous>, transform_indices = @transform_1, window_bounds = array<i64: 1, 32>}, {pipeline_mode = #tpu.pipeline_mode<synchronous>, transform_indices = @transform_2, window_bounds = array<i64: 1, 32>}, {transform_indices = @transform_3, window_bounds = array<i64: 16, 32>}]} {
    %c0 = arith.constant 0 : index
    %c0_0 = arith.constant 0 : index
    %0 = vector.load %arg1[%c0, %c0_0] : memref<16x32xf32, #tpu.memory_space<vmem>>, vector<16x32xf32>
    %cst = arith.constant dense<0.000000e+00> : vector<16xf32>
    %1 = vector.multi_reduction <add>, %0, %cst [1] : vector<16x32xf32> to vector<16xf32>
    %2 = vector.shape_cast %1 : vector<16xf32> to vector<16x1xf32>
    %cst_1 = arith.constant 3.200000e+01 : f32
    %3 = vector.broadcast %cst_1 : f32 to vector<16x1xf32>
    %4 = arith.divf %2, %3 : vector<16x1xf32>
    %5 = vector.broadcast %4 : vector<16x1xf32> to vector<16x32xf32>
    %6 = arith.subf %0, %5 : vector<16x32xf32>
    %7 = arith.mulf %6, %6 : vector<16x32xf32>
    %cst_2 = arith.constant dense<0.000000e+00> : vector<16xf32>
    %8 = vector.multi_reduction <add>, %7, %cst_2 [1] : vector<16x32xf32> to vector<16xf32>
    %9 = vector.shape_cast %8 : vector<16xf32> to vector<16x1xf32>
    %cst_3 = arith.constant 3.200000e+01 : f32
    %10 = vector.broadcast %cst_3 : f32 to vector<16x1xf32>
    %11 = arith.divf %9, %10 : vector<16x1xf32>
    %cst_4 = arith.constant 9.99999974E-6 : f32
    %12 = vector.broadcast %cst_4 : f32 to vector<16x1xf32>
    %13 = arith.addf %11, %12 : vector<16x1xf32>
    %14 = math.rsqrt %13 : vector<16x1xf32>
    %15 = vector.broadcast %14 : vector<16x1xf32> to vector<16x32xf32>
    %16 = arith.mulf %6, %15 : vector<16x32xf32>
    %c0_5 = arith.constant 0 : index
    %c0_6 = arith.constant 0 : index
    %17 = vector.load %arg2[%c0_5, %c0_6] : memref<1x32xf32, #tpu.memory_space<vmem>>, vector<1x32xf32>
    %18 = vector.broadcast %17 : vector<1x32xf32> to vector<16x32xf32>
    %19 = arith.mulf %16, %18 : vector<16x32xf32>
    %c0_7 = arith.constant 0 : index
    %c0_8 = arith.constant 0 : index
    %20 = vector.load %arg3[%c0_7, %c0_8] : memref<1x32xf32, #tpu.memory_space<vmem>>, vector<1x32xf32>
    %21 = vector.broadcast %20 : vector<1x32xf32> to vector<16x32xf32>
    %22 = arith.addf %19, %21 : vector<16x32xf32>
    %c0_9 = arith.constant 0 : index
    %c0_10 = arith.constant 0 : index
    %23 = vector.load %arg4[%c0_9, %c0_10] : memref<16x32xf32, #tpu.memory_space<vmem>>, vector<16x32xf32>
    tpu.vector_store %arg4[%c0_9, %c0_10], %22 {strides = array<i32>} : memref<16x32xf32, #tpu.memory_space<vmem>>, vector<16x32xf32>,
    return
  }
  func.func @transform_0(%arg0: i32) -> (i32, i32) {
    %c0_i32 = arith.constant 0 : i32
    %c0_i32_0 = arith.constant 0 : i32
    return %arg0, %c0_i32 : i32, i32
  }
  func.func @transform_1(%arg0: i32) -> (i32, i32) {
    %c0_i32 = arith.constant 0 : i32
    %c0_i32_0 = arith.constant 0 : i32
    %c0_i32_1 = arith.constant 0 : i32
    return %c0_i32, %c0_i32_0 : i32, i32
  }
  func.func @transform_2(%arg0: i32) -> (i32, i32) {
    %c0_i32 = arith.constant 0 : i32
    %c0_i32_0 = arith.constant 0 : i32
    %c0_i32_1 = arith.constant 0 : i32
    return %c0_i32, %c0_i32_0 : i32, i32
  }
  func.func @transform_3(%arg0: i32) -> (i32, i32) {
    %c0_i32 = arith.constant 0 : i32
    %c0_i32_0 = arith.constant 0 : i32
    return %arg0, %c0_i32 : i32, i32
  }
}

module attributes {stable_mosaic.version = 11 : i64} {
  func.func @_mm_kernel(%arg0: i32, %arg1: i32, %arg2: i32, %arg3: memref<16x32xf32, #tpu.memory_space<vmem>>, %arg4: memref<32x64xf32, #tpu.memory_space<vmem>>, %arg5: memref<1x64xf32, #tpu.memory_space<vmem>>, %arg6: memref<16x64xf32, #tpu.memory_space<vmem>>, %arg7: memref<16x64xf32, #tpu.memory_space<vmem>>) attributes {dimension_semantics = [#tpu.dimension_semantics<parallel>, #tpu.dimension_semantics<parallel>, #tpu.dimension_semantics<arbitrary>], iteration_bounds = array<i64: 1, 1, 1>, scalar_prefetch = 0 : i64, scratch_operands = 1 : i64, tpu.core_type = #tpu.core_type<tc>, window_params = [{transform_indices = @transform_0, window_bounds = array<i64: 16, 32>}, {transform_indices = @transform_1, window_bounds = array<i64: 32, 64>}, {transform_indices = @transform_2, window_bounds = array<i64: 1, 64>}, {transform_indices = @transform_3, window_bounds = array<i64: 16, 64>}]} {
    %c0_i32 = arith.constant 0 : i32
    %0 = arith.cmpi eq, %arg2, %c0_i32 : i32
    %1 = arith.extui %0 : i1 to i32
    %c0_i32_0 = arith.constant 0 : i32
    %2 = arith.cmpi ne, %1, %c0_i32_0 : i32
    scf.if %2 {
      %cst_10 = arith.constant 0.000000e+00 : f32
      %12 = vector.broadcast %cst_10 : f32 to vector<16x64xf32>
      %c0_11 = arith.constant 0 : index
      %c0_12 = arith.constant 0 : index
      %13 = vector.load %arg7[%c0_11, %c0_12] : memref<16x64xf32, #tpu.memory_space<vmem>>, vector<16x64xf32>
      tpu.vector_store %arg7[%c0_11, %c0_12], %12 {strides = array<i32>} : memref<16x64xf32, #tpu.memory_space<vmem>>, vector<16x64xf32>,
    } else {
    }
    %c0 = arith.constant 0 : index
    %c0_1 = arith.constant 0 : index
    %3 = vector.load %arg7[%c0, %c0_1] : memref<16x64xf32, #tpu.memory_space<vmem>>, vector<16x64xf32>
    %c0_2 = arith.constant 0 : index
    %c0_3 = arith.constant 0 : index
    %4 = vector.load %arg3[%c0_2, %c0_3] : memref<16x32xf32, #tpu.memory_space<vmem>>, vector<16x32xf32>
    %c0_4 = arith.constant 0 : index
    %c0_5 = arith.constant 0 : index
    %5 = vector.load %arg4[%c0_4, %c0_5] : memref<32x64xf32, #tpu.memory_space<vmem>>, vector<32x64xf32>
    %cst = arith.constant dense<0.000000e+00> : vector<16x64xf32>
    %6 = tpu.matmul %4, %5, %cst {dimension_numbers = #tpu.dot_dimension_numbers<[1], [0], [0], [1], [0, 0, 1, 1], [], []>} : vector<16x32xf32>, vector<32x64xf32>, vector<16x64xf32> -> vector<16x64xf32>
    %7 = arith.addf %3, %6 : vector<16x64xf32>
    %c0_6 = arith.constant 0 : index
    %c0_7 = arith.constant 0 : index
    %8 = vector.load %arg7[%c0_6, %c0_7] : memref<16x64xf32, #tpu.memory_space<vmem>>, vector<16x64xf32>
    tpu.vector_store %arg7[%c0_6, %c0_7], %7 {strides = array<i32>} : memref<16x64xf32, #tpu.memory_space<vmem>>, vector<16x64xf32>,
    %c0_i32_8 = arith.constant 0 : i32
    %9 = arith.cmpi eq, %arg2, %c0_i32_8 : i32
    %10 = arith.extui %9 : i1 to i32
    %c0_i32_9 = arith.constant 0 : i32
    %11 = arith.cmpi ne, %10, %c0_i32_9 : i32
    scf.if %11 {
      %c0_10 = arith.constant 0 : index
      %c0_11 = arith.constant 0 : index
      %12 = vector.load %arg7[%c0_10, %c0_11] : memref<16x64xf32, #tpu.memory_space<vmem>>, vector<16x64xf32>
      %c0_12 = arith.constant 0 : index
      %c0_13 = arith.constant 0 : index
      %13 = vector.load %arg5[%c0_12, %c0_13] : memref<1x64xf32, #tpu.memory_space<vmem>>, vector<1x64xf32>
      %14 = vector.broadcast %13 : vector<1x64xf32> to vector<16x64xf32>
      %15 = arith.addf %12, %14 : vector<16x64xf32>
      %c0_14 = arith.constant 0 : index
      %c0_15 = arith.constant 0 : index
      %16 = vector.load %arg6[%c0_14, %c0_15] : memref<16x64xf32, #tpu.memory_space<vmem>>, vector<16x64xf32>
      tpu.vector_store %arg6[%c0_14, %c0_15], %15 {strides = array<i32>} : memref<16x64xf32, #tpu.memory_space<vmem>>, vector<16x64xf32>,
    } else {
    }
    return
  }
  func.func @transform_0(%arg0: i32, %arg1: i32, %arg2: i32) -> (i32, i32) {
    %c0_i32 = arith.constant 0 : i32
    return %arg0, %arg2 : i32, i32
  }
  func.func @transform_1(%arg0: i32, %arg1: i32, %arg2: i32) -> (i32, i32) {
    %c0_i32 = arith.constant 0 : i32
    return %arg2, %arg1 : i32, i32
  }
  func.func @transform_2(%arg0: i32, %arg1: i32, %arg2: i32) -> (i32, i32) {
    %c0_i32 = arith.constant 0 : i32
    %c0_i32_0 = arith.constant 0 : i32
    return %c0_i32, %arg1 : i32, i32
  }
  func.func @transform_3(%arg0: i32, %arg1: i32, %arg2: i32) -> (i32, i32) {
    %c0_i32 = arith.constant 0 : i32
    return %arg0, %arg1 : i32, i32
  }
}

module attributes {stable_mosaic.version = 11 : i64} {
  func.func @_mm_kernel(%arg0: i32, %arg1: i32, %arg2: i32, %arg3: memref<16x32xf32, #tpu.memory_space<vmem>>, %arg4: memref<32x4xf32, #tpu.memory_space<vmem>>, %arg5: memref<1x4xf32, #tpu.memory_space<vmem>>, %arg6: memref<16x4xf32, #tpu.memory_space<vmem>>, %arg7: memref<16x4xf32, #tpu.memory_space<vmem>>) attributes {dimension_semantics = [#tpu.dimension_semantics<parallel>, #tpu.dimension_semantics<parallel>, #tpu.dimension_semantics<arbitrary>], iteration_bounds = array<i64: 1, 1, 1>, scalar_prefetch = 0 : i64, scratch_operands = 1 : i64, tpu.core_type = #tpu.core_type<tc>, window_params = [{transform_indices = @transform_0, window_bounds = array<i64: 16, 32>}, {transform_indices = @transform_1, window_bounds = array<i64: 32, 4>}, {transform_indices = @transform_2, window_bounds = array<i64: 1, 4>}, {transform_indices = @transform_3, window_bounds = array<i64: 16, 4>}]} {
    %c0_i32 = arith.constant 0 : i32
    %0 = arith.cmpi eq, %arg2, %c0_i32 : i32
    %1 = arith.extui %0 : i1 to i32
    %c0_i32_0 = arith.constant 0 : i32
    %2 = arith.cmpi ne, %1, %c0_i32_0 : i32
    scf.if %2 {
      %cst_10 = arith.constant 0.000000e+00 : f32
      %12 = vector.broadcast %cst_10 : f32 to vector<16x4xf32>
      %c0_11 = arith.constant 0 : index
      %c0_12 = arith.constant 0 : index
      %13 = vector.load %arg7[%c0_11, %c0_12] : memref<16x4xf32, #tpu.memory_space<vmem>>, vector<16x4xf32>
      tpu.vector_store %arg7[%c0_11, %c0_12], %12 {strides = array<i32>} : memref<16x4xf32, #tpu.memory_space<vmem>>, vector<16x4xf32>,
    } else {
    }
    %c0 = arith.constant 0 : index
    %c0_1 = arith.constant 0 : index
    %3 = vector.load %arg7[%c0, %c0_1] : memref<16x4xf32, #tpu.memory_space<vmem>>, vector<16x4xf32>
    %c0_2 = arith.constant 0 : index
    %c0_3 = arith.constant 0 : index
    %4 = vector.load %arg3[%c0_2, %c0_3] : memref<16x32xf32, #tpu.memory_space<vmem>>, vector<16x32xf32>
    %c0_4 = arith.constant 0 : index
    %c0_5 = arith.constant 0 : index
    %5 = vector.load %arg4[%c0_4, %c0_5] : memref<32x4xf32, #tpu.memory_space<vmem>>, vector<32x4xf32>
    %cst = arith.constant dense<0.000000e+00> : vector<16x4xf32>
    %6 = tpu.matmul %4, %5, %cst {dimension_numbers = #tpu.dot_dimension_numbers<[1], [0], [0], [1], [0, 0, 1, 1], [], []>} : vector<16x32xf32>, vector<32x4xf32>, vector<16x4xf32> -> vector<16x4xf32>
    %7 = arith.addf %3, %6 : vector<16x4xf32>
    %c0_6 = arith.constant 0 : index
    %c0_7 = arith.constant 0 : index
    %8 = vector.load %arg7[%c0_6, %c0_7] : memref<16x4xf32, #tpu.memory_space<vmem>>, vector<16x4xf32>
    tpu.vector_store %arg7[%c0_6, %c0_7], %7 {strides = array<i32>} : memref<16x4xf32, #tpu.memory_space<vmem>>, vector<16x4xf32>,
    %c0_i32_8 = arith.constant 0 : i32
    %9 = arith.cmpi eq, %arg2, %c0_i32_8 : i32
    %10 = arith.extui %9 : i1 to i32
    %c0_i32_9 = arith.constant 0 : i32
    %11 = arith.cmpi ne, %10, %c0_i32_9 : i32
    scf.if %11 {
      %c0_10 = arith.constant 0 : index
      %c0_11 = arith.constant 0 : index
      %12 = vector.load %arg7[%c0_10, %c0_11] : memref<16x4xf32, #tpu.memory_space<vmem>>, vector<16x4xf32>
      %c0_12 = arith.constant 0 : index
      %c0_13 = arith.constant 0 : index
      %13 = vector.load %arg5[%c0_12, %c0_13] : memref<1x4xf32, #tpu.memory_space<vmem>>, vector<1x4xf32>
      %14 = vector.broadcast %13 : vector<1x4xf32> to vector<16x4xf32>
      %15 = arith.addf %12, %14 : vector<16x4xf32>
      %c0_14 = arith.constant 0 : index
      %c0_15 = arith.constant 0 : index
      %16 = vector.load %arg6[%c0_14, %c0_15] : memref<16x4xf32, #tpu.memory_space<vmem>>, vector<16x4xf32>
      tpu.vector_store %arg6[%c0_14, %c0_15], %15 {strides = array<i32>} : memref<16x4xf32, #tpu.memory_space<vmem>>, vector<16x4xf32>,
    } else {
    }
    return
  }
  func.func @transform_0(%arg0: i32, %arg1: i32, %arg2: i32) -> (i32, i32) {
    %c0_i32 = arith.constant 0 : i32
    return %arg0, %arg2 : i32, i32
  }
  func.func @transform_1(%arg0: i32, %arg1: i32, %arg2: i32) -> (i32, i32) {
    %c0_i32 = arith.constant 0 : i32
    return %arg2, %arg1 : i32, i32
  }
  func.func @transform_2(%arg0: i32, %arg1: i32, %arg2: i32) -> (i32, i32) {
    %c0_i32 = arith.constant 0 : i32
    %c0_i32_0 = arith.constant 0 : i32
    return %c0_i32, %arg1 : i32, i32
  }
  func.func @transform_3(%arg0: i32, %arg1: i32, %arg2: i32) -> (i32, i32) {
    %c0_i32 = arith.constant 0 : i32
    return %arg0, %arg1 : i32, i32
  }
}

module attributes {stable_mosaic.version = 11 : i64} {
  func.func @_attn_kernel(%arg0: i32, %arg1: i32, %arg2: memref<1x4x8x8xf32, #tpu.memory_space<vmem>>, %arg3: memref<1x4x8x8xf32, #tpu.memory_space<vmem>>, %arg4: memref<1x4x8x8xf32, #tpu.memory_space<vmem>>, %arg5: memref<1x8x32xf32, #tpu.memory_space<vmem>>, %arg6: memref<32x32xf32, #tpu.memory_space<vmem>>, %arg7: memref<1x32xf32, #tpu.memory_space<vmem>>, %arg8: memref<1x32xf32, #tpu.memory_space<vmem>>, %arg9: memref<1x32xf32, #tpu.memory_space<vmem>>, %arg10: memref<1x8x32xf32, #tpu.memory_space<vmem>>, %arg11: memref<8x32xf32, #tpu.memory_space<vmem>>) attributes {dimension_semantics = [#tpu.dimension_semantics<parallel>, #tpu.dimension_semantics<parallel>], iteration_bounds = array<i64: 2, 1>, scalar_prefetch = 0 : i64, scratch_operands = 1 : i64, tpu.core_type = #tpu.core_type<tc>, window_params = [{transform_indices = @transform_0, window_bounds = array<i64: 1, 4, 8, 8>}, {transform_indices = @transform_1, window_bounds = array<i64: 1, 4, 8, 8>}, {transform_indices = @transform_2, window_bounds = array<i64: 1, 4, 8, 8>}, {transform_indices = @transform_3, window_bounds = array<i64: 1, 8, 32>}, {pipeline_mode = #tpu.pipeline_mode<synchronous>, transform_indices = @transform_4, window_bounds = array<i64: 32, 32>}, {pipeline_mode = #tpu.pipeline_mode<synchronous>, transform_indices = @transform_5, window_bounds = array<i64: 1, 32>}, {pipeline_mode = #tpu.pipeline_mode<synchronous>, transform_indices = @transform_6, window_bounds = array<i64: 1, 32>}, {pipeline_mode = #tpu.pipeline_mode<synchronous>, transform_indices = @transform_7, window_bounds = array<i64: 1, 32>}, {transform_indices = @transform_8, window_bounds = array<i64: 1, 8, 32>}]} {
    %c0 = arith.constant 0 : index
    %c0_0 = arith.constant 0 : index
    %c0_1 = arith.constant 0 : index
    %c0_2 = arith.constant 0 : index
    %0 = vector.load %arg2[%c0, %c0_0, %c0_1, %c0_2] : memref<1x4x8x8xf32, #tpu.memory_space<vmem>>, vector<1x1x8x8xf32>
    %1 = vector.shape_cast %0 : vector<1x1x8x8xf32> to vector<8x8xf32>
    %c0_3 = arith.constant 0 : index
    %c0_4 = arith.constant 0 : index
    %c0_5 = arith.constant 0 : index
    %c0_6 = arith.constant 0 : index
    %2 = vector.load %arg3[%c0_3, %c0_4, %c0_5, %c0_6] : memref<1x4x8x8xf32, #tpu.memory_space<vmem>>, vector<1x1x8x8xf32>
    %3 = vector.shape_cast %2 : vector<1x1x8x8xf32> to vector<8x8xf32>
    %c0_7 = arith.constant 0 : index
    %c0_8 = arith.constant 0 : index
    %c0_9 = arith.constant 0 : index
    %c0_10 = arith.constant 0 : index
    %4 = vector.load %arg4[%c0_7, %c0_8, %c0_9, %c0_10] : memref<1x4x8x8xf32, #tpu.memory_space<vmem>>, vector<1x1x8x8xf32>
    %5 = vector.shape_cast %4 : vector<1x1x8x8xf32> to vector<8x8xf32>
    %cst = arith.constant dense<0.000000e+00> : vector<8x8xf32>
    %6 = tpu.matmul %1, %3, %cst {dimension_numbers = #tpu.dot_dimension_numbers<[1], [1], [0], [0], [0, 0, 1, 0], [], []>} : vector<8x8xf32>, vector<8x8xf32>, vector<8x8xf32> -> vector<8x8xf32>
    %cst_11 = arith.constant 0.353553385 : f32
    %7 = vector.broadcast %cst_11 : f32 to vector<8x8xf32>
    %8 = arith.mulf %6, %7 : vector<8x8xf32>
    %cst_12 = arith.constant dense<0xFF800000> : vector<8xf32>
    %9 = vector.multi_reduction <maximumf>, %8, %cst_12 [1] : vector<8x8xf32> to vector<8xf32>
    %10 = vector.shape_cast %9 : vector<8xf32> to vector<8x1xf32>
    %11 = vector.broadcast %10 : vector<8x1xf32> to vector<8x8xf32>
    %12 = arith.subf %8, %11 : vector<8x8xf32>
    %13 = math.exp %12 : vector<8x8xf32>
    %cst_13 = arith.constant dense<0.000000e+00> : vector<8xf32>
    %14 = vector.multi_reduction <add>, %13, %cst_13 [1] : vector<8x8xf32> to vector<8xf32>
    %15 = vector.shape_cast %14 : vector<8xf32> to vector<8x1xf32>
    %16 = vector.broadcast %15 : vector<8x1xf32> to vector<8x8xf32>
    %17 = arith.divf %13, %16 : vector<8x8xf32>
    %cst_14 = arith.constant dense<0.000000e+00> : vector<8x8xf32>
    %18 = tpu.matmul %17, %5, %cst_14 {dimension_numbers = #tpu.dot_dimension_numbers<[1], [0], [0], [1], [0, 0, 1, 1], [], []>} : vector<8x8xf32>, vector<8x8xf32>, vector<8x8xf32> -> vector<8x8xf32>
    %c0_15 = arith.constant 0 : index
    %c0_16 = arith.constant 0 : index
    %19 = vector.load %arg11[%c0_15, %c0_16] : memref<8x32xf32, #tpu.memory_space<vmem>>, vector<8x8xf32>
    tpu.vector_store %arg11[%c0_15, %c0_16], %18 {strides = array<i32>} : memref<8x32xf32, #tpu.memory_space<vmem>>, vector<8x8xf32>,
    %c0_17 = arith.constant 0 : index
    %c1 = arith.constant 1 : index
    %c0_18 = arith.constant 0 : index
    %c0_19 = arith.constant 0 : index
    %20 = vector.load %arg2[%c0_17, %c1, %c0_18, %c0_19] : memref<1x4x8x8xf32, #tpu.memory_space<vmem>>, vector<1x1x8x8xf32>
    %21 = vector.shape_cast %20 : vector<1x1x8x8xf32> to vector<8x8xf32>
    %c0_20 = arith.constant 0 : index
    %c1_21 = arith.constant 1 : index
    %c0_22 = arith.constant 0 : index
    %c0_23 = arith.constant 0 : index
    %22 = vector.load %arg3[%c0_20, %c1_21, %c0_22, %c0_23] : memref<1x4x8x8xf32, #tpu.memory_space<vmem>>, vector<1x1x8x8xf32>
    %23 = vector.shape_cast %22 : vector<1x1x8x8xf32> to vector<8x8xf32>
    %c0_24 = arith.constant 0 : index
    %c1_25 = arith.constant 1 : index
    %c0_26 = arith.constant 0 : index
    %c0_27 = arith.constant 0 : index
    %24 = vector.load %arg4[%c0_24, %c1_25, %c0_26, %c0_27] : memref<1x4x8x8xf32, #tpu.memory_space<vmem>>, vector<1x1x8x8xf32>
    %25 = vector.shape_cast %24 : vector<1x1x8x8xf32> to vector<8x8xf32>
    %cst_28 = arith.constant dense<0.000000e+00> : vector<8x8xf32>
    %26 = tpu.matmul %21, %23, %cst_28 {dimension_numbers = #tpu.dot_dimension_numbers<[1], [1], [0], [0], [0, 0, 1, 0], [], []>} : vector<8x8xf32>, vector<8x8xf32>, vector<8x8xf32> -> vector<8x8xf32>
    %cst_29 = arith.constant 0.353553385 : f32
    %27 = vector.broadcast %cst_29 : f32 to vector<8x8xf32>
    %28 = arith.mulf %26, %27 : vector<8x8xf32>
    %cst_30 = arith.constant dense<0xFF800000> : vector<8xf32>
    %29 = vector.multi_reduction <maximumf>, %28, %cst_30 [1] : vector<8x8xf32> to vector<8xf32>
    %30 = vector.shape_cast %29 : vector<8xf32> to vector<8x1xf32>
    %31 = vector.broadcast %30 : vector<8x1xf32> to vector<8x8xf32>
    %32 = arith.subf %28, %31 : vector<8x8xf32>
    %33 = math.exp %32 : vector<8x8xf32>
    %cst_31 = arith.constant dense<0.000000e+00> : vector<8xf32>
    %34 = vector.multi_reduction <add>, %33, %cst_31 [1] : vector<8x8xf32> to vector<8xf32>
    %35 = vector.shape_cast %34 : vector<8xf32> to vector<8x1xf32>
    %36 = vector.broadcast %35 : vector<8x1xf32> to vector<8x8xf32>
    %37 = arith.divf %33, %36 : vector<8x8xf32>
    %cst_32 = arith.constant dense<0.000000e+00> : vector<8x8xf32>
    %38 = tpu.matmul %37, %25, %cst_32 {dimension_numbers = #tpu.dot_dimension_numbers<[1], [0], [0], [1], [0, 0, 1, 1], [], []>} : vector<8x8xf32>, vector<8x8xf32>, vector<8x8xf32> -> vector<8x8xf32>
    %c0_33 = arith.constant 0 : index
    %c8 = arith.constant 8 : index
    %39 = vector.load %arg11[%c0_33, %c8] : memref<8x32xf32, #tpu.memory_space<vmem>>, vector<8x8xf32>
    tpu.vector_store %arg11[%c0_33, %c8], %38 {strides = array<i32>} : memref<8x32xf32, #tpu.memory_space<vmem>>, vector<8x8xf32>,
    %c0_34 = arith.constant 0 : index
    %c2 = arith.constant 2 : index
    %c0_35 = arith.constant 0 : index
    %c0_36 = arith.constant 0 : index
    %40 = vector.load %arg2[%c0_34, %c2, %c0_35, %c0_36] : memref<1x4x8x8xf32, #tpu.memory_space<vmem>>, vector<1x1x8x8xf32>
    %41 = vector.shape_cast %40 : vector<1x1x8x8xf32> to vector<8x8xf32>
    %c0_37 = arith.constant 0 : index
    %c2_38 = arith.constant 2 : index
    %c0_39 = arith.constant 0 : index
    %c0_40 = arith.constant 0 : index
    %42 = vector.load %arg3[%c0_37, %c2_38, %c0_39, %c0_40] : memref<1x4x8x8xf32, #tpu.memory_space<vmem>>, vector<1x1x8x8xf32>
    %43 = vector.shape_cast %42 : vector<1x1x8x8xf32> to vector<8x8xf32>
    %c0_41 = arith.constant 0 : index
    %c2_42 = arith.constant 2 : index
    %c0_43 = arith.constant 0 : index
    %c0_44 = arith.constant 0 : index
    %44 = vector.load %arg4[%c0_41, %c2_42, %c0_43, %c0_44] : memref<1x4x8x8xf32, #tpu.memory_space<vmem>>, vector<1x1x8x8xf32>
    %45 = vector.shape_cast %44 : vector<1x1x8x8xf32> to vector<8x8xf32>
    %cst_45 = arith.constant dense<0.000000e+00> : vector<8x8xf32>
    %46 = tpu.matmul %41, %43, %cst_45 {dimension_numbers = #tpu.dot_dimension_numbers<[1], [1], [0], [0], [0, 0, 1, 0], [], []>} : vector<8x8xf32>, vector<8x8xf32>, vector<8x8xf32> -> vector<8x8xf32>
    %cst_46 = arith.constant 0.353553385 : f32
    %47 = vector.broadcast %cst_46 : f32 to vector<8x8xf32>
    %48 = arith.mulf %46, %47 : vector<8x8xf32>
    %cst_47 = arith.constant dense<0xFF800000> : vector<8xf32>
    %49 = vector.multi_reduction <maximumf>, %48, %cst_47 [1] : vector<8x8xf32> to vector<8xf32>
    %50 = vector.shape_cast %49 : vector<8xf32> to vector<8x1xf32>
    %51 = vector.broadcast %50 : vector<8x1xf32> to vector<8x8xf32>
    %52 = arith.subf %48, %51 : vector<8x8xf32>
    %53 = math.exp %52 : vector<8x8xf32>
    %cst_48 = arith.constant dense<0.000000e+00> : vector<8xf32>
    %54 = vector.multi_reduction <add>, %53, %cst_48 [1] : vector<8x8xf32> to vector<8xf32>
    %55 = vector.shape_cast %54 : vector<8xf32> to vector<8x1xf32>
    %56 = vector.broadcast %55 : vector<8x1xf32> to vector<8x8xf32>
    %57 = arith.divf %53, %56 : vector<8x8xf32>
    %cst_49 = arith.constant dense<0.000000e+00> : vector<8x8xf32>
    %58 = tpu.matmul %57, %45, %cst_49 {dimension_numbers = #tpu.dot_dimension_numbers<[1], [0], [0], [1], [0, 0, 1, 1], [], []>} : vector<8x8xf32>, vector<8x8xf32>, vector<8x8xf32> -> vector<8x8xf32>
    %c0_50 = arith.constant 0 : index
    %c16 = arith.constant 16 : index
    %59 = vector.load %arg11[%c0_50, %c16] : memref<8x32xf32, #tpu.memory_space<vmem>>, vector<8x8xf32>
    tpu.vector_store %arg11[%c0_50, %c16], %58 {strides = array<i32>} : memref<8x32xf32, #tpu.memory_space<vmem>>, vector<8x8xf32>,
    %c0_51 = arith.constant 0 : index
    %c3 = arith.constant 3 : index
    %c0_52 = arith.constant 0 : index
    %c0_53 = arith.constant 0 : index
    %60 = vector.load %arg2[%c0_51, %c3, %c0_52, %c0_53] : memref<1x4x8x8xf32, #tpu.memory_space<vmem>>, vector<1x1x8x8xf32>
    %61 = vector.shape_cast %60 : vector<1x1x8x8xf32> to vector<8x8xf32>
    %c0_54 = arith.constant 0 : index
    %c3_55 = arith.constant 3 : index
    %c0_56 = arith.constant 0 : index
    %c0_57 = arith.constant 0 : index
    %62 = vector.load %arg3[%c0_54, %c3_55, %c0_56, %c0_57] : memref<1x4x8x8xf32, #tpu.memory_space<vmem>>, vector<1x1x8x8xf32>
    %63 = vector.shape_cast %62 : vector<1x1x8x8xf32> to vector<8x8xf32>
    %c0_58 = arith.constant 0 : index
    %c3_59 = arith.constant 3 : index
    %c0_60 = arith.constant 0 : index
    %c0_61 = arith.constant 0 : index
    %64 = vector.load %arg4[%c0_58, %c3_59, %c0_60, %c0_61] : memref<1x4x8x8xf32, #tpu.memory_space<vmem>>, vector<1x1x8x8xf32>
    %65 = vector.shape_cast %64 : vector<1x1x8x8xf32> to vector<8x8xf32>
    %cst_62 = arith.constant dense<0.000000e+00> : vector<8x8xf32>
    %66 = tpu.matmul %61, %63, %cst_62 {dimension_numbers = #tpu.dot_dimension_numbers<[1], [1], [0], [0], [0, 0, 1, 0], [], []>} : vector<8x8xf32>, vector<8x8xf32>, vector<8x8xf32> -> vector<8x8xf32>
    %cst_63 = arith.constant 0.353553385 : f32
    %67 = vector.broadcast %cst_63 : f32 to vector<8x8xf32>
    %68 = arith.mulf %66, %67 : vector<8x8xf32>
    %cst_64 = arith.constant dense<0xFF800000> : vector<8xf32>
    %69 = vector.multi_reduction <maximumf>, %68, %cst_64 [1] : vector<8x8xf32> to vector<8xf32>
    %70 = vector.shape_cast %69 : vector<8xf32> to vector<8x1xf32>
    %71 = vector.broadcast %70 : vector<8x1xf32> to vector<8x8xf32>
    %72 = arith.subf %68, %71 : vector<8x8xf32>
    %73 = math.exp %72 : vector<8x8xf32>
    %cst_65 = arith.constant dense<0.000000e+00> : vector<8xf32>
    %74 = vector.multi_reduction <add>, %73, %cst_65 [1] : vector<8x8xf32> to vector<8xf32>
    %75 = vector.shape_cast %74 : vector<8xf32> to vector<8x1xf32>
    %76 = vector.broadcast %75 : vector<8x1xf32> to vector<8x8xf32>
    %77 = arith.divf %73, %76 : vector<8x8xf32>
    %cst_66 = arith.constant dense<0.000000e+00> : vector<8x8xf32>
    %78 = tpu.matmul %77, %65, %cst_66 {dimension_numbers = #tpu.dot_dimension_numbers<[1], [0], [0], [1], [0, 0, 1, 1], [], []>} : vector<8x8xf32>, vector<8x8xf32>, vector<8x8xf32> -> vector<8x8xf32>
    %c0_67 = arith.constant 0 : index
    %c24 = arith.constant 24 : index
    %79 = vector.load %arg11[%c0_67, %c24] : memref<8x32xf32, #tpu.memory_space<vmem>>, vector<8x8xf32>
    tpu.vector_store %arg11[%c0_67, %c24], %78 {strides = array<i32>} : memref<8x32xf32, #tpu.memory_space<vmem>>, vector<8x8xf32>,
    %c0_68 = arith.constant 0 : index
    %c0_69 = arith.constant 0 : index
    %80 = vector.load %arg11[%c0_68, %c0_69] : memref<8x32xf32, #tpu.memory_space<vmem>>, vector<8x32xf32>
    %c0_70 = arith.constant 0 : index
    %c0_71 = arith.constant 0 : index
    %81 = vector.load %arg6[%c0_70, %c0_71] : memref<32x32xf32, #tpu.memory_space<vmem>>, vector<32x32xf32>
    %cst_72 = arith.constant dense<0.000000e+00> : vector<8x32xf32>
    %82 = tpu.matmul %80, %81, %cst_72 {dimension_numbers = #tpu.dot_dimension_numbers<[1], [0], [0], [1], [0, 0, 1, 1], [], []>} : vector<8x32xf32>, vector<32x32xf32>, vector<8x32xf32> -> vector<8x32xf32>
    %c0_73 = arith.constant 0 : index
    %c0_74 = arith.constant 0 : index
    %83 = vector.load %arg7[%c0_73, %c0_74] : memref<1x32xf32, #tpu.memory_space<vmem>>, vector<1x32xf32>
    %84 = vector.broadcast %83 : vector<1x32xf32> to vector<8x32xf32>
    %85 = arith.addf %82, %84 : vector<8x32xf32>
    %c0_75 = arith.constant 0 : index
    %c0_76 = arith.constant 0 : index
    %c0_77 = arith.constant 0 : index
    %86 = vector.load %arg5[%c0_75, %c0_76, %c0_77] : memref<1x8x32xf32, #tpu.memory_space<vmem>>, vector<1x8x32xf32>
    %87 = vector.shape_cast %86 : vector<1x8x32xf32> to vector<8x32xf32>
    %88 = arith.addf %85, %87 : vector<8x32xf32>
    %cst_78 = arith.constant dense<0.000000e+00> : vector<8xf32>
    %89 = vector.multi_reduction <add>, %88, %cst_78 [1] : vector<8x32xf32> to vector<8xf32>
    %90 = vector.shape_cast %89 : vector<8xf32> to vector<8x1xf32>
    %cst_79 = arith.constant 3.200000e+01 : f32
    %91 = vector.broadcast %cst_79 : f32 to vector<8x1xf32>
    %92 = arith.divf %90, %91 : vector<8x1xf32>
    %93 = vector.broadcast %92 : vector<8x1xf32> to vector<8x32xf32>
    %94 = arith.subf %88, %93 : vector<8x32xf32>
    %95 = arith.mulf %94, %94 : vector<8x32xf32>
    %cst_80 = arith.constant dense<0.000000e+00> : vector<8xf32>
    %96 = vector.multi_reduction <add>, %95, %cst_80 [1] : vector<8x32xf32> to vector<8xf32>
    %97 = vector.shape_cast %96 : vector<8xf32> to vector<8x1xf32>
    %cst_81 = arith.constant 3.200000e+01 : f32
    %98 = vector.broadcast %cst_81 : f32 to vector<8x1xf32>
    %99 = arith.divf %97, %98 : vector<8x1xf32>
    %cst_82 = arith.constant 9.99999974E-6 : f32
    %100 = vector.broadcast %cst_82 : f32 to vector<8x1xf32>
    %101 = arith.addf %99, %100 : vector<8x1xf32>
    %102 = math.rsqrt %101 : vector<8x1xf32>
    %103 = vector.broadcast %102 : vector<8x1xf32> to vector<8x32xf32>
    %104 = arith.mulf %94, %103 : vector<8x32xf32>
    %c0_83 = arith.constant 0 : index
    %c0_84 = arith.constant 0 : index
    %105 = vector.load %arg8[%c0_83, %c0_84] : memref<1x32xf32, #tpu.memory_space<vmem>>, vector<1x32xf32>
    %106 = vector.broadcast %105 : vector<1x32xf32> to vector<8x32xf32>
    %107 = arith.mulf %104, %106 : vector<8x32xf32>
    %c0_85 = arith.constant 0 : index
    %c0_86 = arith.constant 0 : index
    %108 = vector.load %arg9[%c0_85, %c0_86] : memref<1x32xf32, #tpu.memory_space<vmem>>, vector<1x32xf32>
    %109 = vector.broadcast %108 : vector<1x32xf32> to vector<8x32xf32>
    %110 = arith.addf %107, %109 : vector<8x32xf32>
    %c0_87 = arith.constant 0 : index
    %c0_88 = arith.constant 0 : index
    %c0_89 = arith.constant 0 : index
    %111 = vector.load %arg10[%c0_87, %c0_88, %c0_89] : memref<1x8x32xf32, #tpu.memory_space<vmem>>, vector<1x8x32xf32>
    %112 = vector.shape_cast %111 : vector<1x8x32xf32> to vector<8x32xf32>
    %113 = vector.shape_cast %110 : vector<8x32xf32> to vector<1x8x32xf32>
    tpu.vector_store %arg10[%c0_87, %c0_88, %c0_89], %113 {strides = array<i32>} : memref<1x8x32xf32, #tpu.memory_space<vmem>>, vector<1x8x32xf32>,
    return
  }
  func.func @transform_0(%arg0: i32, %arg1: i32) -> (i32, i32, i32, i32) {
    %c0_i32 = arith.constant 0 : i32
    %c0_i32_0 = arith.constant 0 : i32
    %c0_i32_1 = arith.constant 0 : i32
    return %arg0, %c0_i32, %arg1, %c0_i32_0 : i32, i32, i32, i32
  }
  func.func @transform_1(%arg0: i32, %arg1: i32) -> (i32, i32, i32, i32) {
    %c0_i32 = arith.constant 0 : i32
    %c0_i32_0 = arith.constant 0 : i32
    %c0_i32_1 = arith.constant 0 : i32
    %c0_i32_2 = arith.constant 0 : i32
    return %arg0, %c0_i32, %c0_i32_0, %c0_i32_1 : i32, i32, i32, i32
  }
  func.func @transform_2(%arg0: i32, %arg1: i32) -> (i32, i32, i32, i32) {
    %c0_i32 = arith.constant 0 : i32
    %c0_i32_0 = arith.constant 0 : i32
    %c0_i32_1 = arith.constant 0 : i32
    %c0_i32_2 = arith.constant 0 : i32
    return %arg0, %c0_i32, %c0_i32_0, %c0_i32_1 : i32, i32, i32, i32
  }
  func.func @transform_3(%arg0: i32, %arg1: i32) -> (i32, i32, i32) {
    %c0_i32 = arith.constant 0 : i32
    %c0_i32_0 = arith.constant 0 : i32
    return %arg0, %arg1, %c0_i32 : i32, i32, i32
  }
  func.func @transform_4(%arg0: i32, %arg1: i32) -> (i32, i32) {
    %c0_i32 = arith.constant 0 : i32
    %c0_i32_0 = arith.constant 0 : i32
    %c0_i32_1 = arith.constant 0 : i32
    return %c0_i32, %c0_i32_0 : i32, i32
  }
  func.func @transform_5(%arg0: i32, %arg1: i32) -> (i32, i32) {
    %c0_i32 = arith.constant 0 : i32
    %c0_i32_0 = arith.constant 0 : i32
    %c0_i32_1 = arith.constant 0 : i32
    return %c0_i32, %c0_i32_0 : i32, i32
  }
  func.func @transform_6(%arg0: i32, %arg1: i32) -> (i32, i32) {
    %c0_i32 = arith.constant 0 : i32
    %c0_i32_0 = arith.constant 0 : i32
    %c0_i32_1 = arith.constant 0 : i32
    return %c0_i32, %c0_i32_0 : i32, i32
  }
  func.func @transform_7(%arg0: i32, %arg1: i32) -> (i32, i32) {
    %c0_i32 = arith.constant 0 : i32
    %c0_i32_0 = arith.constant 0 : i32
    %c0_i32_1 = arith.constant 0 : i32
    return %c0_i32, %c0_i32_0 : i32, i32
  }
  func.func @transform_8(%arg0: i32, %arg1: i32) -> (i32, i32, i32) {
    %c0_i32 = arith.constant 0 : i32
    %c0_i32_0 = arith.constant 0 : i32
    return %arg0, %arg1, %c0_i32 : i32, i32, i32
  }
}

</mosaic_0001>

<llo_original>
// kernel: tpu_custom_call.1
$region0: #{tpu_custom_call.1}
  #allocation0 [shape = 'u32[]', space=smem, size = 0x4, offset = 0x4, fixed_abs, tag = 'smem constant byte address 0x4 - core index']
  #allocation1 [shape = 'u32[144,128]{1,0:T(1,128)}', space=vmem, size = 0x12000, scoped, tag = 'internal scratch']
  %s0 = inlined_call_operand.hbm [shape: f32[8,128], index: 0, kind: input, shape index: {}]
  %s1 = inlined_call_operand.hbm [shape: f32[8,128], index: 1, kind: output, shape index: {}]
  %s2 = sld [smem:[#allocation0]]
  $region18: #{tpu_custom_call.1} parent=0
    _
  %s4 = ssub.s32 1, %s2
  %s5 = scalar_select 0, %s4, %s2
  $region1: #{tpu_custom_call.1} parent=0
    #allocation2 [shape = 'u8[4096]{0}', space=vmem, size = 0x1000, scoped, tag = 'input window, operand 0, single buffered']
    #allocation3 [shape = 's32[1]{0}', space=sflag, size = 0x4, scoped, tag = 'scoped memory for tpu_custom_call.1']
    #allocation4 [shape = 's32[1]{0}', space=sflag, size = 0x4, scoped, tag = 'scoped memory for tpu_custom_call.1']
    #allocation5 [shape = 'u8[4096]{0}', space=vmem, size = 0x1000, scoped, tag = 'output window, operand 0, single buffered']
    %6 = vsyncpa [#allocation3], 0
    %7 = vsyncpa [#allocation4], 0
    // Predicated region
    $region2: #{tpu_custom_call.1} parent=1 // pred_check
      _
    $region3: #{tpu_custom_call.1} parent=1 // pred_check_branch
      %9 = sbr.rel (0) target = $region5
    $region4: #{tpu_custom_call.1} parent=1 // pred_region
      %s11 = ssub.s32 128, 128
      %12 = vsyncadd [#allocation3], %s11
      %s14 = sshll.u32 [#allocation2], 4
      %s15 = int_to_ptr.vmem [resolvable:$true] %s14
      %17 = dma.hbm_to_vmem [thread:$0]  %s0, 128, %s15, [#allocation3]
    $region5: #{tpu_custom_call.1} parent=1 // pred_fallthru
      _
    // Predicated region
    $region6: #{tpu_custom_call.1} parent=1 // pred_check
      _
    $region7: #{tpu_custom_call.1} parent=1 // pred_check_branch
      %19 = sbr.rel (0) target = $region9
    $region8: #{tpu_custom_call.1} parent=1 // pred_region
      %20 = dma.done [#allocation3], 128
    $region9: #{tpu_custom_call.1} parent=1 // pred_fallthru
      _
    %v21 = vld [vmem:[#allocation2] sm:$0xff]
    %v22 = verf.f32.pop %v21
    %23 = vst [vmem:[#allocation5] sm:$0xff] %v22
    // Predicated region
    $region10: #{tpu_custom_call.1} parent=1 // pred_check
      _
    $region11: #{tpu_custom_call.1} parent=1 // pred_check_branch
      %25 = sbr.rel (0) target = $region13
    $region12: #{tpu_custom_call.1} parent=1 // pred_region
      %s27 = ssub.s32 128, 128
      %28 = vsyncadd [#allocation4], %s27
      %s30 = sshll.u32 [#allocation5], 4
      %s31 = int_to_ptr.vmem [resolvable:$true] %s30
      %33 = dma.vmem_to_hbm [thread:$0]  %s31, 128, %s1, [#allocation4]
    $region13: #{tpu_custom_call.1} parent=1 // pred_fallthru
      _
    // Predicated region
    $region14: #{tpu_custom_call.1} parent=1 // pred_check
      _
    $region15: #{tpu_custom_call.1} parent=1 // pred_check_branch
      %35 = sbr.rel (0) target = $region17
    $region16: #{tpu_custom_call.1} parent=1 // pred_region
      %36 = dma.done [#allocation4], 128
    $region17: #{tpu_custom_call.1} parent=1 // pred_fallthru
      _
    %37 = vsyncpa [#allocation3], 1
    %38 = vsyncpa [#allocation4], 1

// kernel: transformer_forward.38
$region0: #{transformer_forward.38}
  #allocation0 [shape = 'u32[]', space=smem, size = 0x4, offset = 0x4, fixed_abs, tag = 'smem constant byte address 0x4 - core index']
  #allocation1 [shape = 'u32[144,128]{1,0:T(1,128)}', space=vmem, size = 0x12000, scoped, tag = 'internal scratch']
  #allocation2 [shape = 'f32[16,96]{1,0:T(8,128)}', space=vmem, size = 0x2000, scoped, tag = 'scratch operand']
  %s0 = inlined_call_operand.vmem [shape: f32[16,32], index: 0, kind: input, shape index: {}]
  %s1 = inlined_call_operand.vmem [shape: f32[32,96], index: 1, kind: input, shape index: {}]
  %s2 = inlined_call_operand.vmem [shape: f32[1,96], index: 2, kind: input, shape index: {}]
  %s3 = inlined_call_operand.vmem [shape: f32[16,96], index: 3, kind: output, shape index: {}]
  %s4 = sld [smem:[#allocation0]]
  $region30: #{transformer_forward.38} parent=0
    _
  %s6 = ssub.s32 1, %s4
  %s7 = scalar_select 0, %s6, %s4
  // Predicated region
  $region2: #{transformer_forward.38} parent=0 // pred_check
    _
  $region3: #{transformer_forward.38} parent=0 // pred_check_branch
    %9 = sbr.rel (0) target = $region5
  $region4: #{transformer_forward.38} parent=0 // pred_region
    _
  $region5: #{transformer_forward.38} parent=0 // pred_fallthru
    _
  // Predicated region
  $region6: #{transformer_forward.38} parent=0 // pred_check
    _
  $region7: #{transformer_forward.38} parent=0 // pred_check_branch
    %11 = sbr.rel (0) target = $region9
  $region8: #{transformer_forward.38} parent=0 // pred_region
    _
  $region9: #{transformer_forward.38} parent=0 // pred_fallthru
    _
  // Predicated region
  $region10: #{transformer_forward.38} parent=0 // pred_check
    _
  $region11: #{transformer_forward.38} parent=0 // pred_check_branch
    %13 = sbr.rel (0) target = $region13
  $region12: #{transformer_forward.38} parent=0 // pred_region
    _
  $region13: #{transformer_forward.38} parent=0 // pred_fallthru
    _
  %p14 = scmp.eq.s32.totalorder 0, 0
  // Predicated region
  $region14: #{transformer_forward.38} parent=0 // pred_check
    %p15 = pneg %p14
  $region15: #{transformer_forward.38} parent=0 // pred_check_branch
    %17 = sbr.rel (%p15) target = $region17
  $region16: #{transformer_forward.38} parent=0 // pred_region
    %vm18 = vcmask 785408
    %19 = vst.msk [vmem:[#allocation2] sm:$0xff] %vm18, 0.0
    %20 = vst.msk [vmem:[#allocation2 + $0x8] sm:$0xff] %vm18, 0.0
  $region17: #{transformer_forward.38} parent=0 // pred_fallthru
    _
  %v21 = vld [vmem:[#allocation2] sm:$0xff]
  %v22 = vld [vmem:[#allocation2 + $0x8] sm:$0xff]
  %v23 = vld [vmem:[%s0] sm:$0xff]
  %v24 = vld [vmem:[%s0 + $0x8] sm:$0xff]
  %v25 = vld [vmem:[%s1] sm:$0xff]
  %v26 = vld [vmem:[%s1 + $0x8] sm:$0xff]
  %v27 = vld [vmem:[%s1 + $0x10] sm:$0xff]
  %v28 = vld [vmem:[%s1 + $0x18] sm:$0xff]
  %vm29 = vcmask 261120
  %v31 = vsel %vm29, %v23, 0
  %v34 = vsel %vm29, %v24, 0
  %36 = vmatprep.subr.mxu0 0.0
  %37 = vmatpush1.msra.mxu0 0.0
  %38 = vmatprep.subr.mxu0 0.0
  %39 = vmatpush1.msra.mxu0 0.0
  %40 = vmatprep.subr.mxu0 0.0
  %41 = vmatpush1.msra.mxu0 0.0
  %42 = vmatprep.subr.mxu0 0.0
  %43 = vmatpush1.msra.mxu0 0.0
  %44 = vmatprep.subr.mxu0 0.0
  %45 = vmatpush1.msra.mxu0 0.0
  %46 = vmatprep.subr.mxu0 0.0
  %47 = vmatpush1.msra.mxu0 0.0
  %48 = vmatprep.subr.mxu0 0.0
  %49 = vmatpush1.msra.mxu0 0.0
  %50 = vmatprep.subr.mxu0 0.0
  %51 = vmatpush1.msra.mxu0 0.0
  %52 = vmatprep.subr.mxu0 0.0
  %53 = vmatpush1.msra.mxu0 0.0
  %54 = vmatprep.subr.mxu0 0.0
  %55 = vmatpush1.msra.mxu0 0.0
  %56 = vmatprep.subr.mxu0 0.0
  %57 = vmatpush1.msra.mxu0 0.0
  %58 = vmatprep.subr.mxu0 0.0
  %59 = vmatpush1.msra.mxu0 0.0
  %60 = vmatprep.subr.mxu0 0.0
  %61 = vmatpush1.msra.mxu0 %v28
  %62 = vmatprep.subr.mxu0 0.0
  %63 = vmatpush1.msra.mxu0 %v27
  %64 = vmatprep.subr.mxu0 0.0
  %65 = vmatpush1.msra.mxu0 %v26
  %66 = vmatprep.subr.mxu0 0.0
  %67 = vmatpush1.msra.mxu0 %v25
  %68 = vmatprep.subr.mxu0 0.0
  %69 = vmatpush2.msra.mxu0 0.0
  %70 = vmatprep.subr.mxu0 0.0
  %71 = vmatpush2.msra.mxu0 0.0
  %72 = vmatprep.subr.mxu0 0.0
  %73 = vmatpush2.msra.mxu0 0.0
  %74 = vmatprep.subr.mxu0 0.0
  %75 = vmatpush2.msra.mxu0 0.0
  %76 = vmatprep.subr.mxu0 0.0
  %77 = vmatpush2.msra.mxu0 0.0
  %78 = vmatprep.subr.mxu0 0.0
  %79 = vmatpush2.msra.mxu0 0.0
  %80 = vmatprep.subr.mxu0 0.0
  %81 = vmatpush2.msra.mxu0 0.0
  %82 = vmatprep.subr.mxu0 0.0
  %83 = vmatpush2.msra.mxu0 0.0
  %84 = vmatprep.subr.mxu0 0.0
  %85 = vmatpush2.msra.mxu0 0.0
  %86 = vmatprep.subr.mxu0 0.0
  %87 = vmatpush2.msra.mxu0 0.0
  %88 = vmatprep.subr.mxu0 0.0
  %89 = vmatpush2.msra.mxu0 0.0
  %90 = vmatprep.subr.mxu0 0.0
  %91 = vmatpush2.msra.mxu0 0.0
  %92 = vmatprep.subr.mxu0 0.0
  %93 = vmatpush2.msra.mxu0 0.0
  %94 = vmatprep.subr.mxu0 0.0
  %95 = vmatpush2.msra.mxu0 0.0
  %96 = vmatprep.subr.mxu0 0.0
  %97 = vmatpush2.msra.mxu0 0.0
  %98 = vmatprep.subr.mxu0 0.0
  %99 = vmatpush2.msra.mxu0 0.0
  %100 = vmatprep.mubr.f32.mxu0 0.0
  %101 = vmatmul.mubr.f32.gmra.mxu0 %v31
  %v102 = vpop.f32.mrf.mxu0
  %v103 = vadd.f32 0.0, %v102
  %v104 = vpop.f32.mrf.mxu0
  %105 = vmatprep.mubr.f32.mxu0 0.0
  %106 = vmatmul.mubr.f32.gmra.mxu0 %v34
  %v107 = vpop.f32.mrf.mxu0
  %v108 = vadd.f32 0.0, %v107
  %v109 = vpop.f32.mrf.mxu0
  %110 = vdwg.mxu0
  %v111 = vadd.f32 %v21, %v103
  %v112 = vadd.f32 %v22, %v108
  %vm113 = vcmask 785408
  %114 = vst.msk [vmem:[#allocation2] sm:$0xff] %vm113, %v111
  %115 = vst.msk [vmem:[#allocation2 + $0x8] sm:$0xff] %vm113, %v112
  // Predicated region
  $region18: #{transformer_forward.38} parent=0 // pred_check
    %p116 = pneg %p14
  $region19: #{transformer_forward.38} parent=0 // pred_check_branch
    %118 = sbr.rel (%p116) target = $region21
  $region20: #{transformer_forward.38} parent=0 // pred_region
    %v119 = vld [vmem:[#allocation2] sm:$0xff]
    %v120 = vld [vmem:[#allocation2 + $0x8] sm:$0xff]
    %v121 = vld [vmem:[%s2] sm:$0x1]
    %v123 = vlaneseq
    %v124 = vshrl.u32 %v123, 7
    %v125 = vsub.s32 0, %v124
    %v126 = vrot.slane %v121, %v125
    %v128 = vadd.f32 %v119, %v126
    %v129 = vadd.f32 %v120, %v126
    %130 = vst.msk [vmem:[%s3] sm:$0xff] %vm113, %v128
    %131 = vst.msk [vmem:[%s3 + $0x8] sm:$0xff] %vm113, %v129
  $region21: #{transformer_forward.38} parent=0 // pred_fallthru
    _
  // Predicated region
  $region22: #{transformer_forward.38} parent=0 // pred_check
    _
  $region23: #{transformer_forward.38} parent=0 // pred_check_branch
    %133 = sbr.rel (0) target = $region25
  $region24: #{transformer_forward.38} parent=0 // pred_region
    _
  $region25: #{transformer_forward.38} parent=0 // pred_fallthru
    _
  // Predicated region
  $region26: #{transformer_forward.38} parent=0 // pred_check
    _
  $region27: #{transformer_forward.38} parent=0 // pred_check_branch
    %135 = sbr.rel (0) target = $region29
  $region28: #{transformer_forward.38} parent=0 // pred_region
    _
  $region29: #{transformer_forward.38} parent=0 // pred_fallthru
    _

// kernel: transformer_forward.27
$region0: #{transformer_forward.27}
  #allocation0 [shape = 'u32[]', space=smem, size = 0x4, offset = 0x4, fixed_abs, tag = 'smem constant byte address 0x4 - core index']
  #allocation1 [shape = 'u32[144,128]{1,0:T(1,128)}', space=vmem, size = 0x12000, scoped, tag = 'internal scratch']
  #allocation2 [shape = 'f32[16,32]{1,0:T(8,128)}', space=vmem, size = 0x2000, scoped, tag = 'scratch operand']
  %s0 = inlined_call_operand.vmem [shape: f32[16,4], index: 0, kind: input, shape index: {}]
  %s1 = inlined_call_operand.vmem [shape: f32[4,32], index: 1, kind: input, shape index: {}]
  %s2 = inlined_call_operand.vmem [shape: f32[1,32], index: 2, kind: input, shape index: {}]
  %s3 = inlined_call_operand.vmem [shape: f32[16,32], index: 3, kind: output, shape index: {}]
  %s4 = sld [smem:[#allocation0]]
  $region30: #{transformer_forward.27} parent=0
    _
  %s6 = ssub.s32 1, %s4
  %s7 = scalar_select 0, %s6, %s4
  // Predicated region
  $region2: #{transformer_forward.27} parent=0 // pred_check
    _
  $region3: #{transformer_forward.27} parent=0 // pred_check_branch
    %9 = sbr.rel (0) target = $region5
  $region4: #{transformer_forward.27} parent=0 // pred_region
    _
  $region5: #{transformer_forward.27} parent=0 // pred_fallthru
    _
  // Predicated region
  $region6: #{transformer_forward.27} parent=0 // pred_check
    _
  $region7: #{transformer_forward.27} parent=0 // pred_check_branch
    %11 = sbr.rel (0) target = $region9
  $region8: #{transformer_forward.27} parent=0 // pred_region
    _
  $region9: #{transformer_forward.27} parent=0 // pred_fallthru
    _
  // Predicated region
  $region10: #{transformer_forward.27} parent=0 // pred_check
    _
  $region11: #{transformer_forward.27} parent=0 // pred_check_branch
    %13 = sbr.rel (0) target = $region13
  $region12: #{transformer_forward.27} parent=0 // pred_region
    _
  $region13: #{transformer_forward.27} parent=0 // pred_fallthru
    _
  %p14 = scmp.eq.s32.totalorder 0, 0
  // Predicated region
  $region14: #{transformer_forward.27} parent=0 // pred_check
    %p15 = pneg %p14
  $region15: #{transformer_forward.27} parent=0 // pred_check_branch
    %17 = sbr.rel (%p15) target = $region17
  $region16: #{transformer_forward.27} parent=0 // pred_region
    %vm18 = vcmask 261120
    %19 = vst.msk [vmem:[#allocation2] sm:$0xff] %vm18, 0.0
    %20 = vst.msk [vmem:[#allocation2 + $0x8] sm:$0xff] %vm18, 0.0
  $region17: #{transformer_forward.27} parent=0 // pred_fallthru
    _
  %v21 = vld [vmem:[#allocation2] sm:$0xff]
  %v22 = vld [vmem:[#allocation2 + $0x8] sm:$0xff]
  %v23 = vld [vmem:[%s0] sm:$0xff]
  %v24 = vld [vmem:[%s0 + $0x8] sm:$0xff]
  %v25 = vld [vmem:[%s1] sm:$0xf]
  %vm26 = vcmask 31744
  %v28 = vsel %vm26, %v23, 0
  %v31 = vsel %vm26, %v24, 0
  %vm33 = vcmask 1043456
  %v35 = vsel %vm33, %v25, 0
  %37 = vmatprep.subr.mxu0 0.0
  %38 = vmatpush1.msra.mxu0 0.0
  %39 = vmatprep.subr.mxu0 0.0
  %40 = vmatpush1.msra.mxu0 0.0
  %41 = vmatprep.subr.mxu0 0.0
  %42 = vmatpush1.msra.mxu0 0.0
  %43 = vmatprep.subr.mxu0 0.0
  %44 = vmatpush1.msra.mxu0 0.0
  %45 = vmatprep.subr.mxu0 0.0
  %46 = vmatpush1.msra.mxu0 0.0
  %47 = vmatprep.subr.mxu0 0.0
  %48 = vmatpush1.msra.mxu0 0.0
  %49 = vmatprep.subr.mxu0 0.0
  %50 = vmatpush1.msra.mxu0 0.0
  %51 = vmatprep.subr.mxu0 0.0
  %52 = vmatpush1.msra.mxu0 0.0
  %53 = vmatprep.subr.mxu0 0.0
  %54 = vmatpush1.msra.mxu0 0.0
  %55 = vmatprep.subr.mxu0 0.0
  %56 = vmatpush1.msra.mxu0 0.0
  %57 = vmatprep.subr.mxu0 0.0
  %58 = vmatpush1.msra.mxu0 0.0
  %59 = vmatprep.subr.mxu0 0.0
  %60 = vmatpush1.msra.mxu0 0.0
  %61 = vmatprep.subr.mxu0 0.0
  %62 = vmatpush1.msra.mxu0 0.0
  %63 = vmatprep.subr.mxu0 0.0
  %64 = vmatpush1.msra.mxu0 0.0
  %65 = vmatprep.subr.mxu0 0.0
  %66 = vmatpush1.msra.mxu0 0.0
  %67 = vmatprep.subr.mxu0 0.0
  %68 = vmatpush1.msra.mxu0 %v35
  %69 = vmatprep.subr.mxu0 0.0
  %70 = vmatpush2.msra.mxu0 0.0
  %71 = vmatprep.subr.mxu0 0.0
  %72 = vmatpush2.msra.mxu0 0.0
  %73 = vmatprep.subr.mxu0 0.0
  %74 = vmatpush2.msra.mxu0 0.0
  %75 = vmatprep.subr.mxu0 0.0
  %76 = vmatpush2.msra.mxu0 0.0
  %77 = vmatprep.subr.mxu0 0.0
  %78 = vmatpush2.msra.mxu0 0.0
  %79 = vmatprep.subr.mxu0 0.0
  %80 = vmatpush2.msra.mxu0 0.0
  %81 = vmatprep.subr.mxu0 0.0
  %82 = vmatpush2.msra.mxu0 0.0
  %83 = vmatprep.subr.mxu0 0.0
  %84 = vmatpush2.msra.mxu0 0.0
  %85 = vmatprep.subr.mxu0 0.0
  %86 = vmatpush2.msra.mxu0 0.0
  %87 = vmatprep.subr.mxu0 0.0
  %88 = vmatpush2.msra.mxu0 0.0
  %89 = vmatprep.subr.mxu0 0.0
  %90 = vmatpush2.msra.mxu0 0.0
  %91 = vmatprep.subr.mxu0 0.0
  %92 = vmatpush2.msra.mxu0 0.0
  %93 = vmatprep.subr.mxu0 0.0
  %94 = vmatpush2.msra.mxu0 0.0
  %95 = vmatprep.subr.mxu0 0.0
  %96 = vmatpush2.msra.mxu0 0.0
  %97 = vmatprep.subr.mxu0 0.0
  %98 = vmatpush2.msra.mxu0 0.0
  %99 = vmatprep.subr.mxu0 0.0
  %100 = vmatpush2.msra.mxu0 0.0
  %101 = vmatprep.mubr.f32.mxu0 0.0
  %102 = vmatmul.mubr.f32.gmra.mxu0 %v28
  %v103 = vpop.f32.mrf.mxu0
  %v104 = vadd.f32 0.0, %v103
  %v105 = vpop.f32.mrf.mxu0
  %106 = vmatprep.mubr.f32.mxu0 0.0
  %107 = vmatmul.mubr.f32.gmra.mxu0 %v31
  %v108 = vpop.f32.mrf.mxu0
  %v109 = vadd.f32 0.0, %v108
  %v110 = vpop.f32.mrf.mxu0
  %111 = vdwg.mxu0
  %v112 = vadd.f32 %v21, %v104
  %v113 = vadd.f32 %v22, %v109
  %vm114 = vcmask 261120
  %115 = vst.msk [vmem:[#allocation2] sm:$0xff] %vm114, %v112
  %116 = vst.msk [vmem:[#allocation2 + $0x8] sm:$0xff] %vm114, %v113
  // Predicated region
  $region18: #{transformer_forward.27} parent=0 // pred_check
    %p117 = pneg %p14
  $region19: #{transformer_forward.27} parent=0 // pred_check_branch
    %119 = sbr.rel (%p117) target = $region21
  $region20: #{transformer_forward.27} parent=0 // pred_region
    %v120 = vld [vmem:[#allocation2] sm:$0xff]
    %v121 = vld [vmem:[#allocation2 + $0x8] sm:$0xff]
    %v122 = vld [vmem:[%s2] sm:$0x1]
    %v124 = vlaneseq
    %v125 = vshrl.u32 %v124, 7
    %v126 = vsub.s32 0, %v125
    %v127 = vrot.slane %v122, %v126
    %v129 = vadd.f32 %v120, %v127
    %v130 = vadd.f32 %v121, %v127
    %131 = vst.msk [vmem:[%s3] sm:$0xff] %vm114, %v129
    %132 = vst.msk [vmem:[%s3 + $0x8] sm:$0xff] %vm114, %v130
  $region21: #{transformer_forward.27} parent=0 // pred_fallthru
    _
  // Predicated region
  $region22: #{transformer_forward.27} parent=0 // pred_check
    _
  $region23: #{transformer_forward.27} parent=0 // pred_check_branch
    %134 = sbr.rel (0) target = $region25
  $region24: #{transformer_forward.27} parent=0 // pred_region
    _
  $region25: #{transformer_forward.27} parent=0 // pred_fallthru
    _
  // Predicated region
  $region26: #{transformer_forward.27} parent=0 // pred_check
    _
  $region27: #{transformer_forward.27} parent=0 // pred_check_branch
    %136 = sbr.rel (0) target = $region29
  $region28: #{transformer_forward.27} parent=0 // pred_region
    _
  $region29: #{transformer_forward.27} parent=0 // pred_fallthru
    _

// kernel: transformer_forward.40
$region0: #{transformer_forward.40}
  #allocation0 [shape = 'u32[]', space=smem, size = 0x4, offset = 0x4, fixed_abs, tag = 'smem constant byte address 0x4 - core index']
  #allocation1 [shape = 'u32[144,128]{1,0:T(1,128)}', space=vmem, size = 0x12000, scoped, tag = 'internal scratch']
  #allocation2 [shape = 'f32[16,32]{1,0:T(8,128)}', space=vmem, size = 0x2000, scoped, tag = 'scratch operand']
  %s0 = inlined_call_operand.vmem [shape: f32[16,32], index: 0, kind: input, shape index: {}]
  %s1 = inlined_call_operand.vmem [shape: f32[32,32], index: 1, kind: input, shape index: {}]
  %s2 = inlined_call_operand.vmem [shape: f32[1,32], index: 2, kind: input, shape index: {}]
  %s3 = inlined_call_operand.vmem [shape: f32[16,32], index: 3, kind: output, shape index: {}]
  %s4 = sld [smem:[#allocation0]]
  $region30: #{transformer_forward.40} parent=0
    _
  %s6 = ssub.s32 1, %s4
  %s7 = scalar_select 0, %s6, %s4
  // Predicated region
  $region2: #{transformer_forward.40} parent=0 // pred_check
    _
  $region3: #{transformer_forward.40} parent=0 // pred_check_branch
    %9 = sbr.rel (0) target = $region5
  $region4: #{transformer_forward.40} parent=0 // pred_region
    _
  $region5: #{transformer_forward.40} parent=0 // pred_fallthru
    _
  // Predicated region
  $region6: #{transformer_forward.40} parent=0 // pred_check
    _
  $region7: #{transformer_forward.40} parent=0 // pred_check_branch
    %11 = sbr.rel (0) target = $region9
  $region8: #{transformer_forward.40} parent=0 // pred_region
    _
  $region9: #{transformer_forward.40} parent=0 // pred_fallthru
    _
  // Predicated region
  $region10: #{transformer_forward.40} parent=0 // pred_check
    _
  $region11: #{transformer_forward.40} parent=0 // pred_check_branch
    %13 = sbr.rel (0) target = $region13
  $region12: #{transformer_forward.40} parent=0 // pred_region
    _
  $region13: #{transformer_forward.40} parent=0 // pred_fallthru
    _
  %p14 = scmp.eq.s32.totalorder 0, 0
  // Predicated region
  $region14: #{transformer_forward.40} parent=0 // pred_check
    %p15 = pneg %p14
  $region15: #{transformer_forward.40} parent=0 // pred_check_branch
    %17 = sbr.rel (%p15) target = $region17
  $region16: #{transformer_forward.40} parent=0 // pred_region
    %vm18 = vcmask 261120
    %19 = vst.msk [vmem:[#allocation2] sm:$0xff] %vm18, 0.0
    %20 = vst.msk [vmem:[#allocation2 + $0x8] sm:$0xff] %vm18, 0.0
  $region17: #{transformer_forward.40} parent=0 // pred_fallthru
    _
  %v21 = vld [vmem:[#allocation2] sm:$0xff]
  %v22 = vld [vmem:[#allocation2 + $0x8] sm:$0xff]
  %v23 = vld [vmem:[%s0] sm:$0xff]
  %v24 = vld [vmem:[%s0 + $0x8] sm:$0xff]
  %v25 = vld [vmem:[%s1] sm:$0xff]
  %v26 = vld [vmem:[%s1 + $0x8] sm:$0xff]
  %v27 = vld [vmem:[%s1 + $0x10] sm:$0xff]
  %v28 = vld [vmem:[%s1 + $0x18] sm:$0xff]
  %vm29 = vcmask 261120
  %v31 = vsel %vm29, %v23, 0
  %v34 = vsel %vm29, %v24, 0
  %36 = vmatprep.subr.mxu0 0.0
  %37 = vmatpush1.msra.mxu0 0.0
  %38 = vmatprep.subr.mxu0 0.0
  %39 = vmatpush1.msra.mxu0 0.0
  %40 = vmatprep.subr.mxu0 0.0
  %41 = vmatpush1.msra.mxu0 0.0
  %42 = vmatprep.subr.mxu0 0.0
  %43 = vmatpush1.msra.mxu0 0.0
  %44 = vmatprep.subr.mxu0 0.0
  %45 = vmatpush1.msra.mxu0 0.0
  %46 = vmatprep.subr.mxu0 0.0
  %47 = vmatpush1.msra.mxu0 0.0
  %48 = vmatprep.subr.mxu0 0.0
  %49 = vmatpush1.msra.mxu0 0.0
  %50 = vmatprep.subr.mxu0 0.0
  %51 = vmatpush1.msra.mxu0 0.0
  %52 = vmatprep.subr.mxu0 0.0
  %53 = vmatpush1.msra.mxu0 0.0
  %54 = vmatprep.subr.mxu0 0.0
  %55 = vmatpush1.msra.mxu0 0.0
  %56 = vmatprep.subr.mxu0 0.0
  %57 = vmatpush1.msra.mxu0 0.0
  %58 = vmatprep.subr.mxu0 0.0
  %59 = vmatpush1.msra.mxu0 0.0
  %60 = vmatprep.subr.mxu0 0.0
  %61 = vmatpush1.msra.mxu0 %v28
  %62 = vmatprep.subr.mxu0 0.0
  %63 = vmatpush1.msra.mxu0 %v27
  %64 = vmatprep.subr.mxu0 0.0
  %65 = vmatpush1.msra.mxu0 %v26
  %66 = vmatprep.subr.mxu0 0.0
  %67 = vmatpush1.msra.mxu0 %v25
  %68 = vmatprep.subr.mxu0 0.0
  %69 = vmatpush2.msra.mxu0 0.0
  %70 = vmatprep.subr.mxu0 0.0
  %71 = vmatpush2.msra.mxu0 0.0
  %72 = vmatprep.subr.mxu0 0.0
  %73 = vmatpush2.msra.mxu0 0.0
  %74 = vmatprep.subr.mxu0 0.0
  %75 = vmatpush2.msra.mxu0 0.0
  %76 = vmatprep.subr.mxu0 0.0
  %77 = vmatpush2.msra.mxu0 0.0
  %78 = vmatprep.subr.mxu0 0.0
  %79 = vmatpush2.msra.mxu0 0.0
  %80 = vmatprep.subr.mxu0 0.0
  %81 = vmatpush2.msra.mxu0 0.0
  %82 = vmatprep.subr.mxu0 0.0
  %83 = vmatpush2.msra.mxu0 0.0
  %84 = vmatprep.subr.mxu0 0.0
  %85 = vmatpush2.msra.mxu0 0.0
  %86 = vmatprep.subr.mxu0 0.0
  %87 = vmatpush2.msra.mxu0 0.0
  %88 = vmatprep.subr.mxu0 0.0
  %89 = vmatpush2.msra.mxu0 0.0
  %90 = vmatprep.subr.mxu0 0.0
  %91 = vmatpush2.msra.mxu0 0.0
  %92 = vmatprep.subr.mxu0 0.0
  %93 = vmatpush2.msra.mxu0 0.0
  %94 = vmatprep.subr.mxu0 0.0
  %95 = vmatpush2.msra.mxu0 0.0
  %96 = vmatprep.subr.mxu0 0.0
  %97 = vmatpush2.msra.mxu0 0.0
  %98 = vmatprep.subr.mxu0 0.0
  %99 = vmatpush2.msra.mxu0 0.0
  %100 = vmatprep.mubr.f32.mxu0 0.0
  %101 = vmatmul.mubr.f32.gmra.mxu0 %v31
  %v102 = vpop.f32.mrf.mxu0
  %v103 = vadd.f32 0.0, %v102
  %v104 = vpop.f32.mrf.mxu0
  %105 = vmatprep.mubr.f32.mxu0 0.0
  %106 = vmatmul.mubr.f32.gmra.mxu0 %v34
  %v107 = vpop.f32.mrf.mxu0
  %v108 = vadd.f32 0.0, %v107
  %v109 = vpop.f32.mrf.mxu0
  %110 = vdwg.mxu0
  %v111 = vadd.f32 %v21, %v103
  %v112 = vadd.f32 %v22, %v108
  %113 = vst.msk [vmem:[#allocation2] sm:$0xff] %vm29, %v111
  %114 = vst.msk [vmem:[#allocation2 + $0x8] sm:$0xff] %vm29, %v112
  // Predicated region
  $region18: #{transformer_forward.40} parent=0 // pred_check
    %p115 = pneg %p14
  $region19: #{transformer_forward.40} parent=0 // pred_check_branch
    %117 = sbr.rel (%p115) target = $region21
  $region20: #{transformer_forward.40} parent=0 // pred_region
    %v118 = vld [vmem:[#allocation2] sm:$0xff]
    %v119 = vld [vmem:[#allocation2 + $0x8] sm:$0xff]
    %v120 = vld [vmem:[%s2] sm:$0x1]
    %v122 = vlaneseq
    %v123 = vshrl.u32 %v122, 7
    %v124 = vsub.s32 0, %v123
    %v125 = vrot.slane %v120, %v124
    %v127 = vadd.f32 %v118, %v125
    %v128 = vadd.f32 %v119, %v125
    %129 = vst.msk [vmem:[%s3] sm:$0xff] %vm29, %v127
    %130 = vst.msk [vmem:[%s3 + $0x8] sm:$0xff] %vm29, %v128
  $region21: #{transformer_forward.40} parent=0 // pred_fallthru
    _
  // Predicated region
  $region22: #{transformer_forward.40} parent=0 // pred_check
    _
  $region23: #{transformer_forward.40} parent=0 // pred_check_branch
    %132 = sbr.rel (0) target = $region25
  $region24: #{transformer_forward.40} parent=0 // pred_region
    _
  $region25: #{transformer_forward.40} parent=0 // pred_fallthru
    _
  // Predicated region
  $region26: #{transformer_forward.40} parent=0 // pred_check
    _
  $region27: #{transformer_forward.40} parent=0 // pred_check_branch
    %134 = sbr.rel (0) target = $region29
  $region28: #{transformer_forward.40} parent=0 // pred_region
    _
  $region29: #{transformer_forward.40} parent=0 // pred_fallthru
    _

// kernel: transformer_forward.30
$region0: #{transformer_forward.30}
  #allocation0 [shape = 'u32[]', space=smem, size = 0x4, offset = 0x4, fixed_abs, tag = 'smem constant byte address 0x4 - core index']
  #allocation1 [shape = 'u32[144,128]{1,0:T(1,128)}', space=vmem, size = 0x12000, scoped, tag = 'internal scratch']
  #allocation2 [shape = 'f32[16,64]{1,0:T(8,128)}', space=vmem, size = 0x2000, scoped, tag = 'scratch operand']
  %s0 = inlined_call_operand.vmem [shape: f32[16,32], index: 0, kind: input, shape index: {}]
  %s1 = inlined_call_operand.vmem [shape: f32[32,64], index: 1, kind: input, shape index: {}]
  %s2 = inlined_call_operand.vmem [shape: f32[1,64], index: 2, kind: input, shape index: {}]
  %s3 = inlined_call_operand.vmem [shape: f32[16,64], index: 3, kind: output, shape index: {}]
  %s4 = sld [smem:[#allocation0]]
  $region30: #{transformer_forward.30} parent=0
    _
  %s6 = ssub.s32 1, %s4
  %s7 = scalar_select 0, %s6, %s4
  // Predicated region
  $region2: #{transformer_forward.30} parent=0 // pred_check
    _
  $region3: #{transformer_forward.30} parent=0 // pred_check_branch
    %9 = sbr.rel (0) target = $region5
  $region4: #{transformer_forward.30} parent=0 // pred_region
    _
  $region5: #{transformer_forward.30} parent=0 // pred_fallthru
    _
  // Predicated region
  $region6: #{transformer_forward.30} parent=0 // pred_check
    _
  $region7: #{transformer_forward.30} parent=0 // pred_check_branch
    %11 = sbr.rel (0) target = $region9
  $region8: #{transformer_forward.30} parent=0 // pred_region
    _
  $region9: #{transformer_forward.30} parent=0 // pred_fallthru
    _
  // Predicated region
  $region10: #{transformer_forward.30} parent=0 // pred_check
    _
  $region11: #{transformer_forward.30} parent=0 // pred_check_branch
    %13 = sbr.rel (0) target = $region13
  $region12: #{transformer_forward.30} parent=0 // pred_region
    _
  $region13: #{transformer_forward.30} parent=0 // pred_fallthru
    _
  %p14 = scmp.eq.s32.totalorder 0, 0
  // Predicated region
  $region14: #{transformer_forward.30} parent=0 // pred_check
    %p15 = pneg %p14
  $region15: #{transformer_forward.30} parent=0 // pred_check_branch
    %17 = sbr.rel (%p15) target = $region17
  $region16: #{transformer_forward.30} parent=0 // pred_region
    %vm18 = vcmask 523264
    %19 = vst.msk [vmem:[#allocation2] sm:$0xff] %vm18, 0.0
    %20 = vst.msk [vmem:[#allocation2 + $0x8] sm:$0xff] %vm18, 0.0
  $region17: #{transformer_forward.30} parent=0 // pred_fallthru
    _
  %v21 = vld [vmem:[#allocation2] sm:$0xff]
  %v22 = vld [vmem:[#allocation2 + $0x8] sm:$0xff]
  %v23 = vld [vmem:[%s0] sm:$0xff]
  %v24 = vld [vmem:[%s0 + $0x8] sm:$0xff]
  %v25 = vld [vmem:[%s1] sm:$0xff]
  %v26 = vld [vmem:[%s1 + $0x8] sm:$0xff]
  %v27 = vld [vmem:[%s1 + $0x10] sm:$0xff]
  %v28 = vld [vmem:[%s1 + $0x18] sm:$0xff]
  %vm29 = vcmask 261120
  %v31 = vsel %vm29, %v23, 0
  %v34 = vsel %vm29, %v24, 0
  %36 = vmatprep.subr.mxu0 0.0
  %37 = vmatpush1.msra.mxu0 0.0
  %38 = vmatprep.subr.mxu0 0.0
  %39 = vmatpush1.msra.mxu0 0.0
  %40 = vmatprep.subr.mxu0 0.0
  %41 = vmatpush1.msra.mxu0 0.0
  %42 = vmatprep.subr.mxu0 0.0
  %43 = vmatpush1.msra.mxu0 0.0
  %44 = vmatprep.subr.mxu0 0.0
  %45 = vmatpush1.msra.mxu0 0.0
  %46 = vmatprep.subr.mxu0 0.0
  %47 = vmatpush1.msra.mxu0 0.0
  %48 = vmatprep.subr.mxu0 0.0
  %49 = vmatpush1.msra.mxu0 0.0
  %50 = vmatprep.subr.mxu0 0.0
  %51 = vmatpush1.msra.mxu0 0.0
  %52 = vmatprep.subr.mxu0 0.0
  %53 = vmatpush1.msra.mxu0 0.0
  %54 = vmatprep.subr.mxu0 0.0
  %55 = vmatpush1.msra.mxu0 0.0
  %56 = vmatprep.subr.mxu0 0.0
  %57 = vmatpush1.msra.mxu0 0.0
  %58 = vmatprep.subr.mxu0 0.0
  %59 = vmatpush1.msra.mxu0 0.0
  %60 = vmatprep.subr.mxu0 0.0
  %61 = vmatpush1.msra.mxu0 %v28
  %62 = vmatprep.subr.mxu0 0.0
  %63 = vmatpush1.msra.mxu0 %v27
  %64 = vmatprep.subr.mxu0 0.0
  %65 = vmatpush1.msra.mxu0 %v26
  %66 = vmatprep.subr.mxu0 0.0
  %67 = vmatpush1.msra.mxu0 %v25
  %68 = vmatprep.subr.mxu0 0.0
  %69 = vmatpush2.msra.mxu0 0.0
  %70 = vmatprep.subr.mxu0 0.0
  %71 = vmatpush2.msra.mxu0 0.0
  %72 = vmatprep.subr.mxu0 0.0
  %73 = vmatpush2.msra.mxu0 0.0
  %74 = vmatprep.subr.mxu0 0.0
  %75 = vmatpush2.msra.mxu0 0.0
  %76 = vmatprep.subr.mxu0 0.0
  %77 = vmatpush2.msra.mxu0 0.0
  %78 = vmatprep.subr.mxu0 0.0
  %79 = vmatpush2.msra.mxu0 0.0
  %80 = vmatprep.subr.mxu0 0.0
  %81 = vmatpush2.msra.mxu0 0.0
  %82 = vmatprep.subr.mxu0 0.0
  %83 = vmatpush2.msra.mxu0 0.0
  %84 = vmatprep.subr.mxu0 0.0
  %85 = vmatpush2.msra.mxu0 0.0
  %86 = vmatprep.subr.mxu0 0.0
  %87 = vmatpush2.msra.mxu0 0.0
  %88 = vmatprep.subr.mxu0 0.0
  %89 = vmatpush2.msra.mxu0 0.0
  %90 = vmatprep.subr.mxu0 0.0
  %91 = vmatpush2.msra.mxu0 0.0
  %92 = vmatprep.subr.mxu0 0.0
  %93 = vmatpush2.msra.mxu0 0.0
  %94 = vmatprep.subr.mxu0 0.0
  %95 = vmatpush2.msra.mxu0 0.0
  %96 = vmatprep.subr.mxu0 0.0
  %97 = vmatpush2.msra.mxu0 0.0
  %98 = vmatprep.subr.mxu0 0.0
  %99 = vmatpush2.msra.mxu0 0.0
  %100 = vmatprep.mubr.f32.mxu0 0.0
  %101 = vmatmul.mubr.f32.gmra.mxu0 %v31
  %v102 = vpop.f32.mrf.mxu0
  %v103 = vadd.f32 0.0, %v102
  %v104 = vpop.f32.mrf.mxu0
  %105 = vmatprep.mubr.f32.mxu0 0.0
  %106 = vmatmul.mubr.f32.gmra.mxu0 %v34
  %v107 = vpop.f32.mrf.mxu0
  %v108 = vadd.f32 0.0, %v107
  %v109 = vpop.f32.mrf.mxu0
  %110 = vdwg.mxu0
  %v111 = vadd.f32 %v21, %v103
  %v112 = vadd.f32 %v22, %v108
  %vm113 = vcmask 523264
  %114 = vst.msk [vmem:[#allocation2] sm:$0xff] %vm113, %v111
  %115 = vst.msk [vmem:[#allocation2 + $0x8] sm:$0xff] %vm113, %v112
  // Predicated region
  $region18: #{transformer_forward.30} parent=0 // pred_check
    %p116 = pneg %p14
  $region19: #{transformer_forward.30} parent=0 // pred_check_branch
    %118 = sbr.rel (%p116) target = $region21
  $region20: #{transformer_forward.30} parent=0 // pred_region
    %v119 = vld [vmem:[#allocation2] sm:$0xff]
    %v120 = vld [vmem:[#allocation2 + $0x8] sm:$0xff]
    %v121 = vld [vmem:[%s2] sm:$0x1]
    %v123 = vlaneseq
    %v124 = vshrl.u32 %v123, 7
    %v125 = vsub.s32 0, %v124
    %v126 = vrot.slane %v121, %v125
    %v128 = vadd.f32 %v119, %v126
    %v129 = vadd.f32 %v120, %v126
    %130 = vst.msk [vmem:[%s3] sm:$0xff] %vm113, %v128
    %131 = vst.msk [vmem:[%s3 + $0x8] sm:$0xff] %vm113, %v129
  $region21: #{transformer_forward.30} parent=0 // pred_fallthru
    _
  // Predicated region
  $region22: #{transformer_forward.30} parent=0 // pred_check
    _
  $region23: #{transformer_forward.30} parent=0 // pred_check_branch
    %133 = sbr.rel (0) target = $region25
  $region24: #{transformer_forward.30} parent=0 // pred_region
    _
  $region25: #{transformer_forward.30} parent=0 // pred_fallthru
    _
  // Predicated region
  $region26: #{transformer_forward.30} parent=0 // pred_check
    _
  $region27: #{transformer_forward.30} parent=0 // pred_check_branch
    %135 = sbr.rel (0) target = $region29
  $region28: #{transformer_forward.30} parent=0 // pred_region
    _
  $region29: #{transformer_forward.30} parent=0 // pred_fallthru
    _

// kernel: transformer_forward.39
$region0: #{transformer_forward.39}
  #allocation0 [shape = 'u32[]', space=smem, size = 0x4, offset = 0x4, fixed_abs, tag = 'smem constant byte address 0x4 - core index']
  #allocation1 [shape = 'u32[144,128]{1,0:T(1,128)}', space=vmem, size = 0x12000, scoped, tag = 'internal scratch']
  #allocation2 [shape = 'f32[8,32]{1,0:T(8,128)}', space=vmem, size = 0x1000, scoped, tag = 'scratch operand']
  %s0 = inlined_call_operand.vmem [shape: f32[2,4,8,8], index: 0, kind: input, shape index: {}]
  %s1 = inlined_call_operand.vmem [shape: f32[2,4,8,8], index: 1, kind: input, shape index: {}]
  %s2 = inlined_call_operand.vmem [shape: f32[2,4,8,8], index: 2, kind: input, shape index: {}]
  %s3 = inlined_call_operand.vmem [shape: f32[1,8,8], index: 3, kind: input, shape index: {}]
  %s4 = inlined_call_operand.vmem [shape: f32[2,8,32], index: 4, kind: input, shape index: {}]
  %s5 = inlined_call_operand.vmem [shape: f32[32,32], index: 5, kind: input, shape index: {}]
  %s6 = inlined_call_operand.vmem [shape: f32[1,32], index: 6, kind: input, shape index: {}]
  %s7 = inlined_call_operand.vmem [shape: f32[1,32], index: 7, kind: input, shape index: {}]
  %s8 = inlined_call_operand.vmem [shape: f32[1,32], index: 8, kind: input, shape index: {}]
  %s9 = inlined_call_operand.vmem [shape: f32[2,8,32], index: 9, kind: output, shape index: {}]
  %s10 = sld [smem:[#allocation0]]
  $region69: #{transformer_forward.39} parent=0
    _
  %s12 = ssub.s32 1, %s10
  %s13 = scalar_select 0, %s12, %s10
  loop: start=0, step=1, limit=4
  $region2: #{transformer_forward.39} parent=0 // loop_pre_header
    _
  $region3: #{transformer_forward.39} parent=0 // loop_header
    %s15 = sphi 0, %s19
    %p16 = scmp.ge.s32.totalorder %s15, 4
    %s22 = sphi 0, %s34
    %s23 = sphi 0, %s30
    %s24 = sphi 0, %s22
    %s25 = sphi 0, %s23
    %s26 = sphi 0, %s24
    %s27 = sphi 0, %s25
    %s39 = sphi 0, %s41
    %s42 = sphi 0, %s39
    %s43 = sphi 0, %s42
    %s59 = sphi 0, %s43
    %s65 = sphi 0, %s67
    %s68 = sphi 0, %s65
    %s69 = sphi 0, %s68
    %s85 = sphi 0, %s69
    %s91 = sphi 0, %s93
    %s94 = sphi 0, %s91
    %s95 = sphi 0, %s94
    %s111 = sphi 0, %s95
    %s117 = sphi 0, %s119
    %s120 = sphi 0, %s117
    %s121 = sphi 0, %s120
    %s137 = sphi 0, %s121
    %s145 = sphi 0, %s147
    %s148 = sphi 0, %s145
    %s149 = sphi 0, %s148
    %s165 = sphi 0, %s149
    %s169 = sphi 0, %s169
    %s171 = sphi 0, %s169
    %s172 = sphi 0, %s171
    %s186 = sphi 0, %s172
    %s190 = sphi 0, %s190
    %s192 = sphi 0, %s190
    %s193 = sphi 0, %s192
    %s207 = sphi 0, %s193
    %s211 = sphi 0, %s211
    %s213 = sphi 0, %s211
    %s214 = sphi 0, %s213
    %s228 = sphi 0, %s214
    %s232 = sphi 0, %s232
    %s234 = sphi 0, %s232
    %s235 = sphi 0, %s234
    %s249 = sphi 0, %s235
    %s257 = sphi 0, %s259
    %s260 = sphi 0, %s257
    %s261 = sphi 0, %s260
    %s277 = sphi 0, %s261
  $region4: #{transformer_forward.39} parent=0 // loop_header_branch
    %18 = sbr.rel (%p16) target = $region8
  $region5: #{transformer_forward.39} parent=0 // loop_body
    %s20 = ssub.s32 %s15, 1
    %s21 = ssub.s32 %s15, 2
    %s28 = sadd.s32 1, %s23
    %p29 = scmp.ge.s32.totalorder %s28, 1
    %s30 = scalar_select %p29, 0, %s28
    %s31 = sadd.s32 1, %s22
    %s32 = scalar_select %p29, %s31, %s22
    %p33 = scmp.ge.s32.totalorder %s32, 2
    %s34 = scalar_select %p33, 0, %s32
    %s35 = ssub.s32 %s22, %s34
    %s36 = ssub.s32 %s23, %s30
    %s37 = sor.u32 %s35, %s36
    %p38 = scmp.eq.s32.totalorder %s37, 0
    %s40 = sadd.s32 %s39, 1
    %s41 = scalar_select %p38, %s39, %s40
    %p44 = pneg %p38
    %p45 = scmp.eq.s32.totalorder %s15, 1
    %p46 = por %p44, %p45
    %p47 = scmp.ne.s32.totalorder %s39, %s42
    %p48 = scmp.eq.s32.totalorder %s15, 0
    %p49 = por %p47, %p48
    %p50 = scmp.ne.s32.totalorder %s39, %s42
    %p51 = scmp.eq.s32.totalorder %s20, 1
    %p52 = por %p50, %p51
    %p53 = scmp.ne.s32.totalorder %s42, %s43
    %p54 = scmp.eq.s32.totalorder %s20, 0
    %p55 = por %p53, %p54
    %p56 = scmp.ne.s32.totalorder %s42, %s43
    %p57 = scmp.eq.s32.totalorder %s21, 1
    %p58 = por %p56, %p57
    %p60 = scmp.ne.s32.totalorder %s43, %s59
    %p61 = scmp.eq.s32.totalorder %s21, 0
    %p62 = por %p60, %p61
    %s63 = ssub.s32 %s22, %s34
    %p64 = scmp.eq.s32.totalorder %s63, 0
    %s66 = sadd.s32 %s65, 1
    %s67 = scalar_select %p64, %s65, %s66
    %p70 = pneg %p64
    %p71 = scmp.eq.s32.totalorder %s15, 1
    %p72 = por %p70, %p71
    %p73 = scmp.ne.s32.totalorder %s65, %s68
    %p74 = scmp.eq.s32.totalorder %s15, 0
    %p75 = por %p73, %p74
    %p76 = scmp.ne.s32.totalorder %s65, %s68
    %p77 = scmp.eq.s32.totalorder %s20, 1
    %p78 = por %p76, %p77
    %p79 = scmp.ne.s32.totalorder %s68, %s69
    %p80 = scmp.eq.s32.totalorder %s20, 0
    %p81 = por %p79, %p80
    %p82 = scmp.ne.s32.totalorder %s68, %s69
    %p83 = scmp.eq.s32.totalorder %s21, 1
    %p84 = por %p82, %p83
    %p86 = scmp.ne.s32.totalorder %s69, %s85
    %p87 = scmp.eq.s32.totalorder %s21, 0
    %p88 = por %p86, %p87
    %s89 = ssub.s32 %s22, %s34
    %p90 = scmp.eq.s32.totalorder %s89, 0
    %s92 = sadd.s32 %s91, 1
    %s93 = scalar_select %p90, %s91, %s92
    %p96 = pneg %p90
    %p97 = scmp.eq.s32.totalorder %s15, 1
    %p98 = por %p96, %p97
    %p99 = scmp.ne.s32.totalorder %s91, %s94
    %p100 = scmp.eq.s32.totalorder %s15, 0
    %p101 = por %p99, %p100
    %p102 = scmp.ne.s32.totalorder %s91, %s94
    %p103 = scmp.eq.s32.totalorder %s20, 1
    %p104 = por %p102, %p103
    %p105 = scmp.ne.s32.totalorder %s94, %s95
    %p106 = scmp.eq.s32.totalorder %s20, 0
    %p107 = por %p105, %p106
    %p108 = scmp.ne.s32.totalorder %s94, %s95
    %p109 = scmp.eq.s32.totalorder %s21, 1
    %p110 = por %p108, %p109
    %p112 = scmp.ne.s32.totalorder %s95, %s111
    %p113 = scmp.eq.s32.totalorder %s21, 0
    %p114 = por %p112, %p113
    %s115 = ssub.s32 %s23, %s30
    %p116 = scmp.eq.s32.totalorder %s115, 0
    %s118 = sadd.s32 %s117, 1
    %s119 = scalar_select %p116, %s117, %s118
    %p122 = pneg %p116
    %p123 = scmp.eq.s32.totalorder %s15, 1
    %p124 = por %p122, %p123
    %p125 = scmp.ne.s32.totalorder %s117, %s120
    %p126 = scmp.eq.s32.totalorder %s15, 0
    %p127 = por %p125, %p126
    %p128 = scmp.ne.s32.totalorder %s117, %s120
    %p129 = scmp.eq.s32.totalorder %s20, 1
    %p130 = por %p128, %p129
    %p131 = scmp.ne.s32.totalorder %s120, %s121
    %p132 = scmp.eq.s32.totalorder %s20, 0
    %p133 = por %p131, %p132
    %p134 = scmp.ne.s32.totalorder %s120, %s121
    %p135 = scmp.eq.s32.totalorder %s21, 1
    %p136 = por %p134, %p135
    %p138 = scmp.ne.s32.totalorder %s121, %s137
    %p139 = scmp.eq.s32.totalorder %s21, 0
    %p140 = por %p138, %p139
    %s141 = ssub.s32 %s22, %s34
    %s142 = ssub.s32 %s23, %s30
    %s143 = sor.u32 %s141, %s142
    %p144 = scmp.eq.s32.totalorder %s143, 0
    %s146 = sadd.s32 %s145, 1
    %s147 = scalar_select %p144, %s145, %s146
    %p150 = pneg %p144
    %p151 = scmp.eq.s32.totalorder %s15, 1
    %p152 = por %p150, %p151
    %p153 = scmp.ne.s32.totalorder %s145, %s148
    %p154 = scmp.eq.s32.totalorder %s15, 0
    %p155 = por %p153, %p154
    %p156 = scmp.ne.s32.totalorder %s145, %s148
    %p157 = scmp.eq.s32.totalorder %s20, 1
    %p158 = por %p156, %p157
    %p159 = scmp.ne.s32.totalorder %s148, %s149
    %p160 = scmp.eq.s32.totalorder %s20, 0
    %p161 = por %p159, %p160
    %p162 = scmp.ne.s32.totalorder %s148, %s149
    %p163 = scmp.eq.s32.totalorder %s21, 1
    %p164 = por %p162, %p163
    %p166 = scmp.ne.s32.totalorder %s149, %s165
    %p167 = scmp.eq.s32.totalorder %s21, 0
    %p168 = por %p166, %p167
    %s170 = sadd.s32 %s169, 1
    %p173 = scmp.eq.s32.totalorder %s15, 1
    %p174 = scmp.ne.s32.totalorder %s169, %s171
    %p175 = scmp.eq.s32.totalorder %s15, 0
    %p176 = por %p174, %p175
    %p177 = scmp.ne.s32.totalorder %s169, %s171
    %p178 = scmp.eq.s32.totalorder %s20, 1
    %p179 = por %p177, %p178
    %p180 = scmp.ne.s32.totalorder %s171, %s172
    %p181 = scmp.eq.s32.totalorder %s20, 0
    %p182 = por %p180, %p181
    %p183 = scmp.ne.s32.totalorder %s171, %s172
    %p184 = scmp.eq.s32.totalorder %s21, 1
    %p185 = por %p183, %p184
    %p187 = scmp.ne.s32.totalorder %s172, %s186
    %p188 = scmp.eq.s32.totalorder %s21, 0
    %p189 = por %p187, %p188
    %s191 = sadd.s32 %s190, 1
    %p194 = scmp.eq.s32.totalorder %s15, 1
    %p195 = scmp.ne.s32.totalorder %s190, %s192
    %p196 = scmp.eq.s32.totalorder %s15, 0
    %p197 = por %p195, %p196
    %p198 = scmp.ne.s32.totalorder %s190, %s192
    %p199 = scmp.eq.s32.totalorder %s20, 1
    %p200 = por %p198, %p199
    %p201 = scmp.ne.s32.totalorder %s192, %s193
    %p202 = scmp.eq.s32.totalorder %s20, 0
    %p203 = por %p201, %p202
    %p204 = scmp.ne.s32.totalorder %s192, %s193
    %p205 = scmp.eq.s32.totalorder %s21, 1
    %p206 = por %p204, %p205
    %p208 = scmp.ne.s32.totalorder %s193, %s207
    %p209 = scmp.eq.s32.totalorder %s21, 0
    %p210 = por %p208, %p209
    %s212 = sadd.s32 %s211, 1
    %p215 = scmp.eq.s32.totalorder %s15, 1
    %p216 = scmp.ne.s32.totalorder %s211, %s213
    %p217 = scmp.eq.s32.totalorder %s15, 0
    %p218 = por %p216, %p217
    %p219 = scmp.ne.s32.totalorder %s211, %s213
    %p220 = scmp.eq.s32.totalorder %s20, 1
    %p221 = por %p219, %p220
    %p222 = scmp.ne.s32.totalorder %s213, %s214
    %p223 = scmp.eq.s32.totalorder %s20, 0
    %p224 = por %p222, %p223
    %p225 = scmp.ne.s32.totalorder %s213, %s214
    %p226 = scmp.eq.s32.totalorder %s21, 1
    %p227 = por %p225, %p226
    %p229 = scmp.ne.s32.totalorder %s214, %s228
    %p230 = scmp.eq.s32.totalorder %s21, 0
    %p231 = por %p229, %p230
    %s233 = sadd.s32 %s232, 1
    %p236 = scmp.eq.s32.totalorder %s15, 1
    %p237 = scmp.ne.s32.totalorder %s232, %s234
    %p238 = scmp.eq.s32.totalorder %s15, 0
    %p239 = por %p237, %p238
    %p240 = scmp.ne.s32.totalorder %s232, %s234
    %p241 = scmp.eq.s32.totalorder %s20, 1
    %p242 = por %p240, %p241
    %p243 = scmp.ne.s32.totalorder %s234, %s235
    %p244 = scmp.eq.s32.totalorder %s20, 0
    %p245 = por %p243, %p244
    %p246 = scmp.ne.s32.totalorder %s234, %s235
    %p247 = scmp.eq.s32.totalorder %s21, 1
    %p248 = por %p246, %p247
    %p250 = scmp.ne.s32.totalorder %s235, %s249
    %p251 = scmp.eq.s32.totalorder %s21, 0
    %p252 = por %p250, %p251
    %s253 = ssub.s32 %s22, %s34
    %s254 = ssub.s32 %s23, %s30
    %s255 = sor.u32 %s253, %s254
    %p256 = scmp.eq.s32.totalorder %s255, 0
    %s258 = sadd.s32 %s257, 1
    %s259 = scalar_select %p256, %s257, %s258
    %p262 = pneg %p256
    %p263 = scmp.eq.s32.totalorder %s15, 1
    %p264 = por %p262, %p263
    %p265 = scmp.ne.s32.totalorder %s257, %s260
    %p266 = scmp.eq.s32.totalorder %s15, 0
    %p267 = por %p265, %p266
    %p268 = scmp.ne.s32.totalorder %s257, %s260
    %p269 = scmp.eq.s32.totalorder %s20, 1
    %p270 = por %p268, %p269
    %p271 = scmp.ne.s32.totalorder %s260, %s261
    %p272 = scmp.eq.s32.totalorder %s20, 0
    %p273 = por %p271, %p272
    %p274 = scmp.ne.s32.totalorder %s260, %s261
    %p275 = scmp.eq.s32.totalorder %s21, 1
    %p276 = por %p274, %p275
    %p278 = scmp.ne.s32.totalorder %s261, %s277
    %p279 = scmp.eq.s32.totalorder %s21, 0
    %p280 = por %p278, %p279
    %p281 = scmp.le.s32.totalorder 1, %s15
    %p282 = scmp.lt.s32.totalorder %s15, 3
    %p283 = pnand %p281, %p282
    %p284 = pneg %p283
    // Predicated region
    $region9: #{transformer_forward.39} parent=5 // pred_check
      _
    $region10: #{transformer_forward.39} parent=5 // pred_check_branch
      %286 = sbr.rel (%p283) target = $region12
    $region11: #{transformer_forward.39} parent=5 // pred_region
      %s287 = ssub.s32 %s15, 1
      // Predicated region
      $region13: #{transformer_forward.39} parent=11 // pred_check
        %p288 = pneg %p133
      $region14: #{transformer_forward.39} parent=11 // pred_check_branch
        %290 = sbr.rel (%p288) target = $region16
      $region15: #{transformer_forward.39} parent=11 // pred_region
        %p291 = scmp.lt.s32.totalorder %s25, 0
        %s292 = scalar_select %p291, %s25, 0
        %s293 = smul.addr %s292, 8
        %s294 = scalar_lea.vmem %s3, %s293
      $region16: #{transformer_forward.39} parent=11 // pred_fallthru
        _
      // Predicated region
      $region17: #{transformer_forward.39} parent=11 // pred_check
        %p295 = pneg %p182
      $region18: #{transformer_forward.39} parent=11 // pred_check_branch
        %297 = sbr.rel (%p295) target = $region20
      $region19: #{transformer_forward.39} parent=11 // pred_region
        _
      $region20: #{transformer_forward.39} parent=11 // pred_fallthru
        _
      // Predicated region
      $region21: #{transformer_forward.39} parent=11 // pred_check
        %p298 = pneg %p203
      $region22: #{transformer_forward.39} parent=11 // pred_check_branch
        %300 = sbr.rel (%p298) target = $region24
      $region23: #{transformer_forward.39} parent=11 // pred_region
        _
      $region24: #{transformer_forward.39} parent=11 // pred_fallthru
        _
      // Predicated region
      $region25: #{transformer_forward.39} parent=11 // pred_check
        %p301 = pneg %p224
      $region26: #{transformer_forward.39} parent=11 // pred_check_branch
        %303 = sbr.rel (%p301) target = $region28
      $region27: #{transformer_forward.39} parent=11 // pred_region
        _
      $region28: #{transformer_forward.39} parent=11 // pred_fallthru
        _
      // Predicated region
      $region29: #{transformer_forward.39} parent=11 // pred_check
        %p304 = pneg %p245
      $region30: #{transformer_forward.39} parent=11 // pred_check_branch
        %306 = sbr.rel (%p304) target = $region32
      $region31: #{transformer_forward.39} parent=11 // pred_region
        _
      $region32: #{transformer_forward.39} parent=11 // pred_fallthru
        _
    $region12: #{transformer_forward.39} parent=5 // pred_fallthru
      _
    %p307 = scmp.lt.s32.totalorder %s15, 2
    // Predicated region
    $region33: #{transformer_forward.39} parent=5 // pred_check
      %p308 = pneg %p307
    $region34: #{transformer_forward.39} parent=5 // pred_check_branch
      %310 = sbr.rel (%p308) target = $region36
    $region35: #{transformer_forward.39} parent=5 // pred_region
      // Predicated region
      $region37: #{transformer_forward.39} parent=35 // pred_check
        %p311 = pneg %p49
      $region38: #{transformer_forward.39} parent=35 // pred_check_branch
        %313 = sbr.rel (%p311) target = $region40
      $region39: #{transformer_forward.39} parent=35 // pred_region
        %p314 = scmp.lt.s32.totalorder %s22, 1
        %s315 = scalar_select %p314, %s22, 1
        %p316 = scmp.lt.s32.totalorder %s23, 0
        %s317 = scalar_select %p316, %s23, 0
        %s318 = smul.addr %s315, 4
        %s319 = sadd.s32 %s317, %s318
        %s320 = smul.addr %s319, 8
        %s321 = scalar_lea.vmem %s0, %s320
      $region40: #{transformer_forward.39} parent=35 // pred_fallthru
        _
      // Predicated region
      $region41: #{transformer_forward.39} parent=35 // pred_check
        %p322 = pneg %p75
      $region42: #{transformer_forward.39} parent=35 // pred_check_branch
        %324 = sbr.rel (%p322) target = $region44
      $region43: #{transformer_forward.39} parent=35 // pred_region
        %p325 = scmp.lt.s32.totalorder %s22, 1
        %s326 = scalar_select %p325, %s22, 1
        %s327 = smul.addr %s326, 4
        %s328 = smul.addr %s327, 8
        %s329 = scalar_lea.vmem %s1, %s328
      $region44: #{transformer_forward.39} parent=35 // pred_fallthru
        _
      // Predicated region
      $region45: #{transformer_forward.39} parent=35 // pred_check
        %p330 = pneg %p101
      $region46: #{transformer_forward.39} parent=35 // pred_check_branch
        %332 = sbr.rel (%p330) target = $region48
      $region47: #{transformer_forward.39} parent=35 // pred_region
        %p333 = scmp.lt.s32.totalorder %s22, 1
        %s334 = scalar_select %p333, %s22, 1
        %s335 = smul.addr %s334, 4
        %s336 = smul.addr %s335, 8
        %s337 = scalar_lea.vmem %s2, %s336
      $region48: #{transformer_forward.39} parent=35 // pred_fallthru
        _
      // Predicated region
      $region49: #{transformer_forward.39} parent=35 // pred_check
        %p338 = pneg %p155
      $region50: #{transformer_forward.39} parent=35 // pred_check_branch
        %340 = sbr.rel (%p338) target = $region52
      $region51: #{transformer_forward.39} parent=35 // pred_region
        %p341 = scmp.lt.s32.totalorder %s22, 1
        %s342 = scalar_select %p341, %s22, 1
        %p343 = scmp.lt.s32.totalorder %s23, 0
        %s344 = scalar_select %p343, %s23, 0
        %s345 = sadd.s32 %s344, %s342
        %s346 = smul.addr %s345, 8
        %s347 = scalar_lea.vmem %s4, %s346
      $region52: #{transformer_forward.39} parent=35 // pred_fallthru
        _
    $region36: #{transformer_forward.39} parent=5 // pred_fallthru
      _
    %p348 = scmp.le.s32.totalorder 1, %s15
    %p349 = scmp.lt.s32.totalorder %s15, 3
    %p350 = pnand %p348, %p349
    %p351 = pneg %p350
    // Predicated region
    $region53: #{transformer_forward.39} parent=5 // pred_check
      _
    $region54: #{transformer_forward.39} parent=5 // pred_check_branch
      %353 = sbr.rel (%p350) target = $region56
    $region55: #{transformer_forward.39} parent=5 // pred_region
      %s354 = ssub.s32 %s15, 1
      %p355 = scmp.lt.s32.totalorder %s24, 1
      %s356 = scalar_select %p355, %s24, 1
      %p357 = scmp.lt.s32.totalorder %s25, 0
      %s358 = scalar_select %p357, %s25, 0
      %s359 = smul.addr %s356, 4
      %s360 = sadd.s32 %s358, %s359
      %s361 = smul.addr %s360, 8
      %s362 = scalar_lea.vmem %s0, %s361
      %p363 = pneg %p55
      %p364 = pneg %p52
      %p365 = scmp.lt.s32.totalorder %s24, 1
      %s366 = scalar_select %p365, %s24, 1
      %s367 = smul.addr %s366, 4
      %s368 = smul.addr %s367, 8
      %s369 = scalar_lea.vmem %s1, %s368
      %p370 = pneg %p81
      %p371 = pneg %p78
      %p372 = scmp.lt.s32.totalorder %s24, 1
      %s373 = scalar_select %p372, %s24, 1
      %s374 = smul.addr %s373, 4
      %s375 = smul.addr %s374, 8
      %s376 = scalar_lea.vmem %s2, %s375
      %p377 = pneg %p107
      %p378 = pneg %p104
      %p379 = scmp.lt.s32.totalorder %s25, 0
      %s380 = scalar_select %p379, %s25, 0
      %s381 = smul.addr %s380, 8
      %s382 = scalar_lea.vmem %s3, %s381
      %p383 = pneg %p133
      %p384 = pneg %p130
      %p385 = scmp.lt.s32.totalorder %s24, 1
      %s386 = scalar_select %p385, %s24, 1
      %p387 = scmp.lt.s32.totalorder %s25, 0
      %s388 = scalar_select %p387, %s25, 0
      %s389 = sadd.s32 %s388, %s386
      %s390 = smul.addr %s389, 8
      %s391 = scalar_lea.vmem %s4, %s390
      %p392 = pneg %p161
      %p393 = pneg %p158
      %p394 = pneg %p182
      %p395 = pneg %p179
      %p396 = pneg %p203
      %p397 = pneg %p200
      %p398 = pneg %p224
      %p399 = pneg %p221
      %p400 = pneg %p245
      %p401 = pneg %p242
      %p402 = pneg %p273
      %p403 = pneg %p270
      %p404 = scmp.lt.s32.totalorder %s24, 1
      %s405 = scalar_select %p404, %s24, 1
      %p406 = scmp.lt.s32.totalorder %s25, 0
      %s407 = scalar_select %p406, %s25, 0
      %s408 = sadd.s32 %s407, %s405
      %s409 = smul.addr %s408, 8
      %s410 = scalar_lea.vmem %s9, %s409
      %p411 = scmp.lt.s32.totalorder %s24, 1
      %s412 = scalar_select %p411, %s24, 1
      %p413 = scmp.lt.s32.totalorder %s25, 0
      %s414 = scalar_select %p413, %s25, 0
      %s415 = smul.addr %s412, 4
      %s416 = sadd.s32 %s414, %s415
      %s417 = smul.addr %s416, 8
      %s418 = scalar_lea.vmem %s0, %s417
      %p419 = scmp.lt.s32.totalorder %s24, 1
      %s420 = scalar_select %p419, %s24, 1
      %s421 = smul.addr %s420, 4
      %s422 = smul.addr %s421, 8
      %s423 = scalar_lea.vmem %s1, %s422
      %p424 = scmp.lt.s32.totalorder %s24, 1
      %s425 = scalar_select %p424, %s24, 1
      %s426 = smul.addr %s425, 4
      %s427 = smul.addr %s426, 8
      %s428 = scalar_lea.vmem %s2, %s427
      %p429 = scmp.lt.s32.totalorder %s25, 0
      %s430 = scalar_select %p429, %s25, 0
      %s431 = smul.addr %s430, 8
      %s432 = scalar_lea.vmem %s3, %s431
      %p433 = scmp.lt.s32.totalorder %s24, 1
      %s434 = scalar_select %p433, %s24, 1
      %p435 = scmp.lt.s32.totalorder %s25, 0
      %s436 = scalar_select %p435, %s25, 0
      %s437 = sadd.s32 %s436, %s434
      %s438 = smul.addr %s437, 8
      %s439 = scalar_lea.vmem %s4, %s438
      %p440 = scmp.lt.s32.totalorder %s24, 1
      %s441 = scalar_select %p440, %s24, 1
      %p442 = scmp.lt.s32.totalorder %s25, 0
      %s443 = scalar_select %p442, %s25, 0
      %s444 = sadd.s32 %s443, %s441
      %s445 = smul.addr %s444, 8
      %s446 = scalar_lea.vmem %s9, %s445
      %v447 = vld [vmem:[%s432] sm:$0xff]
      %v448 = vld [vmem:[%s418] sm:$0xff]
      %v449 = vld [vmem:[%s423] sm:$0xff]
      %v450 = vld [vmem:[%s428] sm:$0xff]
      %vm451 = vcmask 64512
      %v453 = vsel %vm451, %v448, 0
      %v456 = vsel %vm451, %v449, 0
      %458 = vmatprep.subr.mxu0 0.0
      %459 = vmatpush1.xpose.msra.mxu0 0.0
      %460 = vmatprep.subr.mxu0 0.0
      %461 = vmatpush1.xpose.msra.mxu0 0.0
      %462 = vmatprep.subr.mxu0 0.0
      %463 = vmatpush1.xpose.msra.mxu0 0.0
      %464 = vmatprep.subr.mxu0 0.0
      %465 = vmatpush1.xpose.msra.mxu0 0.0
      %466 = vmatprep.subr.mxu0 0.0
      %467 = vmatpush1.xpose.msra.mxu0 0.0
      %468 = vmatprep.subr.mxu0 0.0
      %469 = vmatpush1.xpose.msra.mxu0 0.0
      %470 = vmatprep.subr.mxu0 0.0
      %471 = vmatpush1.xpose.msra.mxu0 0.0
      %472 = vmatprep.subr.mxu0 0.0
      %473 = vmatpush1.xpose.msra.mxu0 0.0
      %474 = vmatprep.subr.mxu0 0.0
      %475 = vmatpush1.xpose.msra.mxu0 0.0
      %476 = vmatprep.subr.mxu0 0.0
      %477 = vmatpush1.xpose.msra.mxu0 0.0
      %478 = vmatprep.subr.mxu0 0.0
      %479 = vmatpush1.xpose.msra.mxu0 0.0
      %480 = vmatprep.subr.mxu0 0.0
      %481 = vmatpush1.xpose.msra.mxu0 0.0
      %482 = vmatprep.subr.mxu0 0.0
      %483 = vmatpush1.xpose.msra.mxu0 0.0
      %484 = vmatprep.subr.mxu0 0.0
      %485 = vmatpush1.xpose.msra.mxu0 0.0
      %486 = vmatprep.subr.mxu0 0.0
      %487 = vmatpush1.xpose.msra.mxu0 0.0
      %488 = vmatprep.subr.mxu0 0.0
      %489 = vmatpush1.xpose.msra.mxu0 %v456
      %490 = vmatprep.subr.mxu0 0.0
      %491 = vmatpush2.xpose.msra.mxu0 0.0
      %492 = vmatprep.subr.mxu0 0.0
      %493 = vmatpush2.xpose.msra.mxu0 0.0
      %494 = vmatprep.subr.mxu0 0.0
      %495 = vmatpush2.xpose.msra.mxu0 0.0
      %496 = vmatprep.subr.mxu0 0.0
      %497 = vmatpush2.xpose.msra.mxu0 0.0
      %498 = vmatprep.subr.mxu0 0.0
      %499 = vmatpush2.xpose.msra.mxu0 0.0
      %500 = vmatprep.subr.mxu0 0.0
      %501 = vmatpush2.xpose.msra.mxu0 0.0
      %502 = vmatprep.subr.mxu0 0.0
      %503 = vmatpush2.xpose.msra.mxu0 0.0
      %504 = vmatprep.subr.mxu0 0.0
      %505 = vmatpush2.xpose.msra.mxu0 0.0
      %506 = vmatprep.subr.mxu0 0.0
      %507 = vmatpush2.xpose.msra.mxu0 0.0
      %508 = vmatprep.subr.mxu0 0.0
      %509 = vmatpush2.xpose.msra.mxu0 0.0
      %510 = vmatprep.subr.mxu0 0.0
      %511 = vmatpush2.xpose.msra.mxu0 0.0
      %512 = vmatprep.subr.mxu0 0.0
      %513 = vmatpush2.xpose.msra.mxu0 0.0
      %514 = vmatprep.subr.mxu0 0.0
      %515 = vmatpush2.xpose.msra.mxu0 0.0
      %516 = vmatprep.subr.mxu0 0.0
      %517 = vmatpush2.xpose.msra.mxu0 0.0
      %518 = vmatprep.subr.mxu0 0.0
      %519 = vmatpush2.xpose.msra.mxu0 0.0
      %520 = vmatprep.subr.mxu0 0.0
      %521 = vmatpush2.xpose.msra.mxu0 0.0
      %522 = vmatprep.mubr.f32.mxu0 0.0
      %523 = vmatmul.mubr.f32.gmra.mxu0 %v453
      %v524 = vpop.f32.mrf.mxu0
      %v525 = vadd.f32 0.0, %v524
      %v526 = vpop.f32.mrf.mxu0
      %527 = vdwg.mxu0
      %v528 = vmul.f32 %v525, 0.35355338
      %v529 = vadd.f32 %v528, %v447
      %v530 = vsel %vm451, %v529, -inf
      %531 = vmax.xlane.f32.xlu0 %v530
      %v532 = vpop.xlane.xlu0 %531
      %v533 = vsub.f32 %v529, %v532
      %v534 = vmul.f32 %v533, 1.442695
      %v535 = vpow.pop %v534
      %v536 = vsel %vm451, %v535, 0.0
      %537 = vadd.xlane.f32.xlu0 %v536
      %v538 = vpop.xlane.xlu0 %537
      %v539 = vrcp.pop %v538
      %v540 = vmul.f32 %v535, %v539
      %v542 = vsel %vm451, %v540, 0
      %544 = vmatprep.subr.mxu0 0.0
      %545 = vmatpush1.msra.mxu0 0.0
      %546 = vmatprep.subr.mxu0 0.0
      %547 = vmatpush1.msra.mxu0 0.0
      %548 = vmatprep.subr.mxu0 0.0
      %549 = vmatpush1.msra.mxu0 0.0
      %550 = vmatprep.subr.mxu0 0.0
      %551 = vmatpush1.msra.mxu0 0.0
      %552 = vmatprep.subr.mxu0 0.0
      %553 = vmatpush1.msra.mxu0 0.0
      %554 = vmatprep.subr.mxu0 0.0
      %555 = vmatpush1.msra.mxu0 0.0
      %556 = vmatprep.subr.mxu0 0.0
      %557 = vmatpush1.msra.mxu0 0.0
      %558 = vmatprep.subr.mxu0 0.0
      %559 = vmatpush1.msra.mxu0 0.0
      %560 = vmatprep.subr.mxu0 0.0
      %561 = vmatpush1.msra.mxu0 0.0
      %562 = vmatprep.subr.mxu0 0.0
      %563 = vmatpush1.msra.mxu0 0.0
      %564 = vmatprep.subr.mxu0 0.0
      %565 = vmatpush1.msra.mxu0 0.0
      %566 = vmatprep.subr.mxu0 0.0
      %567 = vmatpush1.msra.mxu0 0.0
      %568 = vmatprep.subr.mxu0 0.0
      %569 = vmatpush1.msra.mxu0 0.0
      %570 = vmatprep.subr.mxu0 0.0
      %571 = vmatpush1.msra.mxu0 0.0
      %572 = vmatprep.subr.mxu0 0.0
      %573 = vmatpush1.msra.mxu0 0.0
      %574 = vmatprep.subr.mxu0 0.0
      %575 = vmatpush1.msra.mxu0 %v450
      %576 = vmatprep.subr.mxu0 0.0
      %577 = vmatpush2.msra.mxu0 0.0
      %578 = vmatprep.subr.mxu0 0.0
      %579 = vmatpush2.msra.mxu0 0.0
      %580 = vmatprep.subr.mxu0 0.0
      %581 = vmatpush2.msra.mxu0 0.0
      %582 = vmatprep.subr.mxu0 0.0
      %583 = vmatpush2.msra.mxu0 0.0
      %584 = vmatprep.subr.mxu0 0.0
      %585 = vmatpush2.msra.mxu0 0.0
      %586 = vmatprep.subr.mxu0 0.0
      %587 = vmatpush2.msra.mxu0 0.0
      %588 = vmatprep.subr.mxu0 0.0
      %589 = vmatpush2.msra.mxu0 0.0
      %590 = vmatprep.subr.mxu0 0.0
      %591 = vmatpush2.msra.mxu0 0.0
      %592 = vmatprep.subr.mxu0 0.0
      %593 = vmatpush2.msra.mxu0 0.0
      %594 = vmatprep.subr.mxu0 0.0
      %595 = vmatpush2.msra.mxu0 0.0
      %596 = vmatprep.subr.mxu0 0.0
      %597 = vmatpush2.msra.mxu0 0.0
      %598 = vmatprep.subr.mxu0 0.0
      %599 = vmatpush2.msra.mxu0 0.0
      %600 = vmatprep.subr.mxu0 0.0
      %601 = vmatpush2.msra.mxu0 0.0
      %602 = vmatprep.subr.mxu0 0.0
      %603 = vmatpush2.msra.mxu0 0.0
      %604 = vmatprep.subr.mxu0 0.0
      %605 = vmatpush2.msra.mxu0 0.0
      %606 = vmatprep.subr.mxu0 0.0
      %607 = vmatpush2.msra.mxu0 0.0
      %608 = vmatprep.mubr.f32.mxu0 0.0
      %609 = vmatmul.mubr.f32.gmra.mxu0 %v542
      %v610 = vpop.f32.mrf.mxu0
      %v611 = vadd.f32 0.0, %v610
      %v612 = vpop.f32.mrf.mxu0
      %613 = vdwg.mxu0
      %614 = vst.msk [vmem:[#allocation2] sm:$0xff] %vm451, %v611
      %s615 = scalar_lea.vmem %s418, 8
      %v616 = vld [vmem:[%s615] sm:$0xff]
      %s617 = scalar_lea.vmem %s423, 8
      %v618 = vld [vmem:[%s617] sm:$0xff]
      %s619 = scalar_lea.vmem %s428, 8
      %v620 = vld [vmem:[%s619] sm:$0xff]
      %v622 = vsel %vm451, %v616, 0
      %v625 = vsel %vm451, %v618, 0
      %627 = vmatprep.subr.mxu0 0.0
      %628 = vmatpush1.xpose.msra.mxu0 0.0
      %629 = vmatprep.subr.mxu0 0.0
      %630 = vmatpush1.xpose.msra.mxu0 0.0
      %631 = vmatprep.subr.mxu0 0.0
      %632 = vmatpush1.xpose.msra.mxu0 0.0
      %633 = vmatprep.subr.mxu0 0.0
      %634 = vmatpush1.xpose.msra.mxu0 0.0
      %635 = vmatprep.subr.mxu0 0.0
      %636 = vmatpush1.xpose.msra.mxu0 0.0
      %637 = vmatprep.subr.mxu0 0.0
      %638 = vmatpush1.xpose.msra.mxu0 0.0
      %639 = vmatprep.subr.mxu0 0.0
      %640 = vmatpush1.xpose.msra.mxu0 0.0
      %641 = vmatprep.subr.mxu0 0.0
      %642 = vmatpush1.xpose.msra.mxu0 0.0
      %643 = vmatprep.subr.mxu0 0.0
      %644 = vmatpush1.xpose.msra.mxu0 0.0
      %645 = vmatprep.subr.mxu0 0.0
      %646 = vmatpush1.xpose.msra.mxu0 0.0
      %647 = vmatprep.subr.mxu0 0.0
      %648 = vmatpush1.xpose.msra.mxu0 0.0
      %649 = vmatprep.subr.mxu0 0.0
      %650 = vmatpush1.xpose.msra.mxu0 0.0
      %651 = vmatprep.subr.mxu0 0.0
      %652 = vmatpush1.xpose.msra.mxu0 0.0
      %653 = vmatprep.subr.mxu0 0.0
      %654 = vmatpush1.xpose.msra.mxu0 0.0
      %655 = vmatprep.subr.mxu0 0.0
      %656 = vmatpush1.xpose.msra.mxu0 0.0
      %657 = vmatprep.subr.mxu0 0.0
      %658 = vmatpush1.xpose.msra.mxu0 %v625
      %659 = vmatprep.subr.mxu0 0.0
      %660 = vmatpush2.xpose.msra.mxu0 0.0
      %661 = vmatprep.subr.mxu0 0.0
      %662 = vmatpush2.xpose.msra.mxu0 0.0
      %663 = vmatprep.subr.mxu0 0.0
      %664 = vmatpush2.xpose.msra.mxu0 0.0
      %665 = vmatprep.subr.mxu0 0.0
      %666 = vmatpush2.xpose.msra.mxu0 0.0
      %667 = vmatprep.subr.mxu0 0.0
      %668 = vmatpush2.xpose.msra.mxu0 0.0
      %669 = vmatprep.subr.mxu0 0.0
      %670 = vmatpush2.xpose.msra.mxu0 0.0
      %671 = vmatprep.subr.mxu0 0.0
      %672 = vmatpush2.xpose.msra.mxu0 0.0
      %673 = vmatprep.subr.mxu0 0.0
      %674 = vmatpush2.xpose.msra.mxu0 0.0
      %675 = vmatprep.subr.mxu0 0.0
      %676 = vmatpush2.xpose.msra.mxu0 0.0
      %677 = vmatprep.subr.mxu0 0.0
      %678 = vmatpush2.xpose.msra.mxu0 0.0
      %679 = vmatprep.subr.mxu0 0.0
      %680 = vmatpush2.xpose.msra.mxu0 0.0
      %681 = vmatprep.subr.mxu0 0.0
      %682 = vmatpush2.xpose.msra.mxu0 0.0
      %683 = vmatprep.subr.mxu0 0.0
      %684 = vmatpush2.xpose.msra.mxu0 0.0
      %685 = vmatprep.subr.mxu0 0.0
      %686 = vmatpush2.xpose.msra.mxu0 0.0
      %687 = vmatprep.subr.mxu0 0.0
      %688 = vmatpush2.xpose.msra.mxu0 0.0
      %689 = vmatprep.subr.mxu0 0.0
      %690 = vmatpush2.xpose.msra.mxu0 0.0
      %691 = vmatprep.mubr.f32.mxu0 0.0
      %692 = vmatmul.mubr.f32.gmra.mxu0 %v622
      %v693 = vpop.f32.mrf.mxu0
      %v694 = vadd.f32 0.0, %v693
      %v695 = vpop.f32.mrf.mxu0
      %696 = vdwg.mxu0
      %v697 = vmul.f32 %v694, 0.35355338
      %v698 = vadd.f32 %v697, %v447
      %v699 = vsel %vm451, %v698, -inf
      %700 = vmax.xlane.f32.xlu0 %v699
      %v701 = vpop.xlane.xlu0 %700
      %v702 = vsub.f32 %v698, %v701
      %v703 = vmul.f32 %v702, 1.442695
      %v704 = vpow.pop %v703
      %v705 = vsel %vm451, %v704, 0.0
      %706 = vadd.xlane.f32.xlu0 %v705
      %v707 = vpop.xlane.xlu0 %706
      %v708 = vrcp.pop %v707
      %v709 = vmul.f32 %v704, %v708
      %v711 = vsel %vm451, %v709, 0
      %713 = vmatprep.subr.mxu0 0.0
      %714 = vmatpush1.msra.mxu0 0.0
      %715 = vmatprep.subr.mxu0 0.0
      %716 = vmatpush1.msra.mxu0 0.0
      %717 = vmatprep.subr.mxu0 0.0
      %718 = vmatpush1.msra.mxu0 0.0
      %719 = vmatprep.subr.mxu0 0.0
      %720 = vmatpush1.msra.mxu0 0.0
      %721 = vmatprep.subr.mxu0 0.0
      %722 = vmatpush1.msra.mxu0 0.0
      %723 = vmatprep.subr.mxu0 0.0
      %724 = vmatpush1.msra.mxu0 0.0
      %725 = vmatprep.subr.mxu0 0.0
      %726 = vmatpush1.msra.mxu0 0.0
      %727 = vmatprep.subr.mxu0 0.0
      %728 = vmatpush1.msra.mxu0 0.0
      %729 = vmatprep.subr.mxu0 0.0
      %730 = vmatpush1.msra.mxu0 0.0
      %731 = vmatprep.subr.mxu0 0.0
      %732 = vmatpush1.msra.mxu0 0.0
      %733 = vmatprep.subr.mxu0 0.0
      %734 = vmatpush1.msra.mxu0 0.0
      %735 = vmatprep.subr.mxu0 0.0
      %736 = vmatpush1.msra.mxu0 0.0
      %737 = vmatprep.subr.mxu0 0.0
      %738 = vmatpush1.msra.mxu0 0.0
      %739 = vmatprep.subr.mxu0 0.0
      %740 = vmatpush1.msra.mxu0 0.0
      %741 = vmatprep.subr.mxu0 0.0
      %742 = vmatpush1.msra.mxu0 0.0
      %743 = vmatprep.subr.mxu0 0.0
      %744 = vmatpush1.msra.mxu0 %v620
      %745 = vmatprep.subr.mxu0 0.0
      %746 = vmatpush2.msra.mxu0 0.0
      %747 = vmatprep.subr.mxu0 0.0
      %748 = vmatpush2.msra.mxu0 0.0
      %749 = vmatprep.subr.mxu0 0.0
      %750 = vmatpush2.msra.mxu0 0.0
      %751 = vmatprep.subr.mxu0 0.0
      %752 = vmatpush2.msra.mxu0 0.0
      %753 = vmatprep.subr.mxu0 0.0
      %754 = vmatpush2.msra.mxu0 0.0
      %755 = vmatprep.subr.mxu0 0.0
      %756 = vmatpush2.msra.mxu0 0.0
      %757 = vmatprep.subr.mxu0 0.0
      %758 = vmatpush2.msra.mxu0 0.0
      %759 = vmatprep.subr.mxu0 0.0
      %760 = vmatpush2.msra.mxu0 0.0
      %761 = vmatprep.subr.mxu0 0.0
      %762 = vmatpush2.msra.mxu0 0.0
      %763 = vmatprep.subr.mxu0 0.0
      %764 = vmatpush2.msra.mxu0 0.0
      %765 = vmatprep.subr.mxu0 0.0
      %766 = vmatpush2.msra.mxu0 0.0
      %767 = vmatprep.subr.mxu0 0.0
      %768 = vmatpush2.msra.mxu0 0.0
      %769 = vmatprep.subr.mxu0 0.0
      %770 = vmatpush2.msra.mxu0 0.0
      %771 = vmatprep.subr.mxu0 0.0
      %772 = vmatpush2.msra.mxu0 0.0
      %773 = vmatprep.subr.mxu0 0.0
      %774 = vmatpush2.msra.mxu0 0.0
      %775 = vmatprep.subr.mxu0 0.0
      %776 = vmatpush2.msra.mxu0 0.0
      %777 = vmatprep.mubr.f32.mxu0 0.0
      %778 = vmatmul.mubr.f32.gmra.mxu0 %v711
      %v779 = vpop.f32.mrf.mxu0
      %v780 = vadd.f32 0.0, %v779
      %v781 = vpop.f32.mrf.mxu0
      %782 = vdwg.mxu0
      %784 = vrot.lane.b32.xlu0 %v780, 8
      %v785 = vpop.permute.xlu0 %784
      %vm787 = vcmask 130112
      %788 = vst.msk [vmem:[#allocation2] sm:$0xff] %vm787, %v785
      %s789 = scalar_lea.vmem %s418, 16
      %v790 = vld [vmem:[%s789] sm:$0xff]
      %s791 = scalar_lea.vmem %s423, 16
      %v792 = vld [vmem:[%s791] sm:$0xff]
      %s793 = scalar_lea.vmem %s428, 16
      %v794 = vld [vmem:[%s793] sm:$0xff]
      %v796 = vsel %vm451, %v790, 0
      %v799 = vsel %vm451, %v792, 0
      %801 = vmatprep.subr.mxu0 0.0
      %802 = vmatpush1.xpose.msra.mxu0 0.0
      %803 = vmatprep.subr.mxu0 0.0
      %804 = vmatpush1.xpose.msra.mxu0 0.0
      %805 = vmatprep.subr.mxu0 0.0
      %806 = vmatpush1.xpose.msra.mxu0 0.0
      %807 = vmatprep.subr.mxu0 0.0
      %808 = vmatpush1.xpose.msra.mxu0 0.0
      %809 = vmatprep.subr.mxu0 0.0
      %810 = vmatpush1.xpose.msra.mxu0 0.0
      %811 = vmatprep.subr.mxu0 0.0
      %812 = vmatpush1.xpose.msra.mxu0 0.0
      %813 = vmatprep.subr.mxu0 0.0
      %814 = vmatpush1.xpose.msra.mxu0 0.0
      %815 = vmatprep.subr.mxu0 0.0
      %816 = vmatpush1.xpose.msra.mxu0 0.0
      %817 = vmatprep.subr.mxu0 0.0
      %818 = vmatpush1.xpose.msra.mxu0 0.0
      %819 = vmatprep.subr.mxu0 0.0
      %820 = vmatpush1.xpose.msra.mxu0 0.0
      %821 = vmatprep.subr.mxu0 0.0
      %822 = vmatpush1.xpose.msra.mxu0 0.0
      %823 = vmatprep.subr.mxu0 0.0
      %824 = vmatpush1.xpose.msra.mxu0 0.0
      %825 = vmatprep.subr.mxu0 0.0
      %826 = vmatpush1.xpose.msra.mxu0 0.0
      %827 = vmatprep.subr.mxu0 0.0
      %828 = vmatpush1.xpose.msra.mxu0 0.0
      %829 = vmatprep.subr.mxu0 0.0
      %830 = vmatpush1.xpose.msra.mxu0 0.0
      %831 = vmatprep.subr.mxu0 0.0
      %832 = vmatpush1.xpose.msra.mxu0 %v799
      %833 = vmatprep.subr.mxu0 0.0
      %834 = vmatpush2.xpose.msra.mxu0 0.0
      %835 = vmatprep.subr.mxu0 0.0
      %836 = vmatpush2.xpose.msra.mxu0 0.0
      %837 = vmatprep.subr.mxu0 0.0
      %838 = vmatpush2.xpose.msra.mxu0 0.0
      %839 = vmatprep.subr.mxu0 0.0
      %840 = vmatpush2.xpose.msra.mxu0 0.0
      %841 = vmatprep.subr.mxu0 0.0
      %842 = vmatpush2.xpose.msra.mxu0 0.0
      %843 = vmatprep.subr.mxu0 0.0
      %844 = vmatpush2.xpose.msra.mxu0 0.0
      %845 = vmatprep.subr.mxu0 0.0
      %846 = vmatpush2.xpose.msra.mxu0 0.0
      %847 = vmatprep.subr.mxu0 0.0
      %848 = vmatpush2.xpose.msra.mxu0 0.0
      %849 = vmatprep.subr.mxu0 0.0
      %850 = vmatpush2.xpose.msra.mxu0 0.0
      %851 = vmatprep.subr.mxu0 0.0
      %852 = vmatpush2.xpose.msra.mxu0 0.0
      %853 = vmatprep.subr.mxu0 0.0
      %854 = vmatpush2.xpose.msra.mxu0 0.0
      %855 = vmatprep.subr.mxu0 0.0
      %856 = vmatpush2.xpose.msra.mxu0 0.0
      %857 = vmatprep.subr.mxu0 0.0
      %858 = vmatpush2.xpose.msra.mxu0 0.0
      %859 = vmatprep.subr.mxu0 0.0
      %860 = vmatpush2.xpose.msra.mxu0 0.0
      %861 = vmatprep.subr.mxu0 0.0
      %862 = vmatpush2.xpose.msra.mxu0 0.0
      %863 = vmatprep.subr.mxu0 0.0
      %864 = vmatpush2.xpose.msra.mxu0 0.0
      %865 = vmatprep.mubr.f32.mxu0 0.0
      %866 = vmatmul.mubr.f32.gmra.mxu0 %v796
      %v867 = vpop.f32.mrf.mxu0
      %v868 = vadd.f32 0.0, %v867
      %v869 = vpop.f32.mrf.mxu0
      %870 = vdwg.mxu0
      %v871 = vmul.f32 %v868, 0.35355338
      %v872 = vadd.f32 %v871, %v447
      %v873 = vsel %vm451, %v872, -inf
      %874 = vmax.xlane.f32.xlu0 %v873
      %v875 = vpop.xlane.xlu0 %874
      %v876 = vsub.f32 %v872, %v875
      %v877 = vmul.f32 %v876, 1.442695
      %v878 = vpow.pop %v877
      %v879 = vsel %vm451, %v878, 0.0
      %880 = vadd.xlane.f32.xlu0 %v879
      %v881 = vpop.xlane.xlu0 %880
      %v882 = vrcp.pop %v881
      %v883 = vmul.f32 %v878, %v882
      %v885 = vsel %vm451, %v883, 0
      %887 = vmatprep.subr.mxu0 0.0
      %888 = vmatpush1.msra.mxu0 0.0
      %889 = vmatprep.subr.mxu0 0.0
      %890 = vmatpush1.msra.mxu0 0.0
      %891 = vmatprep.subr.mxu0 0.0
      %892 = vmatpush1.msra.mxu0 0.0
      %893 = vmatprep.subr.mxu0 0.0
      %894 = vmatpush1.msra.mxu0 0.0
      %895 = vmatprep.subr.mxu0 0.0
      %896 = vmatpush1.msra.mxu0 0.0
      %897 = vmatprep.subr.mxu0 0.0
      %898 = vmatpush1.msra.mxu0 0.0
      %899 = vmatprep.subr.mxu0 0.0
      %900 = vmatpush1.msra.mxu0 0.0
      %901 = vmatprep.subr.mxu0 0.0
      %902 = vmatpush1.msra.mxu0 0.0
      %903 = vmatprep.subr.mxu0 0.0
      %904 = vmatpush1.msra.mxu0 0.0
      %905 = vmatprep.subr.mxu0 0.0
      %906 = vmatpush1.msra.mxu0 0.0
      %907 = vmatprep.subr.mxu0 0.0
      %908 = vmatpush1.msra.mxu0 0.0
      %909 = vmatprep.subr.mxu0 0.0
      %910 = vmatpush1.msra.mxu0 0.0
      %911 = vmatprep.subr.mxu0 0.0
      %912 = vmatpush1.msra.mxu0 0.0
      %913 = vmatprep.subr.mxu0 0.0
      %914 = vmatpush1.msra.mxu0 0.0
      %915 = vmatprep.subr.mxu0 0.0
      %916 = vmatpush1.msra.mxu0 0.0
      %917 = vmatprep.subr.mxu0 0.0
      %918 = vmatpush1.msra.mxu0 %v794
      %919 = vmatprep.subr.mxu0 0.0
      %920 = vmatpush2.msra.mxu0 0.0
      %921 = vmatprep.subr.mxu0 0.0
      %922 = vmatpush2.msra.mxu0 0.0
      %923 = vmatprep.subr.mxu0 0.0
      %924 = vmatpush2.msra.mxu0 0.0
      %925 = vmatprep.subr.mxu0 0.0
      %926 = vmatpush2.msra.mxu0 0.0
      %927 = vmatprep.subr.mxu0 0.0
      %928 = vmatpush2.msra.mxu0 0.0
      %929 = vmatprep.subr.mxu0 0.0
      %930 = vmatpush2.msra.mxu0 0.0
      %931 = vmatprep.subr.mxu0 0.0
      %932 = vmatpush2.msra.mxu0 0.0
      %933 = vmatprep.subr.mxu0 0.0
      %934 = vmatpush2.msra.mxu0 0.0
      %935 = vmatprep.subr.mxu0 0.0
      %936 = vmatpush2.msra.mxu0 0.0
      %937 = vmatprep.subr.mxu0 0.0
      %938 = vmatpush2.msra.mxu0 0.0
      %939 = vmatprep.subr.mxu0 0.0
      %940 = vmatpush2.msra.mxu0 0.0
      %941 = vmatprep.subr.mxu0 0.0
      %942 = vmatpush2.msra.mxu0 0.0
      %943 = vmatprep.subr.mxu0 0.0
      %944 = vmatpush2.msra.mxu0 0.0
      %945 = vmatprep.subr.mxu0 0.0
      %946 = vmatpush2.msra.mxu0 0.0
      %947 = vmatprep.subr.mxu0 0.0
      %948 = vmatpush2.msra.mxu0 0.0
      %949 = vmatprep.subr.mxu0 0.0
      %950 = vmatpush2.msra.mxu0 0.0
      %951 = vmatprep.mubr.f32.mxu0 0.0
      %952 = vmatmul.mubr.f32.gmra.mxu0 %v885
      %v953 = vpop.f32.mrf.mxu0
      %v954 = vadd.f32 0.0, %v953
      %v955 = vpop.f32.mrf.mxu0
      %956 = vdwg.mxu0
      %958 = vrot.lane.b32.xlu0 %v954, 16
      %v959 = vpop.permute.xlu0 %958
      %vm961 = vcmask 195712
      %962 = vst.msk [vmem:[#allocation2] sm:$0xff] %vm961, %v959
      %s963 = scalar_lea.vmem %s418, 24
      %v964 = vld [vmem:[%s963] sm:$0xff]
      %s965 = scalar_lea.vmem %s423, 24
      %v966 = vld [vmem:[%s965] sm:$0xff]
      %s967 = scalar_lea.vmem %s428, 24
      %v968 = vld [vmem:[%s967] sm:$0xff]
      %v970 = vsel %vm451, %v964, 0
      %v973 = vsel %vm451, %v966, 0
      %975 = vmatprep.subr.mxu0 0.0
      %976 = vmatpush1.xpose.msra.mxu0 0.0
      %977 = vmatprep.subr.mxu0 0.0
      %978 = vmatpush1.xpose.msra.mxu0 0.0
      %979 = vmatprep.subr.mxu0 0.0
      %980 = vmatpush1.xpose.msra.mxu0 0.0
      %981 = vmatprep.subr.mxu0 0.0
      %982 = vmatpush1.xpose.msra.mxu0 0.0
      %983 = vmatprep.subr.mxu0 0.0
      %984 = vmatpush1.xpose.msra.mxu0 0.0
      %985 = vmatprep.subr.mxu0 0.0
      %986 = vmatpush1.xpose.msra.mxu0 0.0
      %987 = vmatprep.subr.mxu0 0.0
      %988 = vmatpush1.xpose.msra.mxu0 0.0
      %989 = vmatprep.subr.mxu0 0.0
      %990 = vmatpush1.xpose.msra.mxu0 0.0
      %991 = vmatprep.subr.mxu0 0.0
      %992 = vmatpush1.xpose.msra.mxu0 0.0
      %993 = vmatprep.subr.mxu0 0.0
      %994 = vmatpush1.xpose.msra.mxu0 0.0
      %995 = vmatprep.subr.mxu0 0.0
      %996 = vmatpush1.xpose.msra.mxu0 0.0
      %997 = vmatprep.subr.mxu0 0.0
      %998 = vmatpush1.xpose.msra.mxu0 0.0
      %999 = vmatprep.subr.mxu0 0.0
      %1000 = vmatpush1.xpose.msra.mxu0 0.0
      %1001 = vmatprep.subr.mxu0 0.0
      %1002 = vmatpush1.xpose.msra.mxu0 0.0
      %1003 = vmatprep.subr.mxu0 0.0
      %1004 = vmatpush1.xpose.msra.mxu0 0.0
      %1005 = vmatprep.subr.mxu0 0.0
      %1006 = vmatpush1.xpose.msra.mxu0 %v973
      %1007 = vmatprep.subr.mxu0 0.0
      %1008 = vmatpush2.xpose.msra.mxu0 0.0
      %1009 = vmatprep.subr.mxu0 0.0
      %1010 = vmatpush2.xpose.msra.mxu0 0.0
      %1011 = vmatprep.subr.mxu0 0.0
      %1012 = vmatpush2.xpose.msra.mxu0 0.0
      %1013 = vmatprep.subr.mxu0 0.0
      %1014 = vmatpush2.xpose.msra.mxu0 0.0
      %1015 = vmatprep.subr.mxu0 0.0
      %1016 = vmatpush2.xpose.msra.mxu0 0.0
      %1017 = vmatprep.subr.mxu0 0.0
      %1018 = vmatpush2.xpose.msra.mxu0 0.0
      %1019 = vmatprep.subr.mxu0 0.0
      %1020 = vmatpush2.xpose.msra.mxu0 0.0
      %1021 = vmatprep.subr.mxu0 0.0
      %1022 = vmatpush2.xpose.msra.mxu0 0.0
      %1023 = vmatprep.subr.mxu0 0.0
      %1024 = vmatpush2.xpose.msra.mxu0 0.0
      %1025 = vmatprep.subr.mxu0 0.0
      %1026 = vmatpush2.xpose.msra.mxu0 0.0
      %1027 = vmatprep.subr.mxu0 0.0
      %1028 = vmatpush2.xpose.msra.mxu0 0.0
      %1029 = vmatprep.subr.mxu0 0.0
      %1030 = vmatpush2.xpose.msra.mxu0 0.0
      %1031 = vmatprep.subr.mxu0 0.0
      %1032 = vmatpush2.xpose.msra.mxu0 0.0
      %1033 = vmatprep.subr.mxu0 0.0
      %1034 = vmatpush2.xpose.msra.mxu0 0.0
      %1035 = vmatprep.subr.mxu0 0.0
      %1036 = vmatpush2.xpose.msra.mxu0 0.0
      %1037 = vmatprep.subr.mxu0 0.0
      %1038 = vmatpush2.xpose.msra.mxu0 0.0
      %1039 = vmatprep.mubr.f32.mxu0 0.0
      %1040 = vmatmul.mubr.f32.gmra.mxu0 %v970
      %v1041 = vpop.f32.mrf.mxu0
      %v1042 = vadd.f32 0.0, %v1041
      %v1043 = vpop.f32.mrf.mxu0
      %1044 = vdwg.mxu0
      %v1045 = vmul.f32 %v1042, 0.35355338
      %v1046 = vadd.f32 %v1045, %v447
      %v1047 = vsel %vm451, %v1046, -inf
      %1048 = vmax.xlane.f32.xlu0 %v1047
      %v1049 = vpop.xlane.xlu0 %1048
      %v1050 = vsub.f32 %v1046, %v1049
      %v1051 = vmul.f32 %v1050, 1.442695
      %v1052 = vpow.pop %v1051
      %v1053 = vsel %vm451, %v1052, 0.0
      %1054 = vadd.xlane.f32.xlu0 %v1053
      %v1055 = vpop.xlane.xlu0 %1054
      %v1056 = vrcp.pop %v1055
      %v1057 = vmul.f32 %v1052, %v1056
      %v1059 = vsel %vm451, %v1057, 0
      %1061 = vmatprep.subr.mxu0 0.0
      %1062 = vmatpush1.msra.mxu0 0.0
      %1063 = vmatprep.subr.mxu0 0.0
      %1064 = vmatpush1.msra.mxu0 0.0
      %1065 = vmatprep.subr.mxu0 0.0
      %1066 = vmatpush1.msra.mxu0 0.0
      %1067 = vmatprep.subr.mxu0 0.0
      %1068 = vmatpush1.msra.mxu0 0.0
      %1069 = vmatprep.subr.mxu0 0.0
      %1070 = vmatpush1.msra.mxu0 0.0
      %1071 = vmatprep.subr.mxu0 0.0
      %1072 = vmatpush1.msra.mxu0 0.0
      %1073 = vmatprep.subr.mxu0 0.0
      %1074 = vmatpush1.msra.mxu0 0.0
      %1075 = vmatprep.subr.mxu0 0.0
      %1076 = vmatpush1.msra.mxu0 0.0
      %1077 = vmatprep.subr.mxu0 0.0
      %1078 = vmatpush1.msra.mxu0 0.0
      %1079 = vmatprep.subr.mxu0 0.0
      %1080 = vmatpush1.msra.mxu0 0.0
      %1081 = vmatprep.subr.mxu0 0.0
      %1082 = vmatpush1.msra.mxu0 0.0
      %1083 = vmatprep.subr.mxu0 0.0
      %1084 = vmatpush1.msra.mxu0 0.0
      %1085 = vmatprep.subr.mxu0 0.0
      %1086 = vmatpush1.msra.mxu0 0.0
      %1087 = vmatprep.subr.mxu0 0.0
      %1088 = vmatpush1.msra.mxu0 0.0
      %1089 = vmatprep.subr.mxu0 0.0
      %1090 = vmatpush1.msra.mxu0 0.0
      %1091 = vmatprep.subr.mxu0 0.0
      %1092 = vmatpush1.msra.mxu0 %v968
      %1093 = vmatprep.subr.mxu0 0.0
      %1094 = vmatpush2.msra.mxu0 0.0
      %1095 = vmatprep.subr.mxu0 0.0
      %1096 = vmatpush2.msra.mxu0 0.0
      %1097 = vmatprep.subr.mxu0 0.0
      %1098 = vmatpush2.msra.mxu0 0.0
      %1099 = vmatprep.subr.mxu0 0.0
      %1100 = vmatpush2.msra.mxu0 0.0
      %1101 = vmatprep.subr.mxu0 0.0
      %1102 = vmatpush2.msra.mxu0 0.0
      %1103 = vmatprep.subr.mxu0 0.0
      %1104 = vmatpush2.msra.mxu0 0.0
      %1105 = vmatprep.subr.mxu0 0.0
      %1106 = vmatpush2.msra.mxu0 0.0
      %1107 = vmatprep.subr.mxu0 0.0
      %1108 = vmatpush2.msra.mxu0 0.0
      %1109 = vmatprep.subr.mxu0 0.0
      %1110 = vmatpush2.msra.mxu0 0.0
      %1111 = vmatprep.subr.mxu0 0.0
      %1112 = vmatpush2.msra.mxu0 0.0
      %1113 = vmatprep.subr.mxu0 0.0
      %1114 = vmatpush2.msra.mxu0 0.0
      %1115 = vmatprep.subr.mxu0 0.0
      %1116 = vmatpush2.msra.mxu0 0.0
      %1117 = vmatprep.subr.mxu0 0.0
      %1118 = vmatpush2.msra.mxu0 0.0
      %1119 = vmatprep.subr.mxu0 0.0
      %1120 = vmatpush2.msra.mxu0 0.0
      %1121 = vmatprep.subr.mxu0 0.0
      %1122 = vmatpush2.msra.mxu0 0.0
      %1123 = vmatprep.subr.mxu0 0.0
      %1124 = vmatpush2.msra.mxu0 0.0
      %1125 = vmatprep.mubr.f32.mxu0 0.0
      %1126 = vmatmul.mubr.f32.gmra.mxu0 %v1059
      %v1127 = vpop.f32.mrf.mxu0
      %v1128 = vadd.f32 0.0, %v1127
      %v1129 = vpop.f32.mrf.mxu0
      %1130 = vdwg.mxu0
      %1132 = vrot.lane.b32.xlu0 %v1128, 24
      %v1133 = vpop.permute.xlu0 %1132
      %vm1135 = vcmask 261312
      %1136 = vst.msk [vmem:[#allocation2] sm:$0xff] %vm1135, %v1133
      %v1137 = vld [vmem:[#allocation2] sm:$0xff]
      %v1138 = vld [vmem:[%s5] sm:$0xff]
      %v1139 = vld [vmem:[%s5 + $0x8] sm:$0xff]
      %v1140 = vld [vmem:[%s5 + $0x10] sm:$0xff]
      %v1141 = vld [vmem:[%s5 + $0x18] sm:$0xff]
      %v1142 = vld [vmem:[%s6] sm:$0x1]
      %v1144 = vlaneseq
      %v1145 = vshrl.u32 %v1144, 7
      %v1146 = vsub.s32 0, %v1145
      %v1147 = vrot.slane %v1142, %v1146
      %vm1149 = vcmask 261120
      %v1151 = vsel %vm1149, %v1137, 0
      %1153 = vmatprep.subr.mxu0 0.0
      %1154 = vmatpush1.msra.mxu0 0.0
      %1155 = vmatprep.subr.mxu0 0.0
      %1156 = vmatpush1.msra.mxu0 0.0
      %1157 = vmatprep.subr.mxu0 0.0
      %1158 = vmatpush1.msra.mxu0 0.0
      %1159 = vmatprep.subr.mxu0 0.0
      %1160 = vmatpush1.msra.mxu0 0.0
      %1161 = vmatprep.subr.mxu0 0.0
      %1162 = vmatpush1.msra.mxu0 0.0
      %1163 = vmatprep.subr.mxu0 0.0
      %1164 = vmatpush1.msra.mxu0 0.0
      %1165 = vmatprep.subr.mxu0 0.0
      %1166 = vmatpush1.msra.mxu0 0.0
      %1167 = vmatprep.subr.mxu0 0.0
      %1168 = vmatpush1.msra.mxu0 0.0
      %1169 = vmatprep.subr.mxu0 0.0
      %1170 = vmatpush1.msra.mxu0 0.0
      %1171 = vmatprep.subr.mxu0 0.0
      %1172 = vmatpush1.msra.mxu0 0.0
      %1173 = vmatprep.subr.mxu0 0.0
      %1174 = vmatpush1.msra.mxu0 0.0
      %1175 = vmatprep.subr.mxu0 0.0
      %1176 = vmatpush1.msra.mxu0 0.0
      %1177 = vmatprep.subr.mxu0 0.0
      %1178 = vmatpush1.msra.mxu0 %v1141
      %1179 = vmatprep.subr.mxu0 0.0
      %1180 = vmatpush1.msra.mxu0 %v1140
      %1181 = vmatprep.subr.mxu0 0.0
      %1182 = vmatpush1.msra.mxu0 %v1139
      %1183 = vmatprep.subr.mxu0 0.0
      %1184 = vmatpush1.msra.mxu0 %v1138
      %1185 = vmatprep.subr.mxu0 0.0
      %1186 = vmatpush2.msra.mxu0 0.0
      %1187 = vmatprep.subr.mxu0 0.0
      %1188 = vmatpush2.msra.mxu0 0.0
      %1189 = vmatprep.subr.mxu0 0.0
      %1190 = vmatpush2.msra.mxu0 0.0
      %1191 = vmatprep.subr.mxu0 0.0
      %1192 = vmatpush2.msra.mxu0 0.0
      %1193 = vmatprep.subr.mxu0 0.0
      %1194 = vmatpush2.msra.mxu0 0.0
      %1195 = vmatprep.subr.mxu0 0.0
      %1196 = vmatpush2.msra.mxu0 0.0
      %1197 = vmatprep.subr.mxu0 0.0
      %1198 = vmatpush2.msra.mxu0 0.0
      %1199 = vmatprep.subr.mxu0 0.0
      %1200 = vmatpush2.msra.mxu0 0.0
      %1201 = vmatprep.subr.mxu0 0.0
      %1202 = vmatpush2.msra.mxu0 0.0
      %1203 = vmatprep.subr.mxu0 0.0
      %1204 = vmatpush2.msra.mxu0 0.0
      %1205 = vmatprep.subr.mxu0 0.0
      %1206 = vmatpush2.msra.mxu0 0.0
      %1207 = vmatprep.subr.mxu0 0.0
      %1208 = vmatpush2.msra.mxu0 0.0
      %1209 = vmatprep.subr.mxu0 0.0
      %1210 = vmatpush2.msra.mxu0 0.0
      %1211 = vmatprep.subr.mxu0 0.0
      %1212 = vmatpush2.msra.mxu0 0.0
      %1213 = vmatprep.subr.mxu0 0.0
      %1214 = vmatpush2.msra.mxu0 0.0
      %1215 = vmatprep.subr.mxu0 0.0
      %1216 = vmatpush2.msra.mxu0 0.0
      %1217 = vmatprep.mubr.f32.mxu0 0.0
      %1218 = vmatmul.mubr.f32.gmra.mxu0 %v1151
      %v1219 = vpop.f32.mrf.mxu0
      %v1220 = vadd.f32 %v1147, %v1219
      %v1221 = vpop.f32.mrf.mxu0
      %1222 = vdwg.mxu0
      %v1223 = vld [vmem:[%s439] sm:$0xff]
      %v1224 = vadd.f32 %v1220, %v1223
      %v1225 = vsel %vm1149, %v1224, 0.0
      %1226 = vadd.xlane.f32.xlu0 %v1225
      %v1227 = vpop.xlane.xlu0 %1226
      %v1228 = vrcp.pop 32.0
      %v1229 = vmul.f32 %v1227, %v1228
      %v1230 = vsub.f32 %v1224, %v1229
      %v1231 = vmul.f32 %v1230, %v1230
      %v1232 = vsel %vm1149, %v1231, 0.0
      %1233 = vadd.xlane.f32.xlu0 %v1232
      %v1234 = vpop.xlane.xlu0 %1233
      %v1235 = vmul.f32 %v1234, %v1228
      %v1236 = vadd.f32 %v1235, 1e-05
      %v1237 = vrsqrt.pop %v1236
      %v1238 = vmul.f32 %v1230, %v1237
      %v1239 = vld [vmem:[%s7] sm:$0x1]
      %v1241 = vlaneseq
      %v1242 = vshrl.u32 %v1241, 7
      %v1243 = vsub.s32 0, %v1242
      %v1244 = vrot.slane %v1239, %v1243
      %v1246 = vmul.f32 %v1238, %v1244
      %v1247 = vld [vmem:[%s8] sm:$0x1]
      %v1249 = vlaneseq
      %v1250 = vshrl.u32 %v1249, 7
      %v1251 = vsub.s32 0, %v1250
      %v1252 = vrot.slane %v1247, %v1251
      %v1254 = vadd.f32 %v1246, %v1252
      %1255 = vst.msk [vmem:[%s446] sm:$0xff] %vm1149, %v1254
      %p1256 = scmp.lt.s32.totalorder %s24, 1
      %s1257 = scalar_select %p1256, %s24, 1
      %p1258 = scmp.lt.s32.totalorder %s25, 0
      %s1259 = scalar_select %p1258, %s25, 0
      %s1260 = sadd.s32 %s1259, %s1257
      %s1261 = smul.addr %s1260, 8
      %s1262 = scalar_lea.vmem %s9, %s1261
      // Predicated region
      $region57: #{transformer_forward.39} parent=55 // pred_check
        %p1263 = pneg %p270
      $region58: #{transformer_forward.39} parent=55 // pred_check_branch
        %1265 = sbr.rel (%p1263) target = $region60
      $region59: #{transformer_forward.39} parent=55 // pred_region
        _
      $region60: #{transformer_forward.39} parent=55 // pred_fallthru
        _
    $region56: #{transformer_forward.39} parent=5 // pred_fallthru
      _
    %p1266 = scmp.le.s32.totalorder 2, %s15
    // Predicated region
    $region61: #{transformer_forward.39} parent=5 // pred_check
      %p1267 = pneg %p1266
    $region62: #{transformer_forward.39} parent=5 // pred_check_branch
      %1269 = sbr.rel (%p1267) target = $region64
    $region63: #{transformer_forward.39} parent=5 // pred_region
      %s1270 = ssub.s32 %s15, 2
      // Predicated region
      $region65: #{transformer_forward.39} parent=63 // pred_check
        %p1271 = pneg %p276
      $region66: #{transformer_forward.39} parent=63 // pred_check_branch
        %1273 = sbr.rel (%p1271) target = $region68
      $region67: #{transformer_forward.39} parent=63 // pred_region
        %p1274 = scmp.lt.s32.totalorder %s26, 1
        %s1275 = scalar_select %p1274, %s26, 1
        %p1276 = scmp.lt.s32.totalorder %s27, 0
        %s1277 = scalar_select %p1276, %s27, 0
        %s1278 = sadd.s32 %s1277, %s1275
        %s1279 = smul.addr %s1278, 8
        %s1280 = scalar_lea.vmem %s9, %s1279
      $region68: #{transformer_forward.39} parent=63 // pred_fallthru
        _
    $region64: #{transformer_forward.39} parent=5 // pred_fallthru
      _
  $region6: #{transformer_forward.39} parent=0 // loop_footer
    %s19 = sadd.s32 1, %s15
  $region7: #{transformer_forward.39} parent=0 // loop_footer_branch
    %14 = sbr.rel target = $region3
  $region8: #{transformer_forward.39} parent=0 // loop_exit
    _

// kernel: transformer_forward.31
$region0: #{transformer_forward.31}
  #allocation0 [shape = 'u32[]', space=smem, size = 0x4, offset = 0x4, fixed_abs, tag = 'smem constant byte address 0x4 - core index']
  #allocation1 [shape = 'u32[144,128]{1,0:T(1,128)}', space=vmem, size = 0x12000, scoped, tag = 'internal scratch']
  #allocation2 [shape = 'f32[16,32]{1,0:T(8,128)}', space=vmem, size = 0x2000, scoped, tag = 'scratch operand']
  %s0 = inlined_call_operand.vmem [shape: f32[16,64], index: 0, kind: input, shape index: {}]
  %s1 = inlined_call_operand.vmem [shape: f32[64,32], index: 1, kind: input, shape index: {}]
  %s2 = inlined_call_operand.vmem [shape: f32[1,32], index: 2, kind: input, shape index: {}]
  %s3 = inlined_call_operand.vmem [shape: f32[16,32], index: 3, kind: input, shape index: {}]
  %s4 = inlined_call_operand.vmem [shape: f32[1,32], index: 4, kind: input, shape index: {}]
  %s5 = inlined_call_operand.vmem [shape: f32[1,32], index: 5, kind: input, shape index: {}]
  %s6 = inlined_call_operand.vmem [shape: f32[16,32], index: 6, kind: output, shape index: {}]
  %s7 = sld [smem:[#allocation0]]
  $region42: #{transformer_forward.31} parent=0
    _
  %s9 = ssub.s32 1, %s7
  %s10 = scalar_select 0, %s9, %s7
  // Predicated region
  $region2: #{transformer_forward.31} parent=0 // pred_check
    _
  $region3: #{transformer_forward.31} parent=0 // pred_check_branch
    %12 = sbr.rel (0) target = $region5
  $region4: #{transformer_forward.31} parent=0 // pred_region
    _
  $region5: #{transformer_forward.31} parent=0 // pred_fallthru
    _
  // Predicated region
  $region6: #{transformer_forward.31} parent=0 // pred_check
    _
  $region7: #{transformer_forward.31} parent=0 // pred_check_branch
    %14 = sbr.rel (0) target = $region9
  $region8: #{transformer_forward.31} parent=0 // pred_region
    _
  $region9: #{transformer_forward.31} parent=0 // pred_fallthru
    _
  // Predicated region
  $region10: #{transformer_forward.31} parent=0 // pred_check
    _
  $region11: #{transformer_forward.31} parent=0 // pred_check_branch
    %16 = sbr.rel (0) target = $region13
  $region12: #{transformer_forward.31} parent=0 // pred_region
    _
  $region13: #{transformer_forward.31} parent=0 // pred_fallthru
    _
  // Predicated region
  $region14: #{transformer_forward.31} parent=0 // pred_check
    _
  $region15: #{transformer_forward.31} parent=0 // pred_check_branch
    %18 = sbr.rel (0) target = $region17
  $region16: #{transformer_forward.31} parent=0 // pred_region
    _
  $region17: #{transformer_forward.31} parent=0 // pred_fallthru
    _
  // Predicated region
  $region18: #{transformer_forward.31} parent=0 // pred_check
    _
  $region19: #{transformer_forward.31} parent=0 // pred_check_branch
    %20 = sbr.rel (0) target = $region21
  $region20: #{transformer_forward.31} parent=0 // pred_region
    _
  $region21: #{transformer_forward.31} parent=0 // pred_fallthru
    _
  // Predicated region
  $region22: #{transformer_forward.31} parent=0 // pred_check
    _
  $region23: #{transformer_forward.31} parent=0 // pred_check_branch
    %22 = sbr.rel (0) target = $region25
  $region24: #{transformer_forward.31} parent=0 // pred_region
    _
  $region25: #{transformer_forward.31} parent=0 // pred_fallthru
    _
  %p23 = scmp.eq.s32.totalorder 0, 0
  // Predicated region
  $region26: #{transformer_forward.31} parent=0 // pred_check
    %p24 = pneg %p23
  $region27: #{transformer_forward.31} parent=0 // pred_check_branch
    %26 = sbr.rel (%p24) target = $region29
  $region28: #{transformer_forward.31} parent=0 // pred_region
    %vm27 = vcmask 261120
    %28 = vst.msk [vmem:[#allocation2] sm:$0xff] %vm27, 0.0
    %29 = vst.msk [vmem:[#allocation2 + $0x8] sm:$0xff] %vm27, 0.0
  $region29: #{transformer_forward.31} parent=0 // pred_fallthru
    _
  %v30 = vld [vmem:[#allocation2] sm:$0xff]
  %v31 = vld [vmem:[#allocation2 + $0x8] sm:$0xff]
  %v32 = vld [vmem:[%s0] sm:$0xff]
  %v33 = vld [vmem:[%s0 + $0x8] sm:$0xff]
  %v34 = vld [vmem:[%s1] sm:$0xff]
  %v35 = vld [vmem:[%s1 + $0x8] sm:$0xff]
  %v36 = vld [vmem:[%s1 + $0x10] sm:$0xff]
  %v37 = vld [vmem:[%s1 + $0x18] sm:$0xff]
  %v38 = vld [vmem:[%s1 + $0x20] sm:$0xff]
  %v39 = vld [vmem:[%s1 + $0x28] sm:$0xff]
  %v40 = vld [vmem:[%s1 + $0x30] sm:$0xff]
  %v41 = vld [vmem:[%s1 + $0x38] sm:$0xff]
  %vm42 = vcmask 523264
  %v44 = vsel %vm42, %v32, 0
  %v47 = vsel %vm42, %v33, 0
  %49 = vmatprep.subr.mxu0 0.0
  %50 = vmatpush1.msra.mxu0 0.0
  %51 = vmatprep.subr.mxu0 0.0
  %52 = vmatpush1.msra.mxu0 0.0
  %53 = vmatprep.subr.mxu0 0.0
  %54 = vmatpush1.msra.mxu0 0.0
  %55 = vmatprep.subr.mxu0 0.0
  %56 = vmatpush1.msra.mxu0 0.0
  %57 = vmatprep.subr.mxu0 0.0
  %58 = vmatpush1.msra.mxu0 0.0
  %59 = vmatprep.subr.mxu0 0.0
  %60 = vmatpush1.msra.mxu0 0.0
  %61 = vmatprep.subr.mxu0 0.0
  %62 = vmatpush1.msra.mxu0 0.0
  %63 = vmatprep.subr.mxu0 0.0
  %64 = vmatpush1.msra.mxu0 0.0
  %65 = vmatprep.subr.mxu0 0.0
  %66 = vmatpush1.msra.mxu0 %v41
  %67 = vmatprep.subr.mxu0 0.0
  %68 = vmatpush1.msra.mxu0 %v40
  %69 = vmatprep.subr.mxu0 0.0
  %70 = vmatpush1.msra.mxu0 %v39
  %71 = vmatprep.subr.mxu0 0.0
  %72 = vmatpush1.msra.mxu0 %v38
  %73 = vmatprep.subr.mxu0 0.0
  %74 = vmatpush1.msra.mxu0 %v37
  %75 = vmatprep.subr.mxu0 0.0
  %76 = vmatpush1.msra.mxu0 %v36
  %77 = vmatprep.subr.mxu0 0.0
  %78 = vmatpush1.msra.mxu0 %v35
  %79 = vmatprep.subr.mxu0 0.0
  %80 = vmatpush1.msra.mxu0 %v34
  %81 = vmatprep.subr.mxu0 0.0
  %82 = vmatpush2.msra.mxu0 0.0
  %83 = vmatprep.subr.mxu0 0.0
  %84 = vmatpush2.msra.mxu0 0.0
  %85 = vmatprep.subr.mxu0 0.0
  %86 = vmatpush2.msra.mxu0 0.0
  %87 = vmatprep.subr.mxu0 0.0
  %88 = vmatpush2.msra.mxu0 0.0
  %89 = vmatprep.subr.mxu0 0.0
  %90 = vmatpush2.msra.mxu0 0.0
  %91 = vmatprep.subr.mxu0 0.0
  %92 = vmatpush2.msra.mxu0 0.0
  %93 = vmatprep.subr.mxu0 0.0
  %94 = vmatpush2.msra.mxu0 0.0
  %95 = vmatprep.subr.mxu0 0.0
  %96 = vmatpush2.msra.mxu0 0.0
  %97 = vmatprep.subr.mxu0 0.0
  %98 = vmatpush2.msra.mxu0 0.0
  %99 = vmatprep.subr.mxu0 0.0
  %100 = vmatpush2.msra.mxu0 0.0
  %101 = vmatprep.subr.mxu0 0.0
  %102 = vmatpush2.msra.mxu0 0.0
  %103 = vmatprep.subr.mxu0 0.0
  %104 = vmatpush2.msra.mxu0 0.0
  %105 = vmatprep.subr.mxu0 0.0
  %106 = vmatpush2.msra.mxu0 0.0
  %107 = vmatprep.subr.mxu0 0.0
  %108 = vmatpush2.msra.mxu0 0.0
  %109 = vmatprep.subr.mxu0 0.0
  %110 = vmatpush2.msra.mxu0 0.0
  %111 = vmatprep.subr.mxu0 0.0
  %112 = vmatpush2.msra.mxu0 0.0
  %113 = vmatprep.mubr.f32.mxu0 0.0
  %114 = vmatmul.mubr.f32.gmra.mxu0 %v44
  %v115 = vpop.f32.mrf.mxu0
  %v116 = vadd.f32 0.0, %v115
  %v117 = vpop.f32.mrf.mxu0
  %118 = vmatprep.mubr.f32.mxu0 0.0
  %119 = vmatmul.mubr.f32.gmra.mxu0 %v47
  %v120 = vpop.f32.mrf.mxu0
  %v121 = vadd.f32 0.0, %v120
  %v122 = vpop.f32.mrf.mxu0
  %123 = vdwg.mxu0
  %v124 = vadd.f32 %v30, %v116
  %v125 = vadd.f32 %v31, %v121
  %vm126 = vcmask 261120
  %127 = vst.msk [vmem:[#allocation2] sm:$0xff] %vm126, %v124
  %128 = vst.msk [vmem:[#allocation2 + $0x8] sm:$0xff] %vm126, %v125
  // Predicated region
  $region30: #{transformer_forward.31} parent=0 // pred_check
    %p129 = pneg %p23
  $region31: #{transformer_forward.31} parent=0 // pred_check_branch
    %131 = sbr.rel (%p129) target = $region33
  $region32: #{transformer_forward.31} parent=0 // pred_region
    %v132 = vld [vmem:[#allocation2] sm:$0xff]
    %v133 = vld [vmem:[#allocation2 + $0x8] sm:$0xff]
    %v134 = vld [vmem:[%s2] sm:$0x1]
    %v136 = vlaneseq
    %v137 = vshrl.u32 %v136, 7
    %v138 = vsub.s32 0, %v137
    %v139 = vrot.slane %v134, %v138
    %v141 = vadd.f32 %v132, %v139
    %v142 = vadd.f32 %v133, %v139
    %v143 = vld [vmem:[%s3] sm:$0xff]
    %v144 = vld [vmem:[%s3 + $0x8] sm:$0xff]
    %v145 = vadd.f32 %v141, %v143
    %v146 = vadd.f32 %v142, %v144
    %v147 = vsel %vm126, %v145, 0.0
    %148 = vadd.xlane.f32.xlu0 %v147
    %v149 = vpop.xlane.xlu0 %148
    %v150 = vsel %vm126, %v146, 0.0
    %151 = vadd.xlane.f32.xlu0 %v150
    %v152 = vpop.xlane.xlu0 %151
    %v153 = vrcp.pop 32.0
    %v154 = vmul.f32 %v149, %v153
    %v155 = vmul.f32 %v152, %v153
    %v156 = vsub.f32 %v145, %v154
    %v157 = vsub.f32 %v146, %v155
    %v158 = vmul.f32 %v156, %v156
    %v159 = vmul.f32 %v157, %v157
    %v160 = vsel %vm126, %v158, 0.0
    %161 = vadd.xlane.f32.xlu0 %v160
    %v162 = vpop.xlane.xlu0 %161
    %v163 = vsel %vm126, %v159, 0.0
    %164 = vadd.xlane.f32.xlu0 %v163
    %v165 = vpop.xlane.xlu0 %164
    %v166 = vmul.f32 %v162, %v153
    %v167 = vmul.f32 %v165, %v153
    %v168 = vadd.f32 %v166, 1e-05
    %v169 = vadd.f32 %v167, 1e-05
    %v170 = vrsqrt.pop %v168
    %v171 = vrsqrt.pop %v169
    %v172 = vmul.f32 %v156, %v170
    %v173 = vmul.f32 %v157, %v171
    %v174 = vld [vmem:[%s4] sm:$0x1]
    %v176 = vlaneseq
    %v177 = vshrl.u32 %v176, 7
    %v178 = vsub.s32 0, %v177
    %v179 = vrot.slane %v174, %v178
    %v181 = vmul.f32 %v172, %v179
    %v182 = vmul.f32 %v173, %v179
    %v183 = vld [vmem:[%s5] sm:$0x1]
    %v185 = vlaneseq
    %v186 = vshrl.u32 %v185, 7
    %v187 = vsub.s32 0, %v186
    %v188 = vrot.slane %v183, %v187
    %v190 = vadd.f32 %v181, %v188
    %v191 = vadd.f32 %v182, %v188
    %192 = vst.msk [vmem:[%s6] sm:$0xff] %vm126, %v190
    %193 = vst.msk [vmem:[%s6 + $0x8] sm:$0xff] %vm126, %v191
  $region33: #{transformer_forward.31} parent=0 // pred_fallthru
    _
  // Predicated region
  $region34: #{transformer_forward.31} parent=0 // pred_check
    _
  $region35: #{transformer_forward.31} parent=0 // pred_check_branch
    %195 = sbr.rel (0) target = $region37
  $region36: #{transformer_forward.31} parent=0 // pred_region
    _
  $region37: #{transformer_forward.31} parent=0 // pred_fallthru
    _
  // Predicated region
  $region38: #{transformer_forward.31} parent=0 // pred_check
    _
  $region39: #{transformer_forward.31} parent=0 // pred_check_branch
    %197 = sbr.rel (0) target = $region41
  $region40: #{transformer_forward.31} parent=0 // pred_region
    _
  $region41: #{transformer_forward.31} parent=0 // pred_fallthru
    _

// kernel: transformer_forward.36
$region0: #{transformer_forward.36}
  #allocation0 [shape = 'u32[]', space=smem, size = 0x4, offset = 0x4, fixed_abs, tag = 'smem constant byte address 0x4 - core index']
  #allocation1 [shape = 'u32[144,128]{1,0:T(1,128)}', space=vmem, size = 0x12000, scoped, tag = 'internal scratch']
  %s0 = inlined_call_operand.vmem [shape: f32[16,32], index: 0, kind: input, shape index: {}]
  %s1 = inlined_call_operand.vmem [shape: f32[1,32], index: 1, kind: input, shape index: {}]
  %s2 = inlined_call_operand.vmem [shape: f32[1,32], index: 2, kind: input, shape index: {}]
  %s3 = inlined_call_operand.vmem [shape: f32[16,32], index: 3, kind: output, shape index: {}]
  %s4 = sld [smem:[#allocation0]]
  $region22: #{transformer_forward.36} parent=0
    _
  %s6 = ssub.s32 1, %s4
  %s7 = scalar_select 0, %s6, %s4
  // Predicated region
  $region2: #{transformer_forward.36} parent=0 // pred_check
    _
  $region3: #{transformer_forward.36} parent=0 // pred_check_branch
    %9 = sbr.rel (0) target = $region5
  $region4: #{transformer_forward.36} parent=0 // pred_region
    _
  $region5: #{transformer_forward.36} parent=0 // pred_fallthru
    _
  // Predicated region
  $region6: #{transformer_forward.36} parent=0 // pred_check
    _
  $region7: #{transformer_forward.36} parent=0 // pred_check_branch
    %11 = sbr.rel (0) target = $region9
  $region8: #{transformer_forward.36} parent=0 // pred_region
    _
  $region9: #{transformer_forward.36} parent=0 // pred_fallthru
    _
  // Predicated region
  $region10: #{transformer_forward.36} parent=0 // pred_check
    _
  $region11: #{transformer_forward.36} parent=0 // pred_check_branch
    %13 = sbr.rel (0) target = $region13
  $region12: #{transformer_forward.36} parent=0 // pred_region
    _
  $region13: #{transformer_forward.36} parent=0 // pred_fallthru
    _
  %v14 = vld [vmem:[%s0] sm:$0xff]
  %v15 = vld [vmem:[%s0 + $0x8] sm:$0xff]
  %vm16 = vcmask 261120
  %v17 = vsel %vm16, %v14, 0.0
  %18 = vadd.xlane.f32.xlu0 %v17
  %v19 = vpop.xlane.xlu0 %18
  %v20 = vsel %vm16, %v15, 0.0
  %21 = vadd.xlane.f32.xlu0 %v20
  %v22 = vpop.xlane.xlu0 %21
  %v23 = vrcp.pop 32.0
  %v24 = vmul.f32 %v19, %v23
  %v25 = vmul.f32 %v22, %v23
  %v26 = vsub.f32 %v14, %v24
  %v27 = vsub.f32 %v15, %v25
  %v28 = vmul.f32 %v26, %v26
  %v29 = vmul.f32 %v27, %v27
  %v30 = vsel %vm16, %v28, 0.0
  %31 = vadd.xlane.f32.xlu0 %v30
  %v32 = vpop.xlane.xlu0 %31
  %v33 = vsel %vm16, %v29, 0.0
  %34 = vadd.xlane.f32.xlu0 %v33
  %v35 = vpop.xlane.xlu0 %34
  %v36 = vmul.f32 %v32, %v23
  %v37 = vmul.f32 %v35, %v23
  %v38 = vadd.f32 %v36, 1e-05
  %v39 = vadd.f32 %v37, 1e-05
  %v40 = vrsqrt.pop %v38
  %v41 = vrsqrt.pop %v39
  %v42 = vmul.f32 %v26, %v40
  %v43 = vmul.f32 %v27, %v41
  %v44 = vld [vmem:[%s1] sm:$0x1]
  %v46 = vlaneseq
  %v47 = vshrl.u32 %v46, 7
  %v48 = vsub.s32 0, %v47
  %v49 = vrot.slane %v44, %v48
  %v51 = vmul.f32 %v42, %v49
  %v52 = vmul.f32 %v43, %v49
  %v53 = vld [vmem:[%s2] sm:$0x1]
  %v55 = vlaneseq
  %v56 = vshrl.u32 %v55, 7
  %v57 = vsub.s32 0, %v56
  %v58 = vrot.slane %v53, %v57
  %v60 = vadd.f32 %v51, %v58
  %v61 = vadd.f32 %v52, %v58
  %62 = vst.msk [vmem:[%s3] sm:$0xff] %vm16, %v60
  %63 = vst.msk [vmem:[%s3 + $0x8] sm:$0xff] %vm16, %v61
  // Predicated region
  $region14: #{transformer_forward.36} parent=0 // pred_check
    _
  $region15: #{transformer_forward.36} parent=0 // pred_check_branch
    %65 = sbr.rel (0) target = $region17
  $region16: #{transformer_forward.36} parent=0 // pred_region
    _
  $region17: #{transformer_forward.36} parent=0 // pred_fallthru
    _
  // Predicated region
  $region18: #{transformer_forward.36} parent=0 // pred_check
    _
  $region19: #{transformer_forward.36} parent=0 // pred_check_branch
    %67 = sbr.rel (0) target = $region21
  $region20: #{transformer_forward.36} parent=0 // pred_region
    _
  $region21: #{transformer_forward.36} parent=0 // pred_fallthru
    _

// kernel: transformer_forward.41
$region0: #{transformer_forward.41}
  #allocation0 [shape = 'u32[]', space=smem, size = 0x4, offset = 0x4, fixed_abs, tag = 'smem constant byte address 0x4 - core index']
  #allocation1 [shape = 'u32[144,128]{1,0:T(1,128)}', space=vmem, size = 0x12000, scoped, tag = 'internal scratch']
  #allocation2 [shape = 'f32[16,64]{1,0:T(8,128)}', space=vmem, size = 0x2000, scoped, tag = 'scratch operand']
  %s0 = inlined_call_operand.vmem [shape: f32[16,32], index: 0, kind: input, shape index: {}]
  %s1 = inlined_call_operand.vmem [shape: f32[32,64], index: 1, kind: input, shape index: {}]
  %s2 = inlined_call_operand.vmem [shape: f32[1,64], index: 2, kind: input, shape index: {}]
  %s3 = inlined_call_operand.vmem [shape: f32[16,64], index: 3, kind: output, shape index: {}]
  %s4 = sld [smem:[#allocation0]]
  $region30: #{transformer_forward.41} parent=0
    _
  %s6 = ssub.s32 1, %s4
  %s7 = scalar_select 0, %s6, %s4
  // Predicated region
  $region2: #{transformer_forward.41} parent=0 // pred_check
    _
  $region3: #{transformer_forward.41} parent=0 // pred_check_branch
    %9 = sbr.rel (0) target = $region5
  $region4: #{transformer_forward.41} parent=0 // pred_region
    _
  $region5: #{transformer_forward.41} parent=0 // pred_fallthru
    _
  // Predicated region
  $region6: #{transformer_forward.41} parent=0 // pred_check
    _
  $region7: #{transformer_forward.41} parent=0 // pred_check_branch
    %11 = sbr.rel (0) target = $region9
  $region8: #{transformer_forward.41} parent=0 // pred_region
    _
  $region9: #{transformer_forward.41} parent=0 // pred_fallthru
    _
  // Predicated region
  $region10: #{transformer_forward.41} parent=0 // pred_check
    _
  $region11: #{transformer_forward.41} parent=0 // pred_check_branch
    %13 = sbr.rel (0) target = $region13
  $region12: #{transformer_forward.41} parent=0 // pred_region
    _
  $region13: #{transformer_forward.41} parent=0 // pred_fallthru
    _
  %p14 = scmp.eq.s32.totalorder 0, 0
  // Predicated region
  $region14: #{transformer_forward.41} parent=0 // pred_check
    %p15 = pneg %p14
  $region15: #{transformer_forward.41} parent=0 // pred_check_branch
    %17 = sbr.rel (%p15) target = $region17
  $region16: #{transformer_forward.41} parent=0 // pred_region
    %vm18 = vcmask 523264
    %19 = vst.msk [vmem:[#allocation2] sm:$0xff] %vm18, 0.0
    %20 = vst.msk [vmem:[#allocation2 + $0x8] sm:$0xff] %vm18, 0.0
  $region17: #{transformer_forward.41} parent=0 // pred_fallthru
    _
  %v21 = vld [vmem:[#allocation2] sm:$0xff]
  %v22 = vld [vmem:[#allocation2 + $0x8] sm:$0xff]
  %v23 = vld [vmem:[%s0] sm:$0xff]
  %v24 = vld [vmem:[%s0 + $0x8] sm:$0xff]
  %v25 = vld [vmem:[%s1] sm:$0xff]
  %v26 = vld [vmem:[%s1 + $0x8] sm:$0xff]
  %v27 = vld [vmem:[%s1 + $0x10] sm:$0xff]
  %v28 = vld [vmem:[%s1 + $0x18] sm:$0xff]
  %vm29 = vcmask 261120
  %v31 = vsel %vm29, %v23, 0
  %v34 = vsel %vm29, %v24, 0
  %36 = vmatprep.subr.mxu0 0.0
  %37 = vmatpush1.msra.mxu0 0.0
  %38 = vmatprep.subr.mxu0 0.0
  %39 = vmatpush1.msra.mxu0 0.0
  %40 = vmatprep.subr.mxu0 0.0
  %41 = vmatpush1.msra.mxu0 0.0
  %42 = vmatprep.subr.mxu0 0.0
  %43 = vmatpush1.msra.mxu0 0.0
  %44 = vmatprep.subr.mxu0 0.0
  %45 = vmatpush1.msra.mxu0 0.0
  %46 = vmatprep.subr.mxu0 0.0
  %47 = vmatpush1.msra.mxu0 0.0
  %48 = vmatprep.subr.mxu0 0.0
  %49 = vmatpush1.msra.mxu0 0.0
  %50 = vmatprep.subr.mxu0 0.0
  %51 = vmatpush1.msra.mxu0 0.0
  %52 = vmatprep.subr.mxu0 0.0
  %53 = vmatpush1.msra.mxu0 0.0
  %54 = vmatprep.subr.mxu0 0.0
  %55 = vmatpush1.msra.mxu0 0.0
  %56 = vmatprep.subr.mxu0 0.0
  %57 = vmatpush1.msra.mxu0 0.0
  %58 = vmatprep.subr.mxu0 0.0
  %59 = vmatpush1.msra.mxu0 0.0
  %60 = vmatprep.subr.mxu0 0.0
  %61 = vmatpush1.msra.mxu0 %v28
  %62 = vmatprep.subr.mxu0 0.0
  %63 = vmatpush1.msra.mxu0 %v27
  %64 = vmatprep.subr.mxu0 0.0
  %65 = vmatpush1.msra.mxu0 %v26
  %66 = vmatprep.subr.mxu0 0.0
  %67 = vmatpush1.msra.mxu0 %v25
  %68 = vmatprep.subr.mxu0 0.0
  %69 = vmatpush2.msra.mxu0 0.0
  %70 = vmatprep.subr.mxu0 0.0
  %71 = vmatpush2.msra.mxu0 0.0
  %72 = vmatprep.subr.mxu0 0.0
  %73 = vmatpush2.msra.mxu0 0.0
  %74 = vmatprep.subr.mxu0 0.0
  %75 = vmatpush2.msra.mxu0 0.0
  %76 = vmatprep.subr.mxu0 0.0
  %77 = vmatpush2.msra.mxu0 0.0
  %78 = vmatprep.subr.mxu0 0.0
  %79 = vmatpush2.msra.mxu0 0.0
  %80 = vmatprep.subr.mxu0 0.0
  %81 = vmatpush2.msra.mxu0 0.0
  %82 = vmatprep.subr.mxu0 0.0
  %83 = vmatpush2.msra.mxu0 0.0
  %84 = vmatprep.subr.mxu0 0.0
  %85 = vmatpush2.msra.mxu0 0.0
  %86 = vmatprep.subr.mxu0 0.0
  %87 = vmatpush2.msra.mxu0 0.0
  %88 = vmatprep.subr.mxu0 0.0
  %89 = vmatpush2.msra.mxu0 0.0
  %90 = vmatprep.subr.mxu0 0.0
  %91 = vmatpush2.msra.mxu0 0.0
  %92 = vmatprep.subr.mxu0 0.0
  %93 = vmatpush2.msra.mxu0 0.0
  %94 = vmatprep.subr.mxu0 0.0
  %95 = vmatpush2.msra.mxu0 0.0
  %96 = vmatprep.subr.mxu0 0.0
  %97 = vmatpush2.msra.mxu0 0.0
  %98 = vmatprep.subr.mxu0 0.0
  %99 = vmatpush2.msra.mxu0 0.0
  %100 = vmatprep.mubr.f32.mxu0 0.0
  %101 = vmatmul.mubr.f32.gmra.mxu0 %v31
  %v102 = vpop.f32.mrf.mxu0
  %v103 = vadd.f32 0.0, %v102
  %v104 = vpop.f32.mrf.mxu0
  %105 = vmatprep.mubr.f32.mxu0 0.0
  %106 = vmatmul.mubr.f32.gmra.mxu0 %v34
  %v107 = vpop.f32.mrf.mxu0
  %v108 = vadd.f32 0.0, %v107
  %v109 = vpop.f32.mrf.mxu0
  %110 = vdwg.mxu0
  %v111 = vadd.f32 %v21, %v103
  %v112 = vadd.f32 %v22, %v108
  %vm113 = vcmask 523264
  %114 = vst.msk [vmem:[#allocation2] sm:$0xff] %vm113, %v111
  %115 = vst.msk [vmem:[#allocation2 + $0x8] sm:$0xff] %vm113, %v112
  // Predicated region
  $region18: #{transformer_forward.41} parent=0 // pred_check
    %p116 = pneg %p14
  $region19: #{transformer_forward.41} parent=0 // pred_check_branch
    %118 = sbr.rel (%p116) target = $region21
  $region20: #{transformer_forward.41} parent=0 // pred_region
    %v119 = vld [vmem:[#allocation2] sm:$0xff]
    %v120 = vld [vmem:[#allocation2 + $0x8] sm:$0xff]
    %v121 = vld [vmem:[%s2] sm:$0x1]
    %v123 = vlaneseq
    %v124 = vshrl.u32 %v123, 7
    %v125 = vsub.s32 0, %v124
    %v126 = vrot.slane %v121, %v125
    %v128 = vadd.f32 %v119, %v126
    %v129 = vadd.f32 %v120, %v126
    %130 = vst.msk [vmem:[%s3] sm:$0xff] %vm113, %v128
    %131 = vst.msk [vmem:[%s3 + $0x8] sm:$0xff] %vm113, %v129
  $region21: #{transformer_forward.41} parent=0 // pred_fallthru
    _
  // Predicated region
  $region22: #{transformer_forward.41} parent=0 // pred_check
    _
  $region23: #{transformer_forward.41} parent=0 // pred_check_branch
    %133 = sbr.rel (0) target = $region25
  $region24: #{transformer_forward.41} parent=0 // pred_region
    _
  $region25: #{transformer_forward.41} parent=0 // pred_fallthru
    _
  // Predicated region
  $region26: #{transformer_forward.41} parent=0 // pred_check
    _
  $region27: #{transformer_forward.41} parent=0 // pred_check_branch
    %135 = sbr.rel (0) target = $region29
  $region28: #{transformer_forward.41} parent=0 // pred_region
    _
  $region29: #{transformer_forward.41} parent=0 // pred_fallthru
    _

// kernel: transformer_forward.53
$region0: #{transformer_forward.53}
  #allocation0 [shape = 'u32[]', space=smem, size = 0x4, offset = 0x4, fixed_abs, tag = 'smem constant byte address 0x4 - core index']
  #allocation1 [shape = 'u32[144,128]{1,0:T(1,128)}', space=vmem, size = 0x12000, scoped, tag = 'internal scratch']
  #allocation2 [shape = 'f32[16,4]{1,0:T(8,128)}', space=vmem, size = 0x2000, scoped, tag = 'scratch operand']
  %s0 = inlined_call_operand.vmem [shape: f32[16,32], index: 0, kind: input, shape index: {}]
  %s1 = inlined_call_operand.vmem [shape: f32[32,4], index: 1, kind: input, shape index: {}]
  %s2 = inlined_call_operand.vmem [shape: f32[1,4], index: 2, kind: input, shape index: {}]
  %s3 = inlined_call_operand.vmem [shape: f32[16,4], index: 3, kind: output, shape index: {}]
  %s4 = sld [smem:[#allocation0]]
  $region30: #{transformer_forward.53} parent=0
    _
  %s6 = ssub.s32 1, %s4
  %s7 = scalar_select 0, %s6, %s4
  // Predicated region
  $region2: #{transformer_forward.53} parent=0 // pred_check
    _
  $region3: #{transformer_forward.53} parent=0 // pred_check_branch
    %9 = sbr.rel (0) target = $region5
  $region4: #{transformer_forward.53} parent=0 // pred_region
    _
  $region5: #{transformer_forward.53} parent=0 // pred_fallthru
    _
  // Predicated region
  $region6: #{transformer_forward.53} parent=0 // pred_check
    _
  $region7: #{transformer_forward.53} parent=0 // pred_check_branch
    %11 = sbr.rel (0) target = $region9
  $region8: #{transformer_forward.53} parent=0 // pred_region
    _
  $region9: #{transformer_forward.53} parent=0 // pred_fallthru
    _
  // Predicated region
  $region10: #{transformer_forward.53} parent=0 // pred_check
    _
  $region11: #{transformer_forward.53} parent=0 // pred_check_branch
    %13 = sbr.rel (0) target = $region13
  $region12: #{transformer_forward.53} parent=0 // pred_region
    _
  $region13: #{transformer_forward.53} parent=0 // pred_fallthru
    _
  %p14 = scmp.eq.s32.totalorder 0, 0
  // Predicated region
  $region14: #{transformer_forward.53} parent=0 // pred_check
    %p15 = pneg %p14
  $region15: #{transformer_forward.53} parent=0 // pred_check_branch
    %17 = sbr.rel (%p15) target = $region17
  $region16: #{transformer_forward.53} parent=0 // pred_region
    %vm18 = vcmask 31744
    %19 = vst.msk [vmem:[#allocation2] sm:$0xff] %vm18, 0.0
    %20 = vst.msk [vmem:[#allocation2 + $0x8] sm:$0xff] %vm18, 0.0
  $region17: #{transformer_forward.53} parent=0 // pred_fallthru
    _
  %v21 = vld [vmem:[#allocation2] sm:$0xff]
  %v22 = vld [vmem:[#allocation2 + $0x8] sm:$0xff]
  %v23 = vld [vmem:[%s0] sm:$0xff]
  %v24 = vld [vmem:[%s0 + $0x8] sm:$0xff]
  %v25 = vld [vmem:[%s1] sm:$0xff]
  %v26 = vld [vmem:[%s1 + $0x8] sm:$0xff]
  %v27 = vld [vmem:[%s1 + $0x10] sm:$0xff]
  %v28 = vld [vmem:[%s1 + $0x18] sm:$0xff]
  %vm29 = vcmask 261120
  %v31 = vsel %vm29, %v23, 0
  %v34 = vsel %vm29, %v24, 0
  %36 = vmatprep.subr.mxu0 0.0
  %37 = vmatpush1.msra.mxu0 0.0
  %38 = vmatprep.subr.mxu0 0.0
  %39 = vmatpush1.msra.mxu0 0.0
  %40 = vmatprep.subr.mxu0 0.0
  %41 = vmatpush1.msra.mxu0 0.0
  %42 = vmatprep.subr.mxu0 0.0
  %43 = vmatpush1.msra.mxu0 0.0
  %44 = vmatprep.subr.mxu0 0.0
  %45 = vmatpush1.msra.mxu0 0.0
  %46 = vmatprep.subr.mxu0 0.0
  %47 = vmatpush1.msra.mxu0 0.0
  %48 = vmatprep.subr.mxu0 0.0
  %49 = vmatpush1.msra.mxu0 0.0
  %50 = vmatprep.subr.mxu0 0.0
  %51 = vmatpush1.msra.mxu0 0.0
  %52 = vmatprep.subr.mxu0 0.0
  %53 = vmatpush1.msra.mxu0 0.0
  %54 = vmatprep.subr.mxu0 0.0
  %55 = vmatpush1.msra.mxu0 0.0
  %56 = vmatprep.subr.mxu0 0.0
  %57 = vmatpush1.msra.mxu0 0.0
  %58 = vmatprep.subr.mxu0 0.0
  %59 = vmatpush1.msra.mxu0 0.0
  %60 = vmatprep.subr.mxu0 0.0
  %61 = vmatpush1.msra.mxu0 %v28
  %62 = vmatprep.subr.mxu0 0.0
  %63 = vmatpush1.msra.mxu0 %v27
  %64 = vmatprep.subr.mxu0 0.0
  %65 = vmatpush1.msra.mxu0 %v26
  %66 = vmatprep.subr.mxu0 0.0
  %67 = vmatpush1.msra.mxu0 %v25
  %68 = vmatprep.subr.mxu0 0.0
  %69 = vmatpush2.msra.mxu0 0.0
  %70 = vmatprep.subr.mxu0 0.0
  %71 = vmatpush2.msra.mxu0 0.0
  %72 = vmatprep.subr.mxu0 0.0
  %73 = vmatpush2.msra.mxu0 0.0
  %74 = vmatprep.subr.mxu0 0.0
  %75 = vmatpush2.msra.mxu0 0.0
  %76 = vmatprep.subr.mxu0 0.0
  %77 = vmatpush2.msra.mxu0 0.0
  %78 = vmatprep.subr.mxu0 0.0
  %79 = vmatpush2.msra.mxu0 0.0
  %80 = vmatprep.subr.mxu0 0.0
  %81 = vmatpush2.msra.mxu0 0.0
  %82 = vmatprep.subr.mxu0 0.0
  %83 = vmatpush2.msra.mxu0 0.0
  %84 = vmatprep.subr.mxu0 0.0
  %85 = vmatpush2.msra.mxu0 0.0
  %86 = vmatprep.subr.mxu0 0.0
  %87 = vmatpush2.msra.mxu0 0.0
  %88 = vmatprep.subr.mxu0 0.0
  %89 = vmatpush2.msra.mxu0 0.0
  %90 = vmatprep.subr.mxu0 0.0
  %91 = vmatpush2.msra.mxu0 0.0
  %92 = vmatprep.subr.mxu0 0.0
  %93 = vmatpush2.msra.mxu0 0.0
  %94 = vmatprep.subr.mxu0 0.0
  %95 = vmatpush2.msra.mxu0 0.0
  %96 = vmatprep.subr.mxu0 0.0
  %97 = vmatpush2.msra.mxu0 0.0
  %98 = vmatprep.subr.mxu0 0.0
  %99 = vmatpush2.msra.mxu0 0.0
  %100 = vmatprep.mubr.f32.mxu0 0.0
  %101 = vmatmul.mubr.f32.gmra.mxu0 %v31
  %v102 = vpop.f32.mrf.mxu0
  %v103 = vadd.f32 0.0, %v102
  %v104 = vpop.f32.mrf.mxu0
  %105 = vmatprep.mubr.f32.mxu0 0.0
  %106 = vmatmul.mubr.f32.gmra.mxu0 %v34
  %v107 = vpop.f32.mrf.mxu0
  %v108 = vadd.f32 0.0, %v107
  %v109 = vpop.f32.mrf.mxu0
  %110 = vdwg.mxu0
  %v111 = vadd.f32 %v21, %v103
  %v112 = vadd.f32 %v22, %v108
  %vm113 = vcmask 31744
  %114 = vst.msk [vmem:[#allocation2] sm:$0xff] %vm113, %v111
  %115 = vst.msk [vmem:[#allocation2 + $0x8] sm:$0xff] %vm113, %v112
  // Predicated region
  $region18: #{transformer_forward.53} parent=0 // pred_check
    %p116 = pneg %p14
  $region19: #{transformer_forward.53} parent=0 // pred_check_branch
    %118 = sbr.rel (%p116) target = $region21
  $region20: #{transformer_forward.53} parent=0 // pred_region
    %v119 = vld [vmem:[#allocation2] sm:$0xff]
    %v120 = vld [vmem:[#allocation2 + $0x8] sm:$0xff]
    %v121 = vld [vmem:[%s2] sm:$0x1]
    %v123 = vlaneseq
    %v124 = vshrl.u32 %v123, 7
    %v125 = vsub.s32 0, %v124
    %v126 = vrot.slane %v121, %v125
    %v128 = vadd.f32 %v119, %v126
    %v129 = vadd.f32 %v120, %v126
    %130 = vst.msk [vmem:[%s3] sm:$0xff] %vm113, %v128
    %131 = vst.msk [vmem:[%s3 + $0x8] sm:$0xff] %vm113, %v129
  $region21: #{transformer_forward.53} parent=0 // pred_fallthru
    _
  // Predicated region
  $region22: #{transformer_forward.53} parent=0 // pred_check
    _
  $region23: #{transformer_forward.53} parent=0 // pred_check_branch
    %133 = sbr.rel (0) target = $region25
  $region24: #{transformer_forward.53} parent=0 // pred_region
    _
  $region25: #{transformer_forward.53} parent=0 // pred_fallthru
    _
  // Predicated region
  $region26: #{transformer_forward.53} parent=0 // pred_check
    _
  $region27: #{transformer_forward.53} parent=0 // pred_check_branch
    %135 = sbr.rel (0) target = $region29
  $region28: #{transformer_forward.53} parent=0 // pred_region
    _
  $region29: #{transformer_forward.53} parent=0 // pred_fallthru
    _

// kernel: transformer_forward.42
$region0: #{transformer_forward.42}
  #allocation0 [shape = 'u32[]', space=smem, size = 0x4, offset = 0x4, fixed_abs, tag = 'smem constant byte address 0x4 - core index']
  #allocation1 [shape = 'u32[144,128]{1,0:T(1,128)}', space=vmem, size = 0x12000, scoped, tag = 'internal scratch']
  #allocation2 [shape = 'f32[8,32]{1,0:T(8,128)}', space=vmem, size = 0x1000, scoped, tag = 'scratch operand']
  %s0 = inlined_call_operand.vmem [shape: f32[2,4,8,8], index: 0, kind: input, shape index: {}]
  %s1 = inlined_call_operand.vmem [shape: f32[2,4,8,8], index: 1, kind: input, shape index: {}]
  %s2 = inlined_call_operand.vmem [shape: f32[2,4,8,8], index: 2, kind: input, shape index: {}]
  %s3 = inlined_call_operand.vmem [shape: f32[2,8,32], index: 3, kind: input, shape index: {}]
  %s4 = inlined_call_operand.vmem [shape: f32[32,32], index: 4, kind: input, shape index: {}]
  %s5 = inlined_call_operand.vmem [shape: f32[1,32], index: 5, kind: input, shape index: {}]
  %s6 = inlined_call_operand.vmem [shape: f32[1,32], index: 6, kind: input, shape index: {}]
  %s7 = inlined_call_operand.vmem [shape: f32[1,32], index: 7, kind: input, shape index: {}]
  %s8 = inlined_call_operand.vmem [shape: f32[2,8,32], index: 8, kind: output, shape index: {}]
  %s9 = sld [smem:[#allocation0]]
  $region65: #{transformer_forward.42} parent=0
    _
  %s11 = ssub.s32 1, %s9
  %s12 = scalar_select 0, %s11, %s9
  loop: start=0, step=1, limit=4
  $region2: #{transformer_forward.42} parent=0 // loop_pre_header
    _
  $region3: #{transformer_forward.42} parent=0 // loop_header
    %s14 = sphi 0, %s18
    %p15 = scmp.ge.s32.totalorder %s14, 4
    %s21 = sphi 0, %s33
    %s22 = sphi 0, %s29
    %s23 = sphi 0, %s21
    %s24 = sphi 0, %s22
    %s25 = sphi 0, %s23
    %s26 = sphi 0, %s24
    %s38 = sphi 0, %s40
    %s41 = sphi 0, %s38
    %s42 = sphi 0, %s41
    %s58 = sphi 0, %s42
    %s64 = sphi 0, %s66
    %s67 = sphi 0, %s64
    %s68 = sphi 0, %s67
    %s84 = sphi 0, %s68
    %s90 = sphi 0, %s92
    %s93 = sphi 0, %s90
    %s94 = sphi 0, %s93
    %s110 = sphi 0, %s94
    %s118 = sphi 0, %s120
    %s121 = sphi 0, %s118
    %s122 = sphi 0, %s121
    %s138 = sphi 0, %s122
    %s142 = sphi 0, %s142
    %s144 = sphi 0, %s142
    %s145 = sphi 0, %s144
    %s159 = sphi 0, %s145
    %s163 = sphi 0, %s163
    %s165 = sphi 0, %s163
    %s166 = sphi 0, %s165
    %s180 = sphi 0, %s166
    %s184 = sphi 0, %s184
    %s186 = sphi 0, %s184
    %s187 = sphi 0, %s186
    %s201 = sphi 0, %s187
    %s205 = sphi 0, %s205
    %s207 = sphi 0, %s205
    %s208 = sphi 0, %s207
    %s222 = sphi 0, %s208
    %s230 = sphi 0, %s232
    %s233 = sphi 0, %s230
    %s234 = sphi 0, %s233
    %s250 = sphi 0, %s234
  $region4: #{transformer_forward.42} parent=0 // loop_header_branch
    %17 = sbr.rel (%p15) target = $region8
  $region5: #{transformer_forward.42} parent=0 // loop_body
    %s19 = ssub.s32 %s14, 1
    %s20 = ssub.s32 %s14, 2
    %s27 = sadd.s32 1, %s22
    %p28 = scmp.ge.s32.totalorder %s27, 1
    %s29 = scalar_select %p28, 0, %s27
    %s30 = sadd.s32 1, %s21
    %s31 = scalar_select %p28, %s30, %s21
    %p32 = scmp.ge.s32.totalorder %s31, 2
    %s33 = scalar_select %p32, 0, %s31
    %s34 = ssub.s32 %s21, %s33
    %s35 = ssub.s32 %s22, %s29
    %s36 = sor.u32 %s34, %s35
    %p37 = scmp.eq.s32.totalorder %s36, 0
    %s39 = sadd.s32 %s38, 1
    %s40 = scalar_select %p37, %s38, %s39
    %p43 = pneg %p37
    %p44 = scmp.eq.s32.totalorder %s14, 1
    %p45 = por %p43, %p44
    %p46 = scmp.ne.s32.totalorder %s38, %s41
    %p47 = scmp.eq.s32.totalorder %s14, 0
    %p48 = por %p46, %p47
    %p49 = scmp.ne.s32.totalorder %s38, %s41
    %p50 = scmp.eq.s32.totalorder %s19, 1
    %p51 = por %p49, %p50
    %p52 = scmp.ne.s32.totalorder %s41, %s42
    %p53 = scmp.eq.s32.totalorder %s19, 0
    %p54 = por %p52, %p53
    %p55 = scmp.ne.s32.totalorder %s41, %s42
    %p56 = scmp.eq.s32.totalorder %s20, 1
    %p57 = por %p55, %p56
    %p59 = scmp.ne.s32.totalorder %s42, %s58
    %p60 = scmp.eq.s32.totalorder %s20, 0
    %p61 = por %p59, %p60
    %s62 = ssub.s32 %s21, %s33
    %p63 = scmp.eq.s32.totalorder %s62, 0
    %s65 = sadd.s32 %s64, 1
    %s66 = scalar_select %p63, %s64, %s65
    %p69 = pneg %p63
    %p70 = scmp.eq.s32.totalorder %s14, 1
    %p71 = por %p69, %p70
    %p72 = scmp.ne.s32.totalorder %s64, %s67
    %p73 = scmp.eq.s32.totalorder %s14, 0
    %p74 = por %p72, %p73
    %p75 = scmp.ne.s32.totalorder %s64, %s67
    %p76 = scmp.eq.s32.totalorder %s19, 1
    %p77 = por %p75, %p76
    %p78 = scmp.ne.s32.totalorder %s67, %s68
    %p79 = scmp.eq.s32.totalorder %s19, 0
    %p80 = por %p78, %p79
    %p81 = scmp.ne.s32.totalorder %s67, %s68
    %p82 = scmp.eq.s32.totalorder %s20, 1
    %p83 = por %p81, %p82
    %p85 = scmp.ne.s32.totalorder %s68, %s84
    %p86 = scmp.eq.s32.totalorder %s20, 0
    %p87 = por %p85, %p86
    %s88 = ssub.s32 %s21, %s33
    %p89 = scmp.eq.s32.totalorder %s88, 0
    %s91 = sadd.s32 %s90, 1
    %s92 = scalar_select %p89, %s90, %s91
    %p95 = pneg %p89
    %p96 = scmp.eq.s32.totalorder %s14, 1
    %p97 = por %p95, %p96
    %p98 = scmp.ne.s32.totalorder %s90, %s93
    %p99 = scmp.eq.s32.totalorder %s14, 0
    %p100 = por %p98, %p99
    %p101 = scmp.ne.s32.totalorder %s90, %s93
    %p102 = scmp.eq.s32.totalorder %s19, 1
    %p103 = por %p101, %p102
    %p104 = scmp.ne.s32.totalorder %s93, %s94
    %p105 = scmp.eq.s32.totalorder %s19, 0
    %p106 = por %p104, %p105
    %p107 = scmp.ne.s32.totalorder %s93, %s94
    %p108 = scmp.eq.s32.totalorder %s20, 1
    %p109 = por %p107, %p108
    %p111 = scmp.ne.s32.totalorder %s94, %s110
    %p112 = scmp.eq.s32.totalorder %s20, 0
    %p113 = por %p111, %p112
    %s114 = ssub.s32 %s21, %s33
    %s115 = ssub.s32 %s22, %s29
    %s116 = sor.u32 %s114, %s115
    %p117 = scmp.eq.s32.totalorder %s116, 0
    %s119 = sadd.s32 %s118, 1
    %s120 = scalar_select %p117, %s118, %s119
    %p123 = pneg %p117
    %p124 = scmp.eq.s32.totalorder %s14, 1
    %p125 = por %p123, %p124
    %p126 = scmp.ne.s32.totalorder %s118, %s121
    %p127 = scmp.eq.s32.totalorder %s14, 0
    %p128 = por %p126, %p127
    %p129 = scmp.ne.s32.totalorder %s118, %s121
    %p130 = scmp.eq.s32.totalorder %s19, 1
    %p131 = por %p129, %p130
    %p132 = scmp.ne.s32.totalorder %s121, %s122
    %p133 = scmp.eq.s32.totalorder %s19, 0
    %p134 = por %p132, %p133
    %p135 = scmp.ne.s32.totalorder %s121, %s122
    %p136 = scmp.eq.s32.totalorder %s20, 1
    %p137 = por %p135, %p136
    %p139 = scmp.ne.s32.totalorder %s122, %s138
    %p140 = scmp.eq.s32.totalorder %s20, 0
    %p141 = por %p139, %p140
    %s143 = sadd.s32 %s142, 1
    %p146 = scmp.eq.s32.totalorder %s14, 1
    %p147 = scmp.ne.s32.totalorder %s142, %s144
    %p148 = scmp.eq.s32.totalorder %s14, 0
    %p149 = por %p147, %p148
    %p150 = scmp.ne.s32.totalorder %s142, %s144
    %p151 = scmp.eq.s32.totalorder %s19, 1
    %p152 = por %p150, %p151
    %p153 = scmp.ne.s32.totalorder %s144, %s145
    %p154 = scmp.eq.s32.totalorder %s19, 0
    %p155 = por %p153, %p154
    %p156 = scmp.ne.s32.totalorder %s144, %s145
    %p157 = scmp.eq.s32.totalorder %s20, 1
    %p158 = por %p156, %p157
    %p160 = scmp.ne.s32.totalorder %s145, %s159
    %p161 = scmp.eq.s32.totalorder %s20, 0
    %p162 = por %p160, %p161
    %s164 = sadd.s32 %s163, 1
    %p167 = scmp.eq.s32.totalorder %s14, 1
    %p168 = scmp.ne.s32.totalorder %s163, %s165
    %p169 = scmp.eq.s32.totalorder %s14, 0
    %p170 = por %p168, %p169
    %p171 = scmp.ne.s32.totalorder %s163, %s165
    %p172 = scmp.eq.s32.totalorder %s19, 1
    %p173 = por %p171, %p172
    %p174 = scmp.ne.s32.totalorder %s165, %s166
    %p175 = scmp.eq.s32.totalorder %s19, 0
    %p176 = por %p174, %p175
    %p177 = scmp.ne.s32.totalorder %s165, %s166
    %p178 = scmp.eq.s32.totalorder %s20, 1
    %p179 = por %p177, %p178
    %p181 = scmp.ne.s32.totalorder %s166, %s180
    %p182 = scmp.eq.s32.totalorder %s20, 0
    %p183 = por %p181, %p182
    %s185 = sadd.s32 %s184, 1
    %p188 = scmp.eq.s32.totalorder %s14, 1
    %p189 = scmp.ne.s32.totalorder %s184, %s186
    %p190 = scmp.eq.s32.totalorder %s14, 0
    %p191 = por %p189, %p190
    %p192 = scmp.ne.s32.totalorder %s184, %s186
    %p193 = scmp.eq.s32.totalorder %s19, 1
    %p194 = por %p192, %p193
    %p195 = scmp.ne.s32.totalorder %s186, %s187
    %p196 = scmp.eq.s32.totalorder %s19, 0
    %p197 = por %p195, %p196
    %p198 = scmp.ne.s32.totalorder %s186, %s187
    %p199 = scmp.eq.s32.totalorder %s20, 1
    %p200 = por %p198, %p199
    %p202 = scmp.ne.s32.totalorder %s187, %s201
    %p203 = scmp.eq.s32.totalorder %s20, 0
    %p204 = por %p202, %p203
    %s206 = sadd.s32 %s205, 1
    %p209 = scmp.eq.s32.totalorder %s14, 1
    %p210 = scmp.ne.s32.totalorder %s205, %s207
    %p211 = scmp.eq.s32.totalorder %s14, 0
    %p212 = por %p210, %p211
    %p213 = scmp.ne.s32.totalorder %s205, %s207
    %p214 = scmp.eq.s32.totalorder %s19, 1
    %p215 = por %p213, %p214
    %p216 = scmp.ne.s32.totalorder %s207, %s208
    %p217 = scmp.eq.s32.totalorder %s19, 0
    %p218 = por %p216, %p217
    %p219 = scmp.ne.s32.totalorder %s207, %s208
    %p220 = scmp.eq.s32.totalorder %s20, 1
    %p221 = por %p219, %p220
    %p223 = scmp.ne.s32.totalorder %s208, %s222
    %p224 = scmp.eq.s32.totalorder %s20, 0
    %p225 = por %p223, %p224
    %s226 = ssub.s32 %s21, %s33
    %s227 = ssub.s32 %s22, %s29
    %s228 = sor.u32 %s226, %s227
    %p229 = scmp.eq.s32.totalorder %s228, 0
    %s231 = sadd.s32 %s230, 1
    %s232 = scalar_select %p229, %s230, %s231
    %p235 = pneg %p229
    %p236 = scmp.eq.s32.totalorder %s14, 1
    %p237 = por %p235, %p236
    %p238 = scmp.ne.s32.totalorder %s230, %s233
    %p239 = scmp.eq.s32.totalorder %s14, 0
    %p240 = por %p238, %p239
    %p241 = scmp.ne.s32.totalorder %s230, %s233
    %p242 = scmp.eq.s32.totalorder %s19, 1
    %p243 = por %p241, %p242
    %p244 = scmp.ne.s32.totalorder %s233, %s234
    %p245 = scmp.eq.s32.totalorder %s19, 0
    %p246 = por %p244, %p245
    %p247 = scmp.ne.s32.totalorder %s233, %s234
    %p248 = scmp.eq.s32.totalorder %s20, 1
    %p249 = por %p247, %p248
    %p251 = scmp.ne.s32.totalorder %s234, %s250
    %p252 = scmp.eq.s32.totalorder %s20, 0
    %p253 = por %p251, %p252
    %p254 = scmp.le.s32.totalorder 1, %s14
    %p255 = scmp.lt.s32.totalorder %s14, 3
    %p256 = pnand %p254, %p255
    %p257 = pneg %p256
    // Predicated region
    $region9: #{transformer_forward.42} parent=5 // pred_check
      _
    $region10: #{transformer_forward.42} parent=5 // pred_check_branch
      %259 = sbr.rel (%p256) target = $region12
    $region11: #{transformer_forward.42} parent=5 // pred_region
      %s260 = ssub.s32 %s14, 1
      // Predicated region
      $region13: #{transformer_forward.42} parent=11 // pred_check
        %p261 = pneg %p155
      $region14: #{transformer_forward.42} parent=11 // pred_check_branch
        %263 = sbr.rel (%p261) target = $region16
      $region15: #{transformer_forward.42} parent=11 // pred_region
        _
      $region16: #{transformer_forward.42} parent=11 // pred_fallthru
        _
      // Predicated region
      $region17: #{transformer_forward.42} parent=11 // pred_check
        %p264 = pneg %p176
      $region18: #{transformer_forward.42} parent=11 // pred_check_branch
        %266 = sbr.rel (%p264) target = $region20
      $region19: #{transformer_forward.42} parent=11 // pred_region
        _
      $region20: #{transformer_forward.42} parent=11 // pred_fallthru
        _
      // Predicated region
      $region21: #{transformer_forward.42} parent=11 // pred_check
        %p267 = pneg %p197
      $region22: #{transformer_forward.42} parent=11 // pred_check_branch
        %269 = sbr.rel (%p267) target = $region24
      $region23: #{transformer_forward.42} parent=11 // pred_region
        _
      $region24: #{transformer_forward.42} parent=11 // pred_fallthru
        _
      // Predicated region
      $region25: #{transformer_forward.42} parent=11 // pred_check
        %p270 = pneg %p218
      $region26: #{transformer_forward.42} parent=11 // pred_check_branch
        %272 = sbr.rel (%p270) target = $region28
      $region27: #{transformer_forward.42} parent=11 // pred_region
        _
      $region28: #{transformer_forward.42} parent=11 // pred_fallthru
        _
    $region12: #{transformer_forward.42} parent=5 // pred_fallthru
      _
    %p273 = scmp.lt.s32.totalorder %s14, 2
    // Predicated region
    $region29: #{transformer_forward.42} parent=5 // pred_check
      %p274 = pneg %p273
    $region30: #{transformer_forward.42} parent=5 // pred_check_branch
      %276 = sbr.rel (%p274) target = $region32
    $region31: #{transformer_forward.42} parent=5 // pred_region
      // Predicated region
      $region33: #{transformer_forward.42} parent=31 // pred_check
        %p277 = pneg %p48
      $region34: #{transformer_forward.42} parent=31 // pred_check_branch
        %279 = sbr.rel (%p277) target = $region36
      $region35: #{transformer_forward.42} parent=31 // pred_region
        %p280 = scmp.lt.s32.totalorder %s21, 1
        %s281 = scalar_select %p280, %s21, 1
        %p282 = scmp.lt.s32.totalorder %s22, 0
        %s283 = scalar_select %p282, %s22, 0
        %s284 = smul.addr %s281, 4
        %s285 = sadd.s32 %s283, %s284
        %s286 = smul.addr %s285, 8
        %s287 = scalar_lea.vmem %s0, %s286
      $region36: #{transformer_forward.42} parent=31 // pred_fallthru
        _
      // Predicated region
      $region37: #{transformer_forward.42} parent=31 // pred_check
        %p288 = pneg %p74
      $region38: #{transformer_forward.42} parent=31 // pred_check_branch
        %290 = sbr.rel (%p288) target = $region40
      $region39: #{transformer_forward.42} parent=31 // pred_region
        %p291 = scmp.lt.s32.totalorder %s21, 1
        %s292 = scalar_select %p291, %s21, 1
        %s293 = smul.addr %s292, 4
        %s294 = smul.addr %s293, 8
        %s295 = scalar_lea.vmem %s1, %s294
      $region40: #{transformer_forward.42} parent=31 // pred_fallthru
        _
      // Predicated region
      $region41: #{transformer_forward.42} parent=31 // pred_check
        %p296 = pneg %p100
      $region42: #{transformer_forward.42} parent=31 // pred_check_branch
        %298 = sbr.rel (%p296) target = $region44
      $region43: #{transformer_forward.42} parent=31 // pred_region
        %p299 = scmp.lt.s32.totalorder %s21, 1
        %s300 = scalar_select %p299, %s21, 1
        %s301 = smul.addr %s300, 4
        %s302 = smul.addr %s301, 8
        %s303 = scalar_lea.vmem %s2, %s302
      $region44: #{transformer_forward.42} parent=31 // pred_fallthru
        _
      // Predicated region
      $region45: #{transformer_forward.42} parent=31 // pred_check
        %p304 = pneg %p128
      $region46: #{transformer_forward.42} parent=31 // pred_check_branch
        %306 = sbr.rel (%p304) target = $region48
      $region47: #{transformer_forward.42} parent=31 // pred_region
        %p307 = scmp.lt.s32.totalorder %s21, 1
        %s308 = scalar_select %p307, %s21, 1
        %p309 = scmp.lt.s32.totalorder %s22, 0
        %s310 = scalar_select %p309, %s22, 0
        %s311 = sadd.s32 %s310, %s308
        %s312 = smul.addr %s311, 8
        %s313 = scalar_lea.vmem %s3, %s312
      $region48: #{transformer_forward.42} parent=31 // pred_fallthru
        _
    $region32: #{transformer_forward.42} parent=5 // pred_fallthru
      _
    %p314 = scmp.le.s32.totalorder 1, %s14
    %p315 = scmp.lt.s32.totalorder %s14, 3
    %p316 = pnand %p314, %p315
    %p317 = pneg %p316
    // Predicated region
    $region49: #{transformer_forward.42} parent=5 // pred_check
      _
    $region50: #{transformer_forward.42} parent=5 // pred_check_branch
      %319 = sbr.rel (%p316) target = $region52
    $region51: #{transformer_forward.42} parent=5 // pred_region
      %s320 = ssub.s32 %s14, 1
      %p321 = scmp.lt.s32.totalorder %s23, 1
      %s322 = scalar_select %p321, %s23, 1
      %p323 = scmp.lt.s32.totalorder %s24, 0
      %s324 = scalar_select %p323, %s24, 0
      %s325 = smul.addr %s322, 4
      %s326 = sadd.s32 %s324, %s325
      %s327 = smul.addr %s326, 8
      %s328 = scalar_lea.vmem %s0, %s327
      %p329 = pneg %p54
      %p330 = pneg %p51
      %p331 = scmp.lt.s32.totalorder %s23, 1
      %s332 = scalar_select %p331, %s23, 1
      %s333 = smul.addr %s332, 4
      %s334 = smul.addr %s333, 8
      %s335 = scalar_lea.vmem %s1, %s334
      %p336 = pneg %p80
      %p337 = pneg %p77
      %p338 = scmp.lt.s32.totalorder %s23, 1
      %s339 = scalar_select %p338, %s23, 1
      %s340 = smul.addr %s339, 4
      %s341 = smul.addr %s340, 8
      %s342 = scalar_lea.vmem %s2, %s341
      %p343 = pneg %p106
      %p344 = pneg %p103
      %p345 = scmp.lt.s32.totalorder %s23, 1
      %s346 = scalar_select %p345, %s23, 1
      %p347 = scmp.lt.s32.totalorder %s24, 0
      %s348 = scalar_select %p347, %s24, 0
      %s349 = sadd.s32 %s348, %s346
      %s350 = smul.addr %s349, 8
      %s351 = scalar_lea.vmem %s3, %s350
      %p352 = pneg %p134
      %p353 = pneg %p131
      %p354 = pneg %p155
      %p355 = pneg %p152
      %p356 = pneg %p176
      %p357 = pneg %p173
      %p358 = pneg %p197
      %p359 = pneg %p194
      %p360 = pneg %p218
      %p361 = pneg %p215
      %p362 = pneg %p246
      %p363 = pneg %p243
      %p364 = scmp.lt.s32.totalorder %s23, 1
      %s365 = scalar_select %p364, %s23, 1
      %p366 = scmp.lt.s32.totalorder %s24, 0
      %s367 = scalar_select %p366, %s24, 0
      %s368 = sadd.s32 %s367, %s365
      %s369 = smul.addr %s368, 8
      %s370 = scalar_lea.vmem %s8, %s369
      %p371 = scmp.lt.s32.totalorder %s23, 1
      %s372 = scalar_select %p371, %s23, 1
      %p373 = scmp.lt.s32.totalorder %s24, 0
      %s374 = scalar_select %p373, %s24, 0
      %s375 = smul.addr %s372, 4
      %s376 = sadd.s32 %s374, %s375
      %s377 = smul.addr %s376, 8
      %s378 = scalar_lea.vmem %s0, %s377
      %p379 = scmp.lt.s32.totalorder %s23, 1
      %s380 = scalar_select %p379, %s23, 1
      %s381 = smul.addr %s380, 4
      %s382 = smul.addr %s381, 8
      %s383 = scalar_lea.vmem %s1, %s382
      %p384 = scmp.lt.s32.totalorder %s23, 1
      %s385 = scalar_select %p384, %s23, 1
      %s386 = smul.addr %s385, 4
      %s387 = smul.addr %s386, 8
      %s388 = scalar_lea.vmem %s2, %s387
      %p389 = scmp.lt.s32.totalorder %s23, 1
      %s390 = scalar_select %p389, %s23, 1
      %p391 = scmp.lt.s32.totalorder %s24, 0
      %s392 = scalar_select %p391, %s24, 0
      %s393 = sadd.s32 %s392, %s390
      %s394 = smul.addr %s393, 8
      %s395 = scalar_lea.vmem %s3, %s394
      %p396 = scmp.lt.s32.totalorder %s23, 1
      %s397 = scalar_select %p396, %s23, 1
      %p398 = scmp.lt.s32.totalorder %s24, 0
      %s399 = scalar_select %p398, %s24, 0
      %s400 = sadd.s32 %s399, %s397
      %s401 = smul.addr %s400, 8
      %s402 = scalar_lea.vmem %s8, %s401
      %v403 = vld [vmem:[%s378] sm:$0xff]
      %v404 = vld [vmem:[%s383] sm:$0xff]
      %v405 = vld [vmem:[%s388] sm:$0xff]
      %vm406 = vcmask 64512
      %v408 = vsel %vm406, %v403, 0
      %v411 = vsel %vm406, %v404, 0
      %413 = vmatprep.subr.mxu0 0.0
      %414 = vmatpush1.xpose.msra.mxu0 0.0
      %415 = vmatprep.subr.mxu0 0.0
      %416 = vmatpush1.xpose.msra.mxu0 0.0
      %417 = vmatprep.subr.mxu0 0.0
      %418 = vmatpush1.xpose.msra.mxu0 0.0
      %419 = vmatprep.subr.mxu0 0.0
      %420 = vmatpush1.xpose.msra.mxu0 0.0
      %421 = vmatprep.subr.mxu0 0.0
      %422 = vmatpush1.xpose.msra.mxu0 0.0
      %423 = vmatprep.subr.mxu0 0.0
      %424 = vmatpush1.xpose.msra.mxu0 0.0
      %425 = vmatprep.subr.mxu0 0.0
      %426 = vmatpush1.xpose.msra.mxu0 0.0
      %427 = vmatprep.subr.mxu0 0.0
      %428 = vmatpush1.xpose.msra.mxu0 0.0
      %429 = vmatprep.subr.mxu0 0.0
      %430 = vmatpush1.xpose.msra.mxu0 0.0
      %431 = vmatprep.subr.mxu0 0.0
      %432 = vmatpush1.xpose.msra.mxu0 0.0
      %433 = vmatprep.subr.mxu0 0.0
      %434 = vmatpush1.xpose.msra.mxu0 0.0
      %435 = vmatprep.subr.mxu0 0.0
      %436 = vmatpush1.xpose.msra.mxu0 0.0
      %437 = vmatprep.subr.mxu0 0.0
      %438 = vmatpush1.xpose.msra.mxu0 0.0
      %439 = vmatprep.subr.mxu0 0.0
      %440 = vmatpush1.xpose.msra.mxu0 0.0
      %441 = vmatprep.subr.mxu0 0.0
      %442 = vmatpush1.xpose.msra.mxu0 0.0
      %443 = vmatprep.subr.mxu0 0.0
      %444 = vmatpush1.xpose.msra.mxu0 %v411
      %445 = vmatprep.subr.mxu0 0.0
      %446 = vmatpush2.xpose.msra.mxu0 0.0
      %447 = vmatprep.subr.mxu0 0.0
      %448 = vmatpush2.xpose.msra.mxu0 0.0
      %449 = vmatprep.subr.mxu0 0.0
      %450 = vmatpush2.xpose.msra.mxu0 0.0
      %451 = vmatprep.subr.mxu0 0.0
      %452 = vmatpush2.xpose.msra.mxu0 0.0
      %453 = vmatprep.subr.mxu0 0.0
      %454 = vmatpush2.xpose.msra.mxu0 0.0
      %455 = vmatprep.subr.mxu0 0.0
      %456 = vmatpush2.xpose.msra.mxu0 0.0
      %457 = vmatprep.subr.mxu0 0.0
      %458 = vmatpush2.xpose.msra.mxu0 0.0
      %459 = vmatprep.subr.mxu0 0.0
      %460 = vmatpush2.xpose.msra.mxu0 0.0
      %461 = vmatprep.subr.mxu0 0.0
      %462 = vmatpush2.xpose.msra.mxu0 0.0
      %463 = vmatprep.subr.mxu0 0.0
      %464 = vmatpush2.xpose.msra.mxu0 0.0
      %465 = vmatprep.subr.mxu0 0.0
      %466 = vmatpush2.xpose.msra.mxu0 0.0
      %467 = vmatprep.subr.mxu0 0.0
      %468 = vmatpush2.xpose.msra.mxu0 0.0
      %469 = vmatprep.subr.mxu0 0.0
      %470 = vmatpush2.xpose.msra.mxu0 0.0
      %471 = vmatprep.subr.mxu0 0.0
      %472 = vmatpush2.xpose.msra.mxu0 0.0
      %473 = vmatprep.subr.mxu0 0.0
      %474 = vmatpush2.xpose.msra.mxu0 0.0
      %475 = vmatprep.subr.mxu0 0.0
      %476 = vmatpush2.xpose.msra.mxu0 0.0
      %477 = vmatprep.mubr.f32.mxu0 0.0
      %478 = vmatmul.mubr.f32.gmra.mxu0 %v408
      %v479 = vpop.f32.mrf.mxu0
      %v480 = vadd.f32 0.0, %v479
      %v481 = vpop.f32.mrf.mxu0
      %482 = vdwg.mxu0
      %v483 = vmul.f32 %v480, 0.35355338
      %v484 = vsel %vm406, %v483, -inf
      %485 = vmax.xlane.f32.xlu0 %v484
      %v486 = vpop.xlane.xlu0 %485
      %v487 = vsub.f32 %v483, %v486
      %v488 = vmul.f32 %v487, 1.442695
      %v489 = vpow.pop %v488
      %v490 = vsel %vm406, %v489, 0.0
      %491 = vadd.xlane.f32.xlu0 %v490
      %v492 = vpop.xlane.xlu0 %491
      %v493 = vrcp.pop %v492
      %v494 = vmul.f32 %v489, %v493
      %v496 = vsel %vm406, %v494, 0
      %498 = vmatprep.subr.mxu0 0.0
      %499 = vmatpush1.msra.mxu0 0.0
      %500 = vmatprep.subr.mxu0 0.0
      %501 = vmatpush1.msra.mxu0 0.0
      %502 = vmatprep.subr.mxu0 0.0
      %503 = vmatpush1.msra.mxu0 0.0
      %504 = vmatprep.subr.mxu0 0.0
      %505 = vmatpush1.msra.mxu0 0.0
      %506 = vmatprep.subr.mxu0 0.0
      %507 = vmatpush1.msra.mxu0 0.0
      %508 = vmatprep.subr.mxu0 0.0
      %509 = vmatpush1.msra.mxu0 0.0
      %510 = vmatprep.subr.mxu0 0.0
      %511 = vmatpush1.msra.mxu0 0.0
      %512 = vmatprep.subr.mxu0 0.0
      %513 = vmatpush1.msra.mxu0 0.0
      %514 = vmatprep.subr.mxu0 0.0
      %515 = vmatpush1.msra.mxu0 0.0
      %516 = vmatprep.subr.mxu0 0.0
      %517 = vmatpush1.msra.mxu0 0.0
      %518 = vmatprep.subr.mxu0 0.0
      %519 = vmatpush1.msra.mxu0 0.0
      %520 = vmatprep.subr.mxu0 0.0
      %521 = vmatpush1.msra.mxu0 0.0
      %522 = vmatprep.subr.mxu0 0.0
      %523 = vmatpush1.msra.mxu0 0.0
      %524 = vmatprep.subr.mxu0 0.0
      %525 = vmatpush1.msra.mxu0 0.0
      %526 = vmatprep.subr.mxu0 0.0
      %527 = vmatpush1.msra.mxu0 0.0
      %528 = vmatprep.subr.mxu0 0.0
      %529 = vmatpush1.msra.mxu0 %v405
      %530 = vmatprep.subr.mxu0 0.0
      %531 = vmatpush2.msra.mxu0 0.0
      %532 = vmatprep.subr.mxu0 0.0
      %533 = vmatpush2.msra.mxu0 0.0
      %534 = vmatprep.subr.mxu0 0.0
      %535 = vmatpush2.msra.mxu0 0.0
      %536 = vmatprep.subr.mxu0 0.0
      %537 = vmatpush2.msra.mxu0 0.0
      %538 = vmatprep.subr.mxu0 0.0
      %539 = vmatpush2.msra.mxu0 0.0
      %540 = vmatprep.subr.mxu0 0.0
      %541 = vmatpush2.msra.mxu0 0.0
      %542 = vmatprep.subr.mxu0 0.0
      %543 = vmatpush2.msra.mxu0 0.0
      %544 = vmatprep.subr.mxu0 0.0
      %545 = vmatpush2.msra.mxu0 0.0
      %546 = vmatprep.subr.mxu0 0.0
      %547 = vmatpush2.msra.mxu0 0.0
      %548 = vmatprep.subr.mxu0 0.0
      %549 = vmatpush2.msra.mxu0 0.0
      %550 = vmatprep.subr.mxu0 0.0
      %551 = vmatpush2.msra.mxu0 0.0
      %552 = vmatprep.subr.mxu0 0.0
      %553 = vmatpush2.msra.mxu0 0.0
      %554 = vmatprep.subr.mxu0 0.0
      %555 = vmatpush2.msra.mxu0 0.0
      %556 = vmatprep.subr.mxu0 0.0
      %557 = vmatpush2.msra.mxu0 0.0
      %558 = vmatprep.subr.mxu0 0.0
      %559 = vmatpush2.msra.mxu0 0.0
      %560 = vmatprep.subr.mxu0 0.0
      %561 = vmatpush2.msra.mxu0 0.0
      %562 = vmatprep.mubr.f32.mxu0 0.0
      %563 = vmatmul.mubr.f32.gmra.mxu0 %v496
      %v564 = vpop.f32.mrf.mxu0
      %v565 = vadd.f32 0.0, %v564
      %v566 = vpop.f32.mrf.mxu0
      %567 = vdwg.mxu0
      %568 = vst.msk [vmem:[#allocation2] sm:$0xff] %vm406, %v565
      %s569 = scalar_lea.vmem %s378, 8
      %v570 = vld [vmem:[%s569] sm:$0xff]
      %s571 = scalar_lea.vmem %s383, 8
      %v572 = vld [vmem:[%s571] sm:$0xff]
      %s573 = scalar_lea.vmem %s388, 8
      %v574 = vld [vmem:[%s573] sm:$0xff]
      %v576 = vsel %vm406, %v570, 0
      %v579 = vsel %vm406, %v572, 0
      %581 = vmatprep.subr.mxu0 0.0
      %582 = vmatpush1.xpose.msra.mxu0 0.0
      %583 = vmatprep.subr.mxu0 0.0
      %584 = vmatpush1.xpose.msra.mxu0 0.0
      %585 = vmatprep.subr.mxu0 0.0
      %586 = vmatpush1.xpose.msra.mxu0 0.0
      %587 = vmatprep.subr.mxu0 0.0
      %588 = vmatpush1.xpose.msra.mxu0 0.0
      %589 = vmatprep.subr.mxu0 0.0
      %590 = vmatpush1.xpose.msra.mxu0 0.0
      %591 = vmatprep.subr.mxu0 0.0
      %592 = vmatpush1.xpose.msra.mxu0 0.0
      %593 = vmatprep.subr.mxu0 0.0
      %594 = vmatpush1.xpose.msra.mxu0 0.0
      %595 = vmatprep.subr.mxu0 0.0
      %596 = vmatpush1.xpose.msra.mxu0 0.0
      %597 = vmatprep.subr.mxu0 0.0
      %598 = vmatpush1.xpose.msra.mxu0 0.0
      %599 = vmatprep.subr.mxu0 0.0
      %600 = vmatpush1.xpose.msra.mxu0 0.0
      %601 = vmatprep.subr.mxu0 0.0
      %602 = vmatpush1.xpose.msra.mxu0 0.0
      %603 = vmatprep.subr.mxu0 0.0
      %604 = vmatpush1.xpose.msra.mxu0 0.0
      %605 = vmatprep.subr.mxu0 0.0
      %606 = vmatpush1.xpose.msra.mxu0 0.0
      %607 = vmatprep.subr.mxu0 0.0
      %608 = vmatpush1.xpose.msra.mxu0 0.0
      %609 = vmatprep.subr.mxu0 0.0
      %610 = vmatpush1.xpose.msra.mxu0 0.0
      %611 = vmatprep.subr.mxu0 0.0
      %612 = vmatpush1.xpose.msra.mxu0 %v579
      %613 = vmatprep.subr.mxu0 0.0
      %614 = vmatpush2.xpose.msra.mxu0 0.0
      %615 = vmatprep.subr.mxu0 0.0
      %616 = vmatpush2.xpose.msra.mxu0 0.0
      %617 = vmatprep.subr.mxu0 0.0
      %618 = vmatpush2.xpose.msra.mxu0 0.0
      %619 = vmatprep.subr.mxu0 0.0
      %620 = vmatpush2.xpose.msra.mxu0 0.0
      %621 = vmatprep.subr.mxu0 0.0
      %622 = vmatpush2.xpose.msra.mxu0 0.0
      %623 = vmatprep.subr.mxu0 0.0
      %624 = vmatpush2.xpose.msra.mxu0 0.0
      %625 = vmatprep.subr.mxu0 0.0
      %626 = vmatpush2.xpose.msra.mxu0 0.0
      %627 = vmatprep.subr.mxu0 0.0
      %628 = vmatpush2.xpose.msra.mxu0 0.0
      %629 = vmatprep.subr.mxu0 0.0
      %630 = vmatpush2.xpose.msra.mxu0 0.0
      %631 = vmatprep.subr.mxu0 0.0
      %632 = vmatpush2.xpose.msra.mxu0 0.0
      %633 = vmatprep.subr.mxu0 0.0
      %634 = vmatpush2.xpose.msra.mxu0 0.0
      %635 = vmatprep.subr.mxu0 0.0
      %636 = vmatpush2.xpose.msra.mxu0 0.0
      %637 = vmatprep.subr.mxu0 0.0
      %638 = vmatpush2.xpose.msra.mxu0 0.0
      %639 = vmatprep.subr.mxu0 0.0
      %640 = vmatpush2.xpose.msra.mxu0 0.0
      %641 = vmatprep.subr.mxu0 0.0
      %642 = vmatpush2.xpose.msra.mxu0 0.0
      %643 = vmatprep.subr.mxu0 0.0
      %644 = vmatpush2.xpose.msra.mxu0 0.0
      %645 = vmatprep.mubr.f32.mxu0 0.0
      %646 = vmatmul.mubr.f32.gmra.mxu0 %v576
      %v647 = vpop.f32.mrf.mxu0
      %v648 = vadd.f32 0.0, %v647
      %v649 = vpop.f32.mrf.mxu0
      %650 = vdwg.mxu0
      %v651 = vmul.f32 %v648, 0.35355338
      %v652 = vsel %vm406, %v651, -inf
      %653 = vmax.xlane.f32.xlu0 %v652
      %v654 = vpop.xlane.xlu0 %653
      %v655 = vsub.f32 %v651, %v654
      %v656 = vmul.f32 %v655, 1.442695
      %v657 = vpow.pop %v656
      %v658 = vsel %vm406, %v657, 0.0
      %659 = vadd.xlane.f32.xlu0 %v658
      %v660 = vpop.xlane.xlu0 %659
      %v661 = vrcp.pop %v660
      %v662 = vmul.f32 %v657, %v661
      %v664 = vsel %vm406, %v662, 0
      %666 = vmatprep.subr.mxu0 0.0
      %667 = vmatpush1.msra.mxu0 0.0
      %668 = vmatprep.subr.mxu0 0.0
      %669 = vmatpush1.msra.mxu0 0.0
      %670 = vmatprep.subr.mxu0 0.0
      %671 = vmatpush1.msra.mxu0 0.0
      %672 = vmatprep.subr.mxu0 0.0
      %673 = vmatpush1.msra.mxu0 0.0
      %674 = vmatprep.subr.mxu0 0.0
      %675 = vmatpush1.msra.mxu0 0.0
      %676 = vmatprep.subr.mxu0 0.0
      %677 = vmatpush1.msra.mxu0 0.0
      %678 = vmatprep.subr.mxu0 0.0
      %679 = vmatpush1.msra.mxu0 0.0
      %680 = vmatprep.subr.mxu0 0.0
      %681 = vmatpush1.msra.mxu0 0.0
      %682 = vmatprep.subr.mxu0 0.0
      %683 = vmatpush1.msra.mxu0 0.0
      %684 = vmatprep.subr.mxu0 0.0
      %685 = vmatpush1.msra.mxu0 0.0
      %686 = vmatprep.subr.mxu0 0.0
      %687 = vmatpush1.msra.mxu0 0.0
      %688 = vmatprep.subr.mxu0 0.0
      %689 = vmatpush1.msra.mxu0 0.0
      %690 = vmatprep.subr.mxu0 0.0
      %691 = vmatpush1.msra.mxu0 0.0
      %692 = vmatprep.subr.mxu0 0.0
      %693 = vmatpush1.msra.mxu0 0.0
      %694 = vmatprep.subr.mxu0 0.0
      %695 = vmatpush1.msra.mxu0 0.0
      %696 = vmatprep.subr.mxu0 0.0
      %697 = vmatpush1.msra.mxu0 %v574
      %698 = vmatprep.subr.mxu0 0.0
      %699 = vmatpush2.msra.mxu0 0.0
      %700 = vmatprep.subr.mxu0 0.0
      %701 = vmatpush2.msra.mxu0 0.0
      %702 = vmatprep.subr.mxu0 0.0
      %703 = vmatpush2.msra.mxu0 0.0
      %704 = vmatprep.subr.mxu0 0.0
      %705 = vmatpush2.msra.mxu0 0.0
      %706 = vmatprep.subr.mxu0 0.0
      %707 = vmatpush2.msra.mxu0 0.0
      %708 = vmatprep.subr.mxu0 0.0
      %709 = vmatpush2.msra.mxu0 0.0
      %710 = vmatprep.subr.mxu0 0.0
      %711 = vmatpush2.msra.mxu0 0.0
      %712 = vmatprep.subr.mxu0 0.0
      %713 = vmatpush2.msra.mxu0 0.0
      %714 = vmatprep.subr.mxu0 0.0
      %715 = vmatpush2.msra.mxu0 0.0
      %716 = vmatprep.subr.mxu0 0.0
      %717 = vmatpush2.msra.mxu0 0.0
      %718 = vmatprep.subr.mxu0 0.0
      %719 = vmatpush2.msra.mxu0 0.0
      %720 = vmatprep.subr.mxu0 0.0
      %721 = vmatpush2.msra.mxu0 0.0
      %722 = vmatprep.subr.mxu0 0.0
      %723 = vmatpush2.msra.mxu0 0.0
      %724 = vmatprep.subr.mxu0 0.0
      %725 = vmatpush2.msra.mxu0 0.0
      %726 = vmatprep.subr.mxu0 0.0
      %727 = vmatpush2.msra.mxu0 0.0
      %728 = vmatprep.subr.mxu0 0.0
      %729 = vmatpush2.msra.mxu0 0.0
      %730 = vmatprep.mubr.f32.mxu0 0.0
      %731 = vmatmul.mubr.f32.gmra.mxu0 %v664
      %v732 = vpop.f32.mrf.mxu0
      %v733 = vadd.f32 0.0, %v732
      %v734 = vpop.f32.mrf.mxu0
      %735 = vdwg.mxu0
      %737 = vrot.lane.b32.xlu0 %v733, 8
      %v738 = vpop.permute.xlu0 %737
      %vm740 = vcmask 130112
      %741 = vst.msk [vmem:[#allocation2] sm:$0xff] %vm740, %v738
      %s742 = scalar_lea.vmem %s378, 16
      %v743 = vld [vmem:[%s742] sm:$0xff]
      %s744 = scalar_lea.vmem %s383, 16
      %v745 = vld [vmem:[%s744] sm:$0xff]
      %s746 = scalar_lea.vmem %s388, 16
      %v747 = vld [vmem:[%s746] sm:$0xff]
      %v749 = vsel %vm406, %v743, 0
      %v752 = vsel %vm406, %v745, 0
      %754 = vmatprep.subr.mxu0 0.0
      %755 = vmatpush1.xpose.msra.mxu0 0.0
      %756 = vmatprep.subr.mxu0 0.0
      %757 = vmatpush1.xpose.msra.mxu0 0.0
      %758 = vmatprep.subr.mxu0 0.0
      %759 = vmatpush1.xpose.msra.mxu0 0.0
      %760 = vmatprep.subr.mxu0 0.0
      %761 = vmatpush1.xpose.msra.mxu0 0.0
      %762 = vmatprep.subr.mxu0 0.0
      %763 = vmatpush1.xpose.msra.mxu0 0.0
      %764 = vmatprep.subr.mxu0 0.0
      %765 = vmatpush1.xpose.msra.mxu0 0.0
      %766 = vmatprep.subr.mxu0 0.0
      %767 = vmatpush1.xpose.msra.mxu0 0.0
      %768 = vmatprep.subr.mxu0 0.0
      %769 = vmatpush1.xpose.msra.mxu0 0.0
      %770 = vmatprep.subr.mxu0 0.0
      %771 = vmatpush1.xpose.msra.mxu0 0.0
      %772 = vmatprep.subr.mxu0 0.0
      %773 = vmatpush1.xpose.msra.mxu0 0.0
      %774 = vmatprep.subr.mxu0 0.0
      %775 = vmatpush1.xpose.msra.mxu0 0.0
      %776 = vmatprep.subr.mxu0 0.0
      %777 = vmatpush1.xpose.msra.mxu0 0.0
      %778 = vmatprep.subr.mxu0 0.0
      %779 = vmatpush1.xpose.msra.mxu0 0.0
      %780 = vmatprep.subr.mxu0 0.0
      %781 = vmatpush1.xpose.msra.mxu0 0.0
      %782 = vmatprep.subr.mxu0 0.0
      %783 = vmatpush1.xpose.msra.mxu0 0.0
      %784 = vmatprep.subr.mxu0 0.0
      %785 = vmatpush1.xpose.msra.mxu0 %v752
      %786 = vmatprep.subr.mxu0 0.0
      %787 = vmatpush2.xpose.msra.mxu0 0.0
      %788 = vmatprep.subr.mxu0 0.0
      %789 = vmatpush2.xpose.msra.mxu0 0.0
      %790 = vmatprep.subr.mxu0 0.0
      %791 = vmatpush2.xpose.msra.mxu0 0.0
      %792 = vmatprep.subr.mxu0 0.0
      %793 = vmatpush2.xpose.msra.mxu0 0.0
      %794 = vmatprep.subr.mxu0 0.0
      %795 = vmatpush2.xpose.msra.mxu0 0.0
      %796 = vmatprep.subr.mxu0 0.0
      %797 = vmatpush2.xpose.msra.mxu0 0.0
      %798 = vmatprep.subr.mxu0 0.0
      %799 = vmatpush2.xpose.msra.mxu0 0.0
      %800 = vmatprep.subr.mxu0 0.0
      %801 = vmatpush2.xpose.msra.mxu0 0.0
      %802 = vmatprep.subr.mxu0 0.0
      %803 = vmatpush2.xpose.msra.mxu0 0.0
      %804 = vmatprep.subr.mxu0 0.0
      %805 = vmatpush2.xpose.msra.mxu0 0.0
      %806 = vmatprep.subr.mxu0 0.0
      %807 = vmatpush2.xpose.msra.mxu0 0.0
      %808 = vmatprep.subr.mxu0 0.0
      %809 = vmatpush2.xpose.msra.mxu0 0.0
      %810 = vmatprep.subr.mxu0 0.0
      %811 = vmatpush2.xpose.msra.mxu0 0.0
      %812 = vmatprep.subr.mxu0 0.0
      %813 = vmatpush2.xpose.msra.mxu0 0.0
      %814 = vmatprep.subr.mxu0 0.0
      %815 = vmatpush2.xpose.msra.mxu0 0.0
      %816 = vmatprep.subr.mxu0 0.0
      %817 = vmatpush2.xpose.msra.mxu0 0.0
      %818 = vmatprep.mubr.f32.mxu0 0.0
      %819 = vmatmul.mubr.f32.gmra.mxu0 %v749
      %v820 = vpop.f32.mrf.mxu0
      %v821 = vadd.f32 0.0, %v820
      %v822 = vpop.f32.mrf.mxu0
      %823 = vdwg.mxu0
      %v824 = vmul.f32 %v821, 0.35355338
      %v825 = vsel %vm406, %v824, -inf
      %826 = vmax.xlane.f32.xlu0 %v825
      %v827 = vpop.xlane.xlu0 %826
      %v828 = vsub.f32 %v824, %v827
      %v829 = vmul.f32 %v828, 1.442695
      %v830 = vpow.pop %v829
      %v831 = vsel %vm406, %v830, 0.0
      %832 = vadd.xlane.f32.xlu0 %v831
      %v833 = vpop.xlane.xlu0 %832
      %v834 = vrcp.pop %v833
      %v835 = vmul.f32 %v830, %v834
      %v837 = vsel %vm406, %v835, 0
      %839 = vmatprep.subr.mxu0 0.0
      %840 = vmatpush1.msra.mxu0 0.0
      %841 = vmatprep.subr.mxu0 0.0
      %842 = vmatpush1.msra.mxu0 0.0
      %843 = vmatprep.subr.mxu0 0.0
      %844 = vmatpush1.msra.mxu0 0.0
      %845 = vmatprep.subr.mxu0 0.0
      %846 = vmatpush1.msra.mxu0 0.0
      %847 = vmatprep.subr.mxu0 0.0
      %848 = vmatpush1.msra.mxu0 0.0
      %849 = vmatprep.subr.mxu0 0.0
      %850 = vmatpush1.msra.mxu0 0.0
      %851 = vmatprep.subr.mxu0 0.0
      %852 = vmatpush1.msra.mxu0 0.0
      %853 = vmatprep.subr.mxu0 0.0
      %854 = vmatpush1.msra.mxu0 0.0
      %855 = vmatprep.subr.mxu0 0.0
      %856 = vmatpush1.msra.mxu0 0.0
      %857 = vmatprep.subr.mxu0 0.0
      %858 = vmatpush1.msra.mxu0 0.0
      %859 = vmatprep.subr.mxu0 0.0
      %860 = vmatpush1.msra.mxu0 0.0
      %861 = vmatprep.subr.mxu0 0.0
      %862 = vmatpush1.msra.mxu0 0.0
      %863 = vmatprep.subr.mxu0 0.0
      %864 = vmatpush1.msra.mxu0 0.0
      %865 = vmatprep.subr.mxu0 0.0
      %866 = vmatpush1.msra.mxu0 0.0
      %867 = vmatprep.subr.mxu0 0.0
      %868 = vmatpush1.msra.mxu0 0.0
      %869 = vmatprep.subr.mxu0 0.0
      %870 = vmatpush1.msra.mxu0 %v747
      %871 = vmatprep.subr.mxu0 0.0
      %872 = vmatpush2.msra.mxu0 0.0
      %873 = vmatprep.subr.mxu0 0.0
      %874 = vmatpush2.msra.mxu0 0.0
      %875 = vmatprep.subr.mxu0 0.0
      %876 = vmatpush2.msra.mxu0 0.0
      %877 = vmatprep.subr.mxu0 0.0
      %878 = vmatpush2.msra.mxu0 0.0
      %879 = vmatprep.subr.mxu0 0.0
      %880 = vmatpush2.msra.mxu0 0.0
      %881 = vmatprep.subr.mxu0 0.0
      %882 = vmatpush2.msra.mxu0 0.0
      %883 = vmatprep.subr.mxu0 0.0
      %884 = vmatpush2.msra.mxu0 0.0
      %885 = vmatprep.subr.mxu0 0.0
      %886 = vmatpush2.msra.mxu0 0.0
      %887 = vmatprep.subr.mxu0 0.0
      %888 = vmatpush2.msra.mxu0 0.0
      %889 = vmatprep.subr.mxu0 0.0
      %890 = vmatpush2.msra.mxu0 0.0
      %891 = vmatprep.subr.mxu0 0.0
      %892 = vmatpush2.msra.mxu0 0.0
      %893 = vmatprep.subr.mxu0 0.0
      %894 = vmatpush2.msra.mxu0 0.0
      %895 = vmatprep.subr.mxu0 0.0
      %896 = vmatpush2.msra.mxu0 0.0
      %897 = vmatprep.subr.mxu0 0.0
      %898 = vmatpush2.msra.mxu0 0.0
      %899 = vmatprep.subr.mxu0 0.0
      %900 = vmatpush2.msra.mxu0 0.0
      %901 = vmatprep.subr.mxu0 0.0
      %902 = vmatpush2.msra.mxu0 0.0
      %903 = vmatprep.mubr.f32.mxu0 0.0
      %904 = vmatmul.mubr.f32.gmra.mxu0 %v837
      %v905 = vpop.f32.mrf.mxu0
      %v906 = vadd.f32 0.0, %v905
      %v907 = vpop.f32.mrf.mxu0
      %908 = vdwg.mxu0
      %910 = vrot.lane.b32.xlu0 %v906, 16
      %v911 = vpop.permute.xlu0 %910
      %vm913 = vcmask 195712
      %914 = vst.msk [vmem:[#allocation2] sm:$0xff] %vm913, %v911
      %s915 = scalar_lea.vmem %s378, 24
      %v916 = vld [vmem:[%s915] sm:$0xff]
      %s917 = scalar_lea.vmem %s383, 24
      %v918 = vld [vmem:[%s917] sm:$0xff]
      %s919 = scalar_lea.vmem %s388, 24
      %v920 = vld [vmem:[%s919] sm:$0xff]
      %v922 = vsel %vm406, %v916, 0
      %v925 = vsel %vm406, %v918, 0
      %927 = vmatprep.subr.mxu0 0.0
      %928 = vmatpush1.xpose.msra.mxu0 0.0
      %929 = vmatprep.subr.mxu0 0.0
      %930 = vmatpush1.xpose.msra.mxu0 0.0
      %931 = vmatprep.subr.mxu0 0.0
      %932 = vmatpush1.xpose.msra.mxu0 0.0
      %933 = vmatprep.subr.mxu0 0.0
      %934 = vmatpush1.xpose.msra.mxu0 0.0
      %935 = vmatprep.subr.mxu0 0.0
      %936 = vmatpush1.xpose.msra.mxu0 0.0
      %937 = vmatprep.subr.mxu0 0.0
      %938 = vmatpush1.xpose.msra.mxu0 0.0
      %939 = vmatprep.subr.mxu0 0.0
      %940 = vmatpush1.xpose.msra.mxu0 0.0
      %941 = vmatprep.subr.mxu0 0.0
      %942 = vmatpush1.xpose.msra.mxu0 0.0
      %943 = vmatprep.subr.mxu0 0.0
      %944 = vmatpush1.xpose.msra.mxu0 0.0
      %945 = vmatprep.subr.mxu0 0.0
      %946 = vmatpush1.xpose.msra.mxu0 0.0
      %947 = vmatprep.subr.mxu0 0.0
      %948 = vmatpush1.xpose.msra.mxu0 0.0
      %949 = vmatprep.subr.mxu0 0.0
      %950 = vmatpush1.xpose.msra.mxu0 0.0
      %951 = vmatprep.subr.mxu0 0.0
      %952 = vmatpush1.xpose.msra.mxu0 0.0
      %953 = vmatprep.subr.mxu0 0.0
      %954 = vmatpush1.xpose.msra.mxu0 0.0
      %955 = vmatprep.subr.mxu0 0.0
      %956 = vmatpush1.xpose.msra.mxu0 0.0
      %957 = vmatprep.subr.mxu0 0.0
      %958 = vmatpush1.xpose.msra.mxu0 %v925
      %959 = vmatprep.subr.mxu0 0.0
      %960 = vmatpush2.xpose.msra.mxu0 0.0
      %961 = vmatprep.subr.mxu0 0.0
      %962 = vmatpush2.xpose.msra.mxu0 0.0
      %963 = vmatprep.subr.mxu0 0.0
      %964 = vmatpush2.xpose.msra.mxu0 0.0
      %965 = vmatprep.subr.mxu0 0.0
      %966 = vmatpush2.xpose.msra.mxu0 0.0
      %967 = vmatprep.subr.mxu0 0.0
      %968 = vmatpush2.xpose.msra.mxu0 0.0
      %969 = vmatprep.subr.mxu0 0.0
      %970 = vmatpush2.xpose.msra.mxu0 0.0
      %971 = vmatprep.subr.mxu0 0.0
      %972 = vmatpush2.xpose.msra.mxu0 0.0
      %973 = vmatprep.subr.mxu0 0.0
      %974 = vmatpush2.xpose.msra.mxu0 0.0
      %975 = vmatprep.subr.mxu0 0.0
      %976 = vmatpush2.xpose.msra.mxu0 0.0
      %977 = vmatprep.subr.mxu0 0.0
      %978 = vmatpush2.xpose.msra.mxu0 0.0
      %979 = vmatprep.subr.mxu0 0.0
      %980 = vmatpush2.xpose.msra.mxu0 0.0
      %981 = vmatprep.subr.mxu0 0.0
      %982 = vmatpush2.xpose.msra.mxu0 0.0
      %983 = vmatprep.subr.mxu0 0.0
      %984 = vmatpush2.xpose.msra.mxu0 0.0
      %985 = vmatprep.subr.mxu0 0.0
      %986 = vmatpush2.xpose.msra.mxu0 0.0
      %987 = vmatprep.subr.mxu0 0.0
      %988 = vmatpush2.xpose.msra.mxu0 0.0
      %989 = vmatprep.subr.mxu0 0.0
      %990 = vmatpush2.xpose.msra.mxu0 0.0
      %991 = vmatprep.mubr.f32.mxu0 0.0
      %992 = vmatmul.mubr.f32.gmra.mxu0 %v922
      %v993 = vpop.f32.mrf.mxu0
      %v994 = vadd.f32 0.0, %v993
      %v995 = vpop.f32.mrf.mxu0
      %996 = vdwg.mxu0
      %v997 = vmul.f32 %v994, 0.35355338
      %v998 = vsel %vm406, %v997, -inf
      %999 = vmax.xlane.f32.xlu0 %v998
      %v1000 = vpop.xlane.xlu0 %999
      %v1001 = vsub.f32 %v997, %v1000
      %v1002 = vmul.f32 %v1001, 1.442695
      %v1003 = vpow.pop %v1002
      %v1004 = vsel %vm406, %v1003, 0.0
      %1005 = vadd.xlane.f32.xlu0 %v1004
      %v1006 = vpop.xlane.xlu0 %1005
      %v1007 = vrcp.pop %v1006
      %v1008 = vmul.f32 %v1003, %v1007
      %v1010 = vsel %vm406, %v1008, 0
      %1012 = vmatprep.subr.mxu0 0.0
      %1013 = vmatpush1.msra.mxu0 0.0
      %1014 = vmatprep.subr.mxu0 0.0
      %1015 = vmatpush1.msra.mxu0 0.0
      %1016 = vmatprep.subr.mxu0 0.0
      %1017 = vmatpush1.msra.mxu0 0.0
      %1018 = vmatprep.subr.mxu0 0.0
      %1019 = vmatpush1.msra.mxu0 0.0
      %1020 = vmatprep.subr.mxu0 0.0
      %1021 = vmatpush1.msra.mxu0 0.0
      %1022 = vmatprep.subr.mxu0 0.0
      %1023 = vmatpush1.msra.mxu0 0.0
      %1024 = vmatprep.subr.mxu0 0.0
      %1025 = vmatpush1.msra.mxu0 0.0
      %1026 = vmatprep.subr.mxu0 0.0
      %1027 = vmatpush1.msra.mxu0 0.0
      %1028 = vmatprep.subr.mxu0 0.0
      %1029 = vmatpush1.msra.mxu0 0.0
      %1030 = vmatprep.subr.mxu0 0.0
      %1031 = vmatpush1.msra.mxu0 0.0
      %1032 = vmatprep.subr.mxu0 0.0
      %1033 = vmatpush1.msra.mxu0 0.0
      %1034 = vmatprep.subr.mxu0 0.0
      %1035 = vmatpush1.msra.mxu0 0.0
      %1036 = vmatprep.subr.mxu0 0.0
      %1037 = vmatpush1.msra.mxu0 0.0
      %1038 = vmatprep.subr.mxu0 0.0
      %1039 = vmatpush1.msra.mxu0 0.0
      %1040 = vmatprep.subr.mxu0 0.0
      %1041 = vmatpush1.msra.mxu0 0.0
      %1042 = vmatprep.subr.mxu0 0.0
      %1043 = vmatpush1.msra.mxu0 %v920
      %1044 = vmatprep.subr.mxu0 0.0
      %1045 = vmatpush2.msra.mxu0 0.0
      %1046 = vmatprep.subr.mxu0 0.0
      %1047 = vmatpush2.msra.mxu0 0.0
      %1048 = vmatprep.subr.mxu0 0.0
      %1049 = vmatpush2.msra.mxu0 0.0
      %1050 = vmatprep.subr.mxu0 0.0
      %1051 = vmatpush2.msra.mxu0 0.0
      %1052 = vmatprep.subr.mxu0 0.0
      %1053 = vmatpush2.msra.mxu0 0.0
      %1054 = vmatprep.subr.mxu0 0.0
      %1055 = vmatpush2.msra.mxu0 0.0
      %1056 = vmatprep.subr.mxu0 0.0
      %1057 = vmatpush2.msra.mxu0 0.0
      %1058 = vmatprep.subr.mxu0 0.0
      %1059 = vmatpush2.msra.mxu0 0.0
      %1060 = vmatprep.subr.mxu0 0.0
      %1061 = vmatpush2.msra.mxu0 0.0
      %1062 = vmatprep.subr.mxu0 0.0
      %1063 = vmatpush2.msra.mxu0 0.0
      %1064 = vmatprep.subr.mxu0 0.0
      %1065 = vmatpush2.msra.mxu0 0.0
      %1066 = vmatprep.subr.mxu0 0.0
      %1067 = vmatpush2.msra.mxu0 0.0
      %1068 = vmatprep.subr.mxu0 0.0
      %1069 = vmatpush2.msra.mxu0 0.0
      %1070 = vmatprep.subr.mxu0 0.0
      %1071 = vmatpush2.msra.mxu0 0.0
      %1072 = vmatprep.subr.mxu0 0.0
      %1073 = vmatpush2.msra.mxu0 0.0
      %1074 = vmatprep.subr.mxu0 0.0
      %1075 = vmatpush2.msra.mxu0 0.0
      %1076 = vmatprep.mubr.f32.mxu0 0.0
      %1077 = vmatmul.mubr.f32.gmra.mxu0 %v1010
      %v1078 = vpop.f32.mrf.mxu0
      %v1079 = vadd.f32 0.0, %v1078
      %v1080 = vpop.f32.mrf.mxu0
      %1081 = vdwg.mxu0
      %1083 = vrot.lane.b32.xlu0 %v1079, 24
      %v1084 = vpop.permute.xlu0 %1083
      %vm1086 = vcmask 261312
      %1087 = vst.msk [vmem:[#allocation2] sm:$0xff] %vm1086, %v1084
      %v1088 = vld [vmem:[#allocation2] sm:$0xff]
      %v1089 = vld [vmem:[%s4] sm:$0xff]
      %v1090 = vld [vmem:[%s4 + $0x8] sm:$0xff]
      %v1091 = vld [vmem:[%s4 + $0x10] sm:$0xff]
      %v1092 = vld [vmem:[%s4 + $0x18] sm:$0xff]
      %v1093 = vld [vmem:[%s5] sm:$0x1]
      %v1095 = vlaneseq
      %v1096 = vshrl.u32 %v1095, 7
      %v1097 = vsub.s32 0, %v1096
      %v1098 = vrot.slane %v1093, %v1097
      %vm1100 = vcmask 261120
      %v1102 = vsel %vm1100, %v1088, 0
      %1104 = vmatprep.subr.mxu0 0.0
      %1105 = vmatpush1.msra.mxu0 0.0
      %1106 = vmatprep.subr.mxu0 0.0
      %1107 = vmatpush1.msra.mxu0 0.0
      %1108 = vmatprep.subr.mxu0 0.0
      %1109 = vmatpush1.msra.mxu0 0.0
      %1110 = vmatprep.subr.mxu0 0.0
      %1111 = vmatpush1.msra.mxu0 0.0
      %1112 = vmatprep.subr.mxu0 0.0
      %1113 = vmatpush1.msra.mxu0 0.0
      %1114 = vmatprep.subr.mxu0 0.0
      %1115 = vmatpush1.msra.mxu0 0.0
      %1116 = vmatprep.subr.mxu0 0.0
      %1117 = vmatpush1.msra.mxu0 0.0
      %1118 = vmatprep.subr.mxu0 0.0
      %1119 = vmatpush1.msra.mxu0 0.0
      %1120 = vmatprep.subr.mxu0 0.0
      %1121 = vmatpush1.msra.mxu0 0.0
      %1122 = vmatprep.subr.mxu0 0.0
      %1123 = vmatpush1.msra.mxu0 0.0
      %1124 = vmatprep.subr.mxu0 0.0
      %1125 = vmatpush1.msra.mxu0 0.0
      %1126 = vmatprep.subr.mxu0 0.0
      %1127 = vmatpush1.msra.mxu0 0.0
      %1128 = vmatprep.subr.mxu0 0.0
      %1129 = vmatpush1.msra.mxu0 %v1092
      %1130 = vmatprep.subr.mxu0 0.0
      %1131 = vmatpush1.msra.mxu0 %v1091
      %1132 = vmatprep.subr.mxu0 0.0
      %1133 = vmatpush1.msra.mxu0 %v1090
      %1134 = vmatprep.subr.mxu0 0.0
      %1135 = vmatpush1.msra.mxu0 %v1089
      %1136 = vmatprep.subr.mxu0 0.0
      %1137 = vmatpush2.msra.mxu0 0.0
      %1138 = vmatprep.subr.mxu0 0.0
      %1139 = vmatpush2.msra.mxu0 0.0
      %1140 = vmatprep.subr.mxu0 0.0
      %1141 = vmatpush2.msra.mxu0 0.0
      %1142 = vmatprep.subr.mxu0 0.0
      %1143 = vmatpush2.msra.mxu0 0.0
      %1144 = vmatprep.subr.mxu0 0.0
      %1145 = vmatpush2.msra.mxu0 0.0
      %1146 = vmatprep.subr.mxu0 0.0
      %1147 = vmatpush2.msra.mxu0 0.0
      %1148 = vmatprep.subr.mxu0 0.0
      %1149 = vmatpush2.msra.mxu0 0.0
      %1150 = vmatprep.subr.mxu0 0.0
      %1151 = vmatpush2.msra.mxu0 0.0
      %1152 = vmatprep.subr.mxu0 0.0
      %1153 = vmatpush2.msra.mxu0 0.0
      %1154 = vmatprep.subr.mxu0 0.0
      %1155 = vmatpush2.msra.mxu0 0.0
      %1156 = vmatprep.subr.mxu0 0.0
      %1157 = vmatpush2.msra.mxu0 0.0
      %1158 = vmatprep.subr.mxu0 0.0
      %1159 = vmatpush2.msra.mxu0 0.0
      %1160 = vmatprep.subr.mxu0 0.0
      %1161 = vmatpush2.msra.mxu0 0.0
      %1162 = vmatprep.subr.mxu0 0.0
      %1163 = vmatpush2.msra.mxu0 0.0
      %1164 = vmatprep.subr.mxu0 0.0
      %1165 = vmatpush2.msra.mxu0 0.0
      %1166 = vmatprep.subr.mxu0 0.0
      %1167 = vmatpush2.msra.mxu0 0.0
      %1168 = vmatprep.mubr.f32.mxu0 0.0
      %1169 = vmatmul.mubr.f32.gmra.mxu0 %v1102
      %v1170 = vpop.f32.mrf.mxu0
      %v1171 = vadd.f32 %v1098, %v1170
      %v1172 = vpop.f32.mrf.mxu0
      %1173 = vdwg.mxu0
      %v1174 = vld [vmem:[%s395] sm:$0xff]
      %v1175 = vadd.f32 %v1171, %v1174
      %v1176 = vsel %vm1100, %v1175, 0.0
      %1177 = vadd.xlane.f32.xlu0 %v1176
      %v1178 = vpop.xlane.xlu0 %1177
      %v1179 = vrcp.pop 32.0
      %v1180 = vmul.f32 %v1178, %v1179
      %v1181 = vsub.f32 %v1175, %v1180
      %v1182 = vmul.f32 %v1181, %v1181
      %v1183 = vsel %vm1100, %v1182, 0.0
      %1184 = vadd.xlane.f32.xlu0 %v1183
      %v1185 = vpop.xlane.xlu0 %1184
      %v1186 = vmul.f32 %v1185, %v1179
      %v1187 = vadd.f32 %v1186, 1e-05
      %v1188 = vrsqrt.pop %v1187
      %v1189 = vmul.f32 %v1181, %v1188
      %v1190 = vld [vmem:[%s6] sm:$0x1]
      %v1192 = vlaneseq
      %v1193 = vshrl.u32 %v1192, 7
      %v1194 = vsub.s32 0, %v1193
      %v1195 = vrot.slane %v1190, %v1194
      %v1197 = vmul.f32 %v1189, %v1195
      %v1198 = vld [vmem:[%s7] sm:$0x1]
      %v1200 = vlaneseq
      %v1201 = vshrl.u32 %v1200, 7
      %v1202 = vsub.s32 0, %v1201
      %v1203 = vrot.slane %v1198, %v1202
      %v1205 = vadd.f32 %v1197, %v1203
      %1206 = vst.msk [vmem:[%s402] sm:$0xff] %vm1100, %v1205
      %p1207 = scmp.lt.s32.totalorder %s23, 1
      %s1208 = scalar_select %p1207, %s23, 1
      %p1209 = scmp.lt.s32.totalorder %s24, 0
      %s1210 = scalar_select %p1209, %s24, 0
      %s1211 = sadd.s32 %s1210, %s1208
      %s1212 = smul.addr %s1211, 8
      %s1213 = scalar_lea.vmem %s8, %s1212
      // Predicated region
      $region53: #{transformer_forward.42} parent=51 // pred_check
        %p1214 = pneg %p243
      $region54: #{transformer_forward.42} parent=51 // pred_check_branch
        %1216 = sbr.rel (%p1214) target = $region56
      $region55: #{transformer_forward.42} parent=51 // pred_region
        _
      $region56: #{transformer_forward.42} parent=51 // pred_fallthru
        _
    $region52: #{transformer_forward.42} parent=5 // pred_fallthru
      _
    %p1217 = scmp.le.s32.totalorder 2, %s14
    // Predicated region
    $region57: #{transformer_forward.42} parent=5 // pred_check
      %p1218 = pneg %p1217
    $region58: #{transformer_forward.42} parent=5 // pred_check_branch
      %1220 = sbr.rel (%p1218) target = $region60
    $region59: #{transformer_forward.42} parent=5 // pred_region
      %s1221 = ssub.s32 %s14, 2
      // Predicated region
      $region61: #{transformer_forward.42} parent=59 // pred_check
        %p1222 = pneg %p249
      $region62: #{transformer_forward.42} parent=59 // pred_check_branch
        %1224 = sbr.rel (%p1222) target = $region64
      $region63: #{transformer_forward.42} parent=59 // pred_region
        %p1225 = scmp.lt.s32.totalorder %s25, 1
        %s1226 = scalar_select %p1225, %s25, 1
        %p1227 = scmp.lt.s32.totalorder %s26, 0
        %s1228 = scalar_select %p1227, %s26, 0
        %s1229 = sadd.s32 %s1228, %s1226
        %s1230 = smul.addr %s1229, 8
        %s1231 = scalar_lea.vmem %s8, %s1230
      $region64: #{transformer_forward.42} parent=59 // pred_fallthru
        _
    $region60: #{transformer_forward.42} parent=5 // pred_fallthru
      _
  $region6: #{transformer_forward.42} parent=0 // loop_footer
    %s18 = sadd.s32 1, %s14
  $region7: #{transformer_forward.42} parent=0 // loop_footer_branch
    %13 = sbr.rel target = $region3
  $region8: #{transformer_forward.42} parent=0 // loop_exit
    _

</llo_original>
